<compile_context>
chip_gen: v7x
topology: tpu7x:2x2x1
jax: 0.10.0
libtpu: 0.0.40
codegen_flags: <defaults>
</compile_context>

<pallas_src>
import math

import jax
import jax.numpy as jnp
import numpy as np
from jax.experimental import pallas as pl
from jax.experimental.pallas import tpu as pltpu

# ---- hyper-parameters hard-wired inside EncoderLayer.__init__ ----
D_MODEL = 100                 # d_model == LayerNorm feature size == conv length
D_FF = 120                    # feed-forward hidden size
N_HEADS = 4                   # attention heads
D_K = D_MODEL // N_HEADS      # 25
AFR = 30                      # afr_reduced_cnn_size == conv channels == attn seq len
KSIZE = 7                     # CausalConv1d kernel size
LN_EPS = 1e-6                 # custom LayerNorm eps (added to std, not var)
N_LAYERS = 2                  # TCE(N=2)


# ------------------------------------------------------------------
# shared math helper (used by the kernel and by the pure-JAX reference)
# ------------------------------------------------------------------
def _layer_norm(x, gamma, beta):
    """torch-style custom LayerNorm: a_2*(x-mean)/(std+eps)+b_2, unbiased std."""
    n = x.shape[-1]
    mean = jnp.mean(x, axis=-1, keepdims=True)
    var = jnp.sum((x - mean) ** 2, axis=-1, keepdims=True) / (n - 1)
    return gamma * (x - mean) / (jnp.sqrt(var) + LN_EPS) + beta


# ------------------------------------------------------------------
# fused Pallas kernel: one (batch element, encoder layer) grid step
# ------------------------------------------------------------------
def _tce_kernel(x_ref, wc_ref, bc_ref, wo_ref, bo_ref, lng_ref, lnb_ref,
                w1_ref, b1_ref, w2_ref, b2_ref, fng_ref, fnb_ref,
                o_ref, carry_ref):
    layer = pl.program_id(1)
    n_layers = pl.num_programs(1)

    # Layer 0: load this batch element's input into the resident VMEM carry.
    @pl.when(layer == 0)
    def _():
        carry_ref[...] = x_ref[0].astype(jnp.float32)

    x = carry_ref[...]                                   # [AFR, D_MODEL]

    # ---- CausalConv1d for (query, key, value); cout stacked to 3*AFR rows ----
    # out[:, t] = sum_k W_k @ x[:, t - (K-1) + k], zero-padded on the left
    # (== PyTorch conv with padding=K-1 followed by cropping the last K-1).
    xpad = jnp.concatenate(
        [jnp.zeros((AFR, KSIZE - 1), jnp.float32), x], axis=1)   # [AFR, L+K-1]
    acc = jnp.zeros((3 * AFR, D_MODEL), jnp.float32)
    for k in range(KSIZE):                               # unrolled: 7 MXU matmuls
        acc = acc + jnp.dot(wc_ref[0, k], xpad[:, k:k + D_MODEL],
                            preferred_element_type=jnp.float32)
    acc = acc + bc_ref[0]                                # [3*AFR, D_MODEL]
    qc = acc[0:AFR]                                      # EncoderLayer.conv(x_in)
    kc = acc[AFR:2 * AFR]                                # MHA.convs[1](x_in)
    vc = acc[2 * AFR:3 * AFR]                            # MHA.convs[2](x_in)

    # ---- multi-head scaled-dot-product attention (dropout == identity) ----
    scale = 1.0 / math.sqrt(D_K)
    heads = []
    for h in range(N_HEADS):
        lo, hi = h * D_K, (h + 1) * D_K
        s = jax.lax.dot_general(qc[:, lo:hi], kc[:, lo:hi],
                                (((1,), (1,)), ((), ())),
                                preferred_element_type=jnp.float32) * scale
        s = s - jnp.max(s, axis=-1, keepdims=True)
        p = jnp.exp(s)
        p = p / jnp.sum(p, axis=-1, keepdims=True)
        heads.append(jnp.dot(p, vc[:, lo:hi], preferred_element_type=jnp.float32))
    attn = jnp.concatenate(heads, axis=-1)               # [AFR, D_MODEL]
    attn = jnp.dot(attn, wo_ref[0], preferred_element_type=jnp.float32) + bo_ref[0]

    # SublayerOutput[0]: the lambda in the reference forward ignores the normed
    # input, so the residual is simply query + attention output.
    x1 = qc + attn

    # ---- SublayerOutput[1]: LayerNorm -> FFN (relu) -> residual ----
    ln = _layer_norm(x1, lng_ref[0], lnb_ref[0])
    h1 = jnp.maximum(
        jnp.dot(ln, w1_ref[0], preferred_element_type=jnp.float32) + b1_ref[0], 0.0)
    ff = jnp.dot(h1, w2_ref[0], preferred_element_type=jnp.float32) + b2_ref[0]
    out = x1 + ff

    carry_ref[...] = out                                 # feeds the next layer

    # Last layer: apply the final TCE LayerNorm and emit the output block.
    @pl.when(layer == n_layers - 1)
    def _():
        o_ref[0] = _layer_norm(out, fng_ref[...], fnb_ref[...]).astype(o_ref.dtype)


# ------------------------------------------------------------------
# BlockSpec helpers + wrapper
# ------------------------------------------------------------------
def _per_layer_spec(*dims):
    zeros = (0,) * len(dims)
    return pl.BlockSpec((1,) + dims, lambda b, l: (l,) + zeros)


def _shared_spec(*dims):
    zeros = (0,) * len(dims)
    return pl.BlockSpec(dims, lambda b, l: zeros)


@jax.jit
def tce_forward(params, x):
    """x: [batch, AFR, D_MODEL] float32 -> [batch, AFR, D_MODEL] float32."""
    n = x.shape[0]
    nl = params['wc'].shape[0]

    grid_spec = pltpu.PrefetchScalarGridSpec(
        num_scalar_prefetch=0,
        grid=(n, nl),
        in_specs=[
            pl.BlockSpec((1, AFR, D_MODEL), lambda b, l: (b, 0, 0)),   # x
            _per_layer_spec(KSIZE, 3 * AFR, AFR),                      # conv weights
            _per_layer_spec(3 * AFR, 1),                               # conv biases
            _per_layer_spec(D_MODEL, D_MODEL),                         # W_o (pre-T)
            _per_layer_spec(1, D_MODEL),                               # b_o
            _per_layer_spec(1, D_MODEL),                               # LN gamma
            _per_layer_spec(1, D_MODEL),                               # LN beta
            _per_layer_spec(D_MODEL, D_FF),                            # W_1 (pre-T)
            _per_layer_spec(1, D_FF),                                  # b_1
            _per_layer_spec(D_FF, D_MODEL),                            # W_2 (pre-T)
            _per_layer_spec(1, D_MODEL),                               # b_2
            _shared_spec(1, D_MODEL),                                  # final gamma
            _shared_spec(1, D_MODEL),                                  # final beta
        ],
        out_specs=pl.BlockSpec((1, AFR, D_MODEL), lambda b, l: (b, 0, 0)),
        scratch_shapes=[pltpu.VMEM((AFR, D_MODEL), jnp.float32)],
    )
    return pl.pallas_call(
        _tce_kernel,
        out_shape=jax.ShapeDtypeStruct((n, AFR, D_MODEL), jnp.float32),
        grid_spec=grid_spec,
        compiler_params=pltpu.CompilerParams(
            dimension_semantics=("parallel", "arbitrary")),
    )(x, params['wc'], params['bc'], params['wo'], params['bo'],
      params['lng'], params['lnb'], params['w1'], params['b1'],
      params['w2'], params['b2'], params['fng'], params['fnb'])


# ------------------------------------------------------------------
# deterministic synthetic parameters (pre-packed / pre-transposed)
# ------------------------------------------------------------------
def make_params(key, n_layers=N_LAYERS):
    keys = iter(jax.random.split(key, 12 * n_layers + 2))

    def nrm(shape, scale):
        return scale * jax.random.normal(next(keys), shape, dtype=jnp.float32)

    wc, bc, wo, bo, lng, lnb, w1, b1, w2, b2 = ([] for _ in range(10))
    conv_scale = 1.0 / math.sqrt(AFR * KSIZE)
    for _ in range(n_layers):
        # CausalConv1d weights in PyTorch layout [Cout, Cin, K] for q / k / v.
        w_q = nrm((AFR, AFR, KSIZE), conv_scale)
        w_k = nrm((AFR, AFR, KSIZE), conv_scale)
        w_v = nrm((AFR, AFR, KSIZE), conv_scale)
        b_qkv = nrm((3 * AFR,), 0.05)
        # Pack to [K, 3*AFR (cout: q|k|v), AFR (cin)] for in-kernel tap matmuls.
        wc.append(jnp.concatenate([jnp.transpose(w_q, (2, 0, 1)),
                                   jnp.transpose(w_k, (2, 0, 1)),
                                   jnp.transpose(w_v, (2, 0, 1))], axis=1))
        bc.append(b_qkv.reshape(3 * AFR, 1))
        # MHA output projection nn.Linear(d_model, d_model), stored pre-transposed.
        wo.append(nrm((D_MODEL, D_MODEL), 1.0 / math.sqrt(D_MODEL)))
        bo.append(nrm((1, D_MODEL), 0.05))
        # SublayerOutput[1].norm (SublayerOutput[0].norm is dead in the forward).
        lng.append(1.0 + nrm((1, D_MODEL), 0.1))
        lnb.append(nrm((1, D_MODEL), 0.1))
        # PositionwiseFeedForward linears, stored pre-transposed ([in, out]).
        w1.append(nrm((D_MODEL, D_FF), 1.0 / math.sqrt(D_MODEL)))
        b1.append(nrm((1, D_FF), 0.05))
        w2.append(nrm((D_FF, D_MODEL), 1.0 / math.sqrt(D_FF)))
        b2.append(nrm((1, D_MODEL), 0.05))

    params = {name: jnp.stack(v) for name, v in
              [('wc', wc), ('bc', bc), ('wo', wo), ('bo', bo),
               ('lng', lng), ('lnb', lnb), ('w1', w1), ('b1', b1),
               ('w2', w2), ('b2', b2)]}
    params['fng'] = 1.0 + nrm((1, D_MODEL), 0.1)      # final TCE LayerNorm
    params['fnb'] = nrm((1, D_MODEL), 0.1)
    return params


# ------------------------------------------------------------------
# pure-JAX reference (for verification)
# ------------------------------------------------------------------
def _ref_causal_conv(x, w_koc, bias):
    """x: [N, Cin, L]; w_koc: [K, Cout, Cin]; causal (left-padded) conv."""
    n, cin, L = x.shape
    k = w_koc.shape[0]
    xpad = jnp.pad(x, ((0, 0), (0, 0), (k - 1, 0)))
    out = jnp.zeros((n, w_koc.shape[1], L), jnp.float32)
    for j in range(k):
        out = out + jnp.einsum('oc,ncl->nol', w_koc[j], xpad[:, :, j:j + L],
                               precision=jax.lax.Precision.HIGHEST)
    return out + bias[None, :, None]


def _ref_forward(params, x):
    hi = jax.lax.Precision.HIGHEST
    n = x.shape[0]
    nl = params['wc'].shape[0]
    for l in range(nl):
        conv = _ref_causal_conv(x, params['wc'][l], params['bc'][l][:, 0])
        qc, kc, vc = conv[:, :AFR], conv[:, AFR:2 * AFR], conv[:, 2 * AFR:]

        def split(z):
            return z.reshape(n, AFR, N_HEADS, D_K).transpose(0, 2, 1, 3)

        Q, K_, V = split(qc), split(kc), split(vc)
        s = jnp.einsum('nhqd,nhkd->nhqk', Q, K_, precision=hi) / math.sqrt(D_K)
        p = jax.nn.softmax(s, axis=-1)
        o = jnp.einsum('nhqk,nhkd->nhqd', p, V, precision=hi)
        o = o.transpose(0, 2, 1, 3).reshape(n, AFR, D_MODEL)
        attn = jnp.matmul(o, params['wo'][l], precision=hi) + params['bo'][l]
        x1 = qc + attn
        ln = _layer_norm(x1, params['lng'][l], params['lnb'][l])
        h1 = jnp.maximum(
            jnp.matmul(ln, params['w1'][l], precision=hi) + params['b1'][l], 0.0)
        ff = jnp.matmul(h1, params['w2'][l], precision=hi) + params['b2'][l]
        x = x1 + ff
    return _layer_norm(x, params['fng'], params['fnb'])


# ------------------------------------------------------------------
if __name__ == "__main__":
    key = jax.random.PRNGKey(0)
    kx, kp = jax.random.split(key)
    # TCE input: [batch, afr_reduced_cnn_size, d_model] = [2, 30, 100]
    x = jax.random.normal(kx, (2, AFR, D_MODEL), dtype=jnp.float32)
    params = make_params(kp, N_LAYERS)

    out = tce_forward(params, x)
    out = jax.block_until_ready(out)            # [2, 30, 100]

    ref = _ref_forward(params, x)
    np.testing.assert_allclose(np.asarray(out), np.asarray(ref),
                               rtol=2e-2, atol=2e-2)
    print("KERNEL_OK")
</pallas_src>

<mosaic_0001>
module attributes {stable_mosaic.version = 11 : i64} {
  func.func @_tce_kernel(%arg0: i32, %arg1: i32, %arg2: memref<1x30x100xf32, #tpu.memory_space<vmem>>, %arg3: memref<1x7x90x30xf32, #tpu.memory_space<vmem>>, %arg4: memref<1x90x1xf32, #tpu.memory_space<vmem>>, %arg5: memref<1x100x100xf32, #tpu.memory_space<vmem>>, %arg6: memref<1x1x100xf32, #tpu.memory_space<vmem>>, %arg7: memref<1x1x100xf32, #tpu.memory_space<vmem>>, %arg8: memref<1x1x100xf32, #tpu.memory_space<vmem>>, %arg9: memref<1x100x120xf32, #tpu.memory_space<vmem>>, %arg10: memref<1x1x120xf32, #tpu.memory_space<vmem>>, %arg11: memref<1x120x100xf32, #tpu.memory_space<vmem>>, %arg12: memref<1x1x100xf32, #tpu.memory_space<vmem>>, %arg13: memref<1x100xf32, #tpu.memory_space<vmem>>, %arg14: memref<1x100xf32, #tpu.memory_space<vmem>>, %arg15: memref<1x30x100xf32, #tpu.memory_space<vmem>>, %arg16: memref<30x100xf32, #tpu.memory_space<vmem>>) attributes {dimension_semantics = [#tpu.dimension_semantics<parallel>, #tpu.dimension_semantics<arbitrary>], iteration_bounds = array<i64: 2, 2>, scalar_prefetch = 0 : i64, scratch_operands = 1 : i64, tpu.core_type = #tpu.core_type<tc>, window_params = [{transform_indices = @transform_0, window_bounds = array<i64: 1, 30, 100>}, {transform_indices = @transform_1, window_bounds = array<i64: 1, 7, 90, 30>}, {transform_indices = @transform_2, window_bounds = array<i64: 1, 90, 1>}, {transform_indices = @transform_3, window_bounds = array<i64: 1, 100, 100>}, {transform_indices = @transform_4, window_bounds = array<i64: 1, 1, 100>}, {transform_indices = @transform_5, window_bounds = array<i64: 1, 1, 100>}, {transform_indices = @transform_6, window_bounds = array<i64: 1, 1, 100>}, {transform_indices = @transform_7, window_bounds = array<i64: 1, 100, 120>}, {transform_indices = @transform_8, window_bounds = array<i64: 1, 1, 120>}, {transform_indices = @transform_9, window_bounds = array<i64: 1, 120, 100>}, {transform_indices = @transform_10, window_bounds = array<i64: 1, 1, 100>}, {pipeline_mode = #tpu.pipeline_mode<synchronous>, transform_indices = @transform_11, window_bounds = array<i64: 1, 100>}, {pipeline_mode = #tpu.pipeline_mode<synchronous>, transform_indices = @transform_12, window_bounds = array<i64: 1, 100>}, {transform_indices = @transform_13, window_bounds = array<i64: 1, 30, 100>}]} {
    %c0_i32 = arith.constant 0 : i32
    %0 = arith.cmpi eq, %arg1, %c0_i32 : i32
    %1 = arith.extui %0 : i1 to i32
    %c0_i32_0 = arith.constant 0 : i32
    %2 = arith.cmpi ne, %1, %c0_i32_0 : i32
    scf.if %2 {
      %c0_91 = arith.constant 0 : index
      %c0_92 = arith.constant 0 : index
      %c0_93 = arith.constant 0 : index
      %169 = vector.load %arg2[%c0_91, %c0_92, %c0_93] : memref<1x30x100xf32, #tpu.memory_space<vmem>>, vector<1x30x100xf32>
      %170 = vector.shape_cast %169 : vector<1x30x100xf32> to vector<30x100xf32>
      %c0_94 = arith.constant 0 : index
      %c0_95 = arith.constant 0 : index
      %171 = vector.load %arg16[%c0_94, %c0_95] : memref<30x100xf32, #tpu.memory_space<vmem>>, vector<30x100xf32>
      tpu.vector_store %arg16[%c0_94, %c0_95], %170 {strides = array<i32>} : memref<30x100xf32, #tpu.memory_space<vmem>>, vector<30x100xf32>,
    } else {
    }
    %c0 = arith.constant 0 : index
    %c0_1 = arith.constant 0 : index
    %3 = vector.load %arg16[%c0, %c0_1] : memref<30x100xf32, #tpu.memory_space<vmem>>, vector<30x100xf32>
    %cst = arith.constant 0.000000e+00 : f32
    %4 = vector.broadcast %cst : f32 to vector<30x6xf32>
    %5 = tpu.concatenate %4, %3 in 1 : vector<30x6xf32>, vector<30x100xf32> -> vector<30x106xf32>
    %cst_2 = arith.constant 0.000000e+00 : f32
    %6 = vector.broadcast %cst_2 : f32 to vector<90x100xf32>
    %c0_3 = arith.constant 0 : index
    %c0_4 = arith.constant 0 : index
    %c0_5 = arith.constant 0 : index
    %c0_6 = arith.constant 0 : index
    %7 = vector.load %arg3[%c0_3, %c0_4, %c0_5, %c0_6] : memref<1x7x90x30xf32, #tpu.memory_space<vmem>>, vector<1x1x90x30xf32>
    %8 = vector.shape_cast %7 : vector<1x1x90x30xf32> to vector<90x30xf32>
    %9 = vector.extract_strided_slice %5 {offsets = [0, 0], sizes = [30, 100], strides = [1, 1]} : vector<30x106xf32> to vector<30x100xf32>
    %cst_7 = arith.constant dense<0.000000e+00> : vector<90x100xf32>
    %10 = tpu.matmul %8, %9, %cst_7 {dimension_numbers = #tpu.dot_dimension_numbers<[1], [0], [0], [1], [0, 0, 1, 1], [], []>} : vector<90x30xf32>, vector<30x100xf32>, vector<90x100xf32> -> vector<90x100xf32>
    %11 = arith.addf %6, %10 : vector<90x100xf32>
    %c0_8 = arith.constant 0 : index
    %c1 = arith.constant 1 : index
    %c0_9 = arith.constant 0 : index
    %c0_10 = arith.constant 0 : index
    %12 = vector.load %arg3[%c0_8, %c1, %c0_9, %c0_10] : memref<1x7x90x30xf32, #tpu.memory_space<vmem>>, vector<1x1x90x30xf32>
    %13 = vector.shape_cast %12 : vector<1x1x90x30xf32> to vector<90x30xf32>
    %14 = vector.extract_strided_slice %5 {offsets = [0, 1], sizes = [30, 100], strides = [1, 1]} : vector<30x106xf32> to vector<30x100xf32>
    %cst_11 = arith.constant dense<0.000000e+00> : vector<90x100xf32>
    %15 = tpu.matmul %13, %14, %cst_11 {dimension_numbers = #tpu.dot_dimension_numbers<[1], [0], [0], [1], [0, 0, 1, 1], [], []>} : vector<90x30xf32>, vector<30x100xf32>, vector<90x100xf32> -> vector<90x100xf32>
    %16 = arith.addf %11, %15 : vector<90x100xf32>
    %c0_12 = arith.constant 0 : index
    %c2 = arith.constant 2 : index
    %c0_13 = arith.constant 0 : index
    %c0_14 = arith.constant 0 : index
    %17 = vector.load %arg3[%c0_12, %c2, %c0_13, %c0_14] : memref<1x7x90x30xf32, #tpu.memory_space<vmem>>, vector<1x1x90x30xf32>
    %18 = vector.shape_cast %17 : vector<1x1x90x30xf32> to vector<90x30xf32>
    %19 = vector.extract_strided_slice %5 {offsets = [0, 2], sizes = [30, 100], strides = [1, 1]} : vector<30x106xf32> to vector<30x100xf32>
    %cst_15 = arith.constant dense<0.000000e+00> : vector<90x100xf32>
    %20 = tpu.matmul %18, %19, %cst_15 {dimension_numbers = #tpu.dot_dimension_numbers<[1], [0], [0], [1], [0, 0, 1, 1], [], []>} : vector<90x30xf32>, vector<30x100xf32>, vector<90x100xf32> -> vector<90x100xf32>
    %21 = arith.addf %16, %20 : vector<90x100xf32>
    %c0_16 = arith.constant 0 : index
    %c3 = arith.constant 3 : index
    %c0_17 = arith.constant 0 : index
    %c0_18 = arith.constant 0 : index
    %22 = vector.load %arg3[%c0_16, %c3, %c0_17, %c0_18] : memref<1x7x90x30xf32, #tpu.memory_space<vmem>>, vector<1x1x90x30xf32>
    %23 = vector.shape_cast %22 : vector<1x1x90x30xf32> to vector<90x30xf32>
    %24 = vector.extract_strided_slice %5 {offsets = [0, 3], sizes = [30, 100], strides = [1, 1]} : vector<30x106xf32> to vector<30x100xf32>
    %cst_19 = arith.constant dense<0.000000e+00> : vector<90x100xf32>
    %25 = tpu.matmul %23, %24, %cst_19 {dimension_numbers = #tpu.dot_dimension_numbers<[1], [0], [0], [1], [0, 0, 1, 1], [], []>} : vector<90x30xf32>, vector<30x100xf32>, vector<90x100xf32> -> vector<90x100xf32>
    %26 = arith.addf %21, %25 : vector<90x100xf32>
    %c0_20 = arith.constant 0 : index
    %c4 = arith.constant 4 : index
    %c0_21 = arith.constant 0 : index
    %c0_22 = arith.constant 0 : index
    %27 = vector.load %arg3[%c0_20, %c4, %c0_21, %c0_22] : memref<1x7x90x30xf32, #tpu.memory_space<vmem>>, vector<1x1x90x30xf32>
    %28 = vector.shape_cast %27 : vector<1x1x90x30xf32> to vector<90x30xf32>
    %29 = vector.extract_strided_slice %5 {offsets = [0, 4], sizes = [30, 100], strides = [1, 1]} : vector<30x106xf32> to vector<30x100xf32>
    %cst_23 = arith.constant dense<0.000000e+00> : vector<90x100xf32>
    %30 = tpu.matmul %28, %29, %cst_23 {dimension_numbers = #tpu.dot_dimension_numbers<[1], [0], [0], [1], [0, 0, 1, 1], [], []>} : vector<90x30xf32>, vector<30x100xf32>, vector<90x100xf32> -> vector<90x100xf32>
    %31 = arith.addf %26, %30 : vector<90x100xf32>
    %c0_24 = arith.constant 0 : index
    %c5 = arith.constant 5 : index
    %c0_25 = arith.constant 0 : index
    %c0_26 = arith.constant 0 : index
    %32 = vector.load %arg3[%c0_24, %c5, %c0_25, %c0_26] : memref<1x7x90x30xf32, #tpu.memory_space<vmem>>, vector<1x1x90x30xf32>
    %33 = vector.shape_cast %32 : vector<1x1x90x30xf32> to vector<90x30xf32>
    %34 = vector.extract_strided_slice %5 {offsets = [0, 5], sizes = [30, 100], strides = [1, 1]} : vector<30x106xf32> to vector<30x100xf32>
    %cst_27 = arith.constant dense<0.000000e+00> : vector<90x100xf32>
    %35 = tpu.matmul %33, %34, %cst_27 {dimension_numbers = #tpu.dot_dimension_numbers<[1], [0], [0], [1], [0, 0, 1, 1], [], []>} : vector<90x30xf32>, vector<30x100xf32>, vector<90x100xf32> -> vector<90x100xf32>
    %36 = arith.addf %31, %35 : vector<90x100xf32>
    %c0_28 = arith.constant 0 : index
    %c6 = arith.constant 6 : index
    %c0_29 = arith.constant 0 : index
    %c0_30 = arith.constant 0 : index
    %37 = vector.load %arg3[%c0_28, %c6, %c0_29, %c0_30] : memref<1x7x90x30xf32, #tpu.memory_space<vmem>>, vector<1x1x90x30xf32>
    %38 = vector.shape_cast %37 : vector<1x1x90x30xf32> to vector<90x30xf32>
    %39 = vector.extract_strided_slice %5 {offsets = [0, 6], sizes = [30, 100], strides = [1, 1]} : vector<30x106xf32> to vector<30x100xf32>
    %cst_31 = arith.constant dense<0.000000e+00> : vector<90x100xf32>
    %40 = tpu.matmul %38, %39, %cst_31 {dimension_numbers = #tpu.dot_dimension_numbers<[1], [0], [0], [1], [0, 0, 1, 1], [], []>} : vector<90x30xf32>, vector<30x100xf32>, vector<90x100xf32> -> vector<90x100xf32>
    %41 = arith.addf %36, %40 : vector<90x100xf32>
    %c0_32 = arith.constant 0 : index
    %c0_33 = arith.constant 0 : index
    %c0_34 = arith.constant 0 : index
    %42 = vector.load %arg4[%c0_32, %c0_33, %c0_34] : memref<1x90x1xf32, #tpu.memory_space<vmem>>, vector<1x90x1xf32>
    %43 = vector.shape_cast %42 : vector<1x90x1xf32> to vector<90x1xf32>
    %44 = vector.broadcast %43 : vector<90x1xf32> to vector<90x100xf32>
    %45 = arith.addf %41, %44 : vector<90x100xf32>
    %46 = vector.extract_strided_slice %45 {offsets = [0, 0], sizes = [30, 100], strides = [1, 1]} : vector<90x100xf32> to vector<30x100xf32>
    %47 = vector.extract_strided_slice %45 {offsets = [30, 0], sizes = [30, 100], strides = [1, 1]} : vector<90x100xf32> to vector<30x100xf32>
    %48 = vector.extract_strided_slice %45 {offsets = [60, 0], sizes = [30, 100], strides = [1, 1]} : vector<90x100xf32> to vector<30x100xf32>
    %49 = vector.extract_strided_slice %46 {offsets = [0, 0], sizes = [30, 25], strides = [1, 1]} : vector<30x100xf32> to vector<30x25xf32>
    %50 = vector.extract_strided_slice %47 {offsets = [0, 0], sizes = [30, 25], strides = [1, 1]} : vector<30x100xf32> to vector<30x25xf32>
    %cst_35 = arith.constant dense<0.000000e+00> : vector<30x30xf32>
    %51 = tpu.matmul %49, %50, %cst_35 {dimension_numbers = #tpu.dot_dimension_numbers<[1], [1], [0], [0], [0, 0, 1, 0], [], []>} : vector<30x25xf32>, vector<30x25xf32>, vector<30x30xf32> -> vector<30x30xf32>
    %cst_36 = arith.constant 2.000000e-01 : f32
    %52 = vector.broadcast %cst_36 : f32 to vector<30x30xf32>
    %53 = arith.mulf %51, %52 : vector<30x30xf32>
    %cst_37 = arith.constant dense<0xFF800000> : vector<30xf32>
    %54 = vector.multi_reduction <maximumf>, %53, %cst_37 [1] : vector<30x30xf32> to vector<30xf32>
    %55 = vector.shape_cast %54 : vector<30xf32> to vector<30x1xf32>
    %56 = vector.broadcast %55 : vector<30x1xf32> to vector<30x30xf32>
    %57 = arith.subf %53, %56 : vector<30x30xf32>
    %58 = math.exp %57 : vector<30x30xf32>
    %cst_38 = arith.constant dense<0.000000e+00> : vector<30xf32>
    %59 = vector.multi_reduction <add>, %58, %cst_38 [1] : vector<30x30xf32> to vector<30xf32>
    %60 = vector.shape_cast %59 : vector<30xf32> to vector<30x1xf32>
    %61 = vector.broadcast %60 : vector<30x1xf32> to vector<30x30xf32>
    %62 = arith.divf %58, %61 : vector<30x30xf32>
    %63 = vector.extract_strided_slice %48 {offsets = [0, 0], sizes = [30, 25], strides = [1, 1]} : vector<30x100xf32> to vector<30x25xf32>
    %cst_39 = arith.constant dense<0.000000e+00> : vector<30x25xf32>
    %64 = tpu.matmul %62, %63, %cst_39 {dimension_numbers = #tpu.dot_dimension_numbers<[1], [0], [0], [1], [0, 0, 1, 1], [], []>} : vector<30x30xf32>, vector<30x25xf32>, vector<30x25xf32> -> vector<30x25xf32>
    %65 = vector.extract_strided_slice %46 {offsets = [0, 25], sizes = [30, 25], strides = [1, 1]} : vector<30x100xf32> to vector<30x25xf32>
    %66 = vector.extract_strided_slice %47 {offsets = [0, 25], sizes = [30, 25], strides = [1, 1]} : vector<30x100xf32> to vector<30x25xf32>
    %cst_40 = arith.constant dense<0.000000e+00> : vector<30x30xf32>
    %67 = tpu.matmul %65, %66, %cst_40 {dimension_numbers = #tpu.dot_dimension_numbers<[1], [1], [0], [0], [0, 0, 1, 0], [], []>} : vector<30x25xf32>, vector<30x25xf32>, vector<30x30xf32> -> vector<30x30xf32>
    %cst_41 = arith.constant 2.000000e-01 : f32
    %68 = vector.broadcast %cst_41 : f32 to vector<30x30xf32>
    %69 = arith.mulf %67, %68 : vector<30x30xf32>
    %cst_42 = arith.constant dense<0xFF800000> : vector<30xf32>
    %70 = vector.multi_reduction <maximumf>, %69, %cst_42 [1] : vector<30x30xf32> to vector<30xf32>
    %71 = vector.shape_cast %70 : vector<30xf32> to vector<30x1xf32>
    %72 = vector.broadcast %71 : vector<30x1xf32> to vector<30x30xf32>
    %73 = arith.subf %69, %72 : vector<30x30xf32>
    %74 = math.exp %73 : vector<30x30xf32>
    %cst_43 = arith.constant dense<0.000000e+00> : vector<30xf32>
    %75 = vector.multi_reduction <add>, %74, %cst_43 [1] : vector<30x30xf32> to vector<30xf32>
    %76 = vector.shape_cast %75 : vector<30xf32> to vector<30x1xf32>
    %77 = vector.broadcast %76 : vector<30x1xf32> to vector<30x30xf32>
    %78 = arith.divf %74, %77 : vector<30x30xf32>
    %79 = vector.extract_strided_slice %48 {offsets = [0, 25], sizes = [30, 25], strides = [1, 1]} : vector<30x100xf32> to vector<30x25xf32>
    %cst_44 = arith.constant dense<0.000000e+00> : vector<30x25xf32>
    %80 = tpu.matmul %78, %79, %cst_44 {dimension_numbers = #tpu.dot_dimension_numbers<[1], [0], [0], [1], [0, 0, 1, 1], [], []>} : vector<30x30xf32>, vector<30x25xf32>, vector<30x25xf32> -> vector<30x25xf32>
    %81 = vector.extract_strided_slice %46 {offsets = [0, 50], sizes = [30, 25], strides = [1, 1]} : vector<30x100xf32> to vector<30x25xf32>
    %82 = vector.extract_strided_slice %47 {offsets = [0, 50], sizes = [30, 25], strides = [1, 1]} : vector<30x100xf32> to vector<30x25xf32>
    %cst_45 = arith.constant dense<0.000000e+00> : vector<30x30xf32>
    %83 = tpu.matmul %81, %82, %cst_45 {dimension_numbers = #tpu.dot_dimension_numbers<[1], [1], [0], [0], [0, 0, 1, 0], [], []>} : vector<30x25xf32>, vector<30x25xf32>, vector<30x30xf32> -> vector<30x30xf32>
    %cst_46 = arith.constant 2.000000e-01 : f32
    %84 = vector.broadcast %cst_46 : f32 to vector<30x30xf32>
    %85 = arith.mulf %83, %84 : vector<30x30xf32>
    %cst_47 = arith.constant dense<0xFF800000> : vector<30xf32>
    %86 = vector.multi_reduction <maximumf>, %85, %cst_47 [1] : vector<30x30xf32> to vector<30xf32>
    %87 = vector.shape_cast %86 : vector<30xf32> to vector<30x1xf32>
    %88 = vector.broadcast %87 : vector<30x1xf32> to vector<30x30xf32>
    %89 = arith.subf %85, %88 : vector<30x30xf32>
    %90 = math.exp %89 : vector<30x30xf32>
    %cst_48 = arith.constant dense<0.000000e+00> : vector<30xf32>
    %91 = vector.multi_reduction <add>, %90, %cst_48 [1] : vector<30x30xf32> to vector<30xf32>
    %92 = vector.shape_cast %91 : vector<30xf32> to vector<30x1xf32>
    %93 = vector.broadcast %92 : vector<30x1xf32> to vector<30x30xf32>
    %94 = arith.divf %90, %93 : vector<30x30xf32>
    %95 = vector.extract_strided_slice %48 {offsets = [0, 50], sizes = [30, 25], strides = [1, 1]} : vector<30x100xf32> to vector<30x25xf32>
    %cst_49 = arith.constant dense<0.000000e+00> : vector<30x25xf32>
    %96 = tpu.matmul %94, %95, %cst_49 {dimension_numbers = #tpu.dot_dimension_numbers<[1], [0], [0], [1], [0, 0, 1, 1], [], []>} : vector<30x30xf32>, vector<30x25xf32>, vector<30x25xf32> -> vector<30x25xf32>
    %97 = vector.extract_strided_slice %46 {offsets = [0, 75], sizes = [30, 25], strides = [1, 1]} : vector<30x100xf32> to vector<30x25xf32>
    %98 = vector.extract_strided_slice %47 {offsets = [0, 75], sizes = [30, 25], strides = [1, 1]} : vector<30x100xf32> to vector<30x25xf32>
    %cst_50 = arith.constant dense<0.000000e+00> : vector<30x30xf32>
    %99 = tpu.matmul %97, %98, %cst_50 {dimension_numbers = #tpu.dot_dimension_numbers<[1], [1], [0], [0], [0, 0, 1, 0], [], []>} : vector<30x25xf32>, vector<30x25xf32>, vector<30x30xf32> -> vector<30x30xf32>
    %cst_51 = arith.constant 2.000000e-01 : f32
    %100 = vector.broadcast %cst_51 : f32 to vector<30x30xf32>
    %101 = arith.mulf %99, %100 : vector<30x30xf32>
    %cst_52 = arith.constant dense<0xFF800000> : vector<30xf32>
    %102 = vector.multi_reduction <maximumf>, %101, %cst_52 [1] : vector<30x30xf32> to vector<30xf32>
    %103 = vector.shape_cast %102 : vector<30xf32> to vector<30x1xf32>
    %104 = vector.broadcast %103 : vector<30x1xf32> to vector<30x30xf32>
    %105 = arith.subf %101, %104 : vector<30x30xf32>
    %106 = math.exp %105 : vector<30x30xf32>
    %cst_53 = arith.constant dense<0.000000e+00> : vector<30xf32>
    %107 = vector.multi_reduction <add>, %106, %cst_53 [1] : vector<30x30xf32> to vector<30xf32>
    %108 = vector.shape_cast %107 : vector<30xf32> to vector<30x1xf32>
    %109 = vector.broadcast %108 : vector<30x1xf32> to vector<30x30xf32>
    %110 = arith.divf %106, %109 : vector<30x30xf32>
    %111 = vector.extract_strided_slice %48 {offsets = [0, 75], sizes = [30, 25], strides = [1, 1]} : vector<30x100xf32> to vector<30x25xf32>
    %cst_54 = arith.constant dense<0.000000e+00> : vector<30x25xf32>
    %112 = tpu.matmul %110, %111, %cst_54 {dimension_numbers = #tpu.dot_dimension_numbers<[1], [0], [0], [1], [0, 0, 1, 1], [], []>} : vector<30x30xf32>, vector<30x25xf32>, vector<30x25xf32> -> vector<30x25xf32>
    %113 = tpu.concatenate %64, %80, %96, %112 in 1 : vector<30x25xf32>, vector<30x25xf32>, vector<30x25xf32>, vector<30x25xf32> -> vector<30x100xf32>
    %c0_55 = arith.constant 0 : index
    %c0_56 = arith.constant 0 : index
    %c0_57 = arith.constant 0 : index
    %114 = vector.load %arg5[%c0_55, %c0_56, %c0_57] : memref<1x100x100xf32, #tpu.memory_space<vmem>>, vector<1x100x100xf32>
    %115 = vector.shape_cast %114 : vector<1x100x100xf32> to vector<100x100xf32>
    %cst_58 = arith.constant dense<0.000000e+00> : vector<30x100xf32>
    %116 = tpu.matmul %113, %115, %cst_58 {dimension_numbers = #tpu.dot_dimension_numbers<[1], [0], [0], [1], [0, 0, 1, 1], [], []>} : vector<30x100xf32>, vector<100x100xf32>, vector<30x100xf32> -> vector<30x100xf32>
    %c0_59 = arith.constant 0 : index
    %c0_60 = arith.constant 0 : index
    %c0_61 = arith.constant 0 : index
    %117 = vector.load %arg6[%c0_59, %c0_60, %c0_61] : memref<1x1x100xf32, #tpu.memory_space<vmem>>, vector<1x1x100xf32>
    %118 = vector.shape_cast %117 : vector<1x1x100xf32> to vector<1x100xf32>
    %119 = vector.broadcast %118 : vector<1x100xf32> to vector<30x100xf32>
    %120 = arith.addf %116, %119 : vector<30x100xf32>
    %121 = arith.addf %46, %120 : vector<30x100xf32>
    %c0_62 = arith.constant 0 : index
    %c0_63 = arith.constant 0 : index
    %c0_64 = arith.constant 0 : index
    %122 = vector.load %arg7[%c0_62, %c0_63, %c0_64] : memref<1x1x100xf32, #tpu.memory_space<vmem>>, vector<1x1x100xf32>
    %123 = vector.shape_cast %122 : vector<1x1x100xf32> to vector<1x100xf32>
    %c0_65 = arith.constant 0 : index
    %c0_66 = arith.constant 0 : index
    %c0_67 = arith.constant 0 : index
    %124 = vector.load %arg8[%c0_65, %c0_66, %c0_67] : memref<1x1x100xf32, #tpu.memory_space<vmem>>, vector<1x1x100xf32>
    %125 = vector.shape_cast %124 : vector<1x1x100xf32> to vector<1x100xf32>
    %cst_68 = arith.constant dense<0.000000e+00> : vector<30xf32>
    %126 = vector.multi_reduction <add>, %121, %cst_68 [1] : vector<30x100xf32> to vector<30xf32>
    %127 = vector.shape_cast %126 : vector<30xf32> to vector<30x1xf32>
    %cst_69 = arith.constant 1.000000e+02 : f32
    %128 = vector.broadcast %cst_69 : f32 to vector<30x1xf32>
    %129 = arith.divf %127, %128 : vector<30x1xf32>
    %130 = vector.broadcast %129 : vector<30x1xf32> to vector<30x100xf32>
    %131 = arith.subf %121, %130 : vector<30x100xf32>
    %132 = arith.mulf %131, %131 : vector<30x100xf32>
    %cst_70 = arith.constant dense<0.000000e+00> : vector<30xf32>
    %133 = vector.multi_reduction <add>, %132, %cst_70 [1] : vector<30x100xf32> to vector<30xf32>
    %134 = vector.shape_cast %133 : vector<30xf32> to vector<30x1xf32>
    %cst_71 = arith.constant 9.900000e+01 : f32
    %135 = vector.broadcast %cst_71 : f32 to vector<30x1xf32>
    %136 = arith.divf %134, %135 : vector<30x1xf32>
    %137 = vector.broadcast %129 : vector<30x1xf32> to vector<30x100xf32>
    %138 = arith.subf %121, %137 : vector<30x100xf32>
    %139 = vector.broadcast %123 : vector<1x100xf32> to vector<30x100xf32>
    %140 = arith.mulf %139, %138 : vector<30x100xf32>
    %141 = math.sqrt %136 : vector<30x1xf32>
    %cst_72 = arith.constant 9.99999997E-7 : f32
    %142 = vector.broadcast %cst_72 : f32 to vector<30x1xf32>
    %143 = arith.addf %141, %142 : vector<30x1xf32>
    %144 = vector.broadcast %143 : vector<30x1xf32> to vector<30x100xf32>
    %145 = arith.divf %140, %144 : vector<30x100xf32>
    %146 = vector.broadcast %125 : vector<1x100xf32> to vector<30x100xf32>
    %147 = arith.addf %145, %146 : vector<30x100xf32>
    %c0_73 = arith.constant 0 : index
    %c0_74 = arith.constant 0 : index
    %c0_75 = arith.constant 0 : index
    %148 = vector.load %arg9[%c0_73, %c0_74, %c0_75] : memref<1x100x120xf32, #tpu.memory_space<vmem>>, vector<1x100x120xf32>
    %149 = vector.shape_cast %148 : vector<1x100x120xf32> to vector<100x120xf32>
    %cst_76 = arith.constant dense<0.000000e+00> : vector<30x120xf32>
    %150 = tpu.matmul %147, %149, %cst_76 {dimension_numbers = #tpu.dot_dimension_numbers<[1], [0], [0], [1], [0, 0, 1, 1], [], []>} : vector<30x100xf32>, vector<100x120xf32>, vector<30x120xf32> -> vector<30x120xf32>
    %c0_77 = arith.constant 0 : index
    %c0_78 = arith.constant 0 : index
    %c0_79 = arith.constant 0 : index
    %151 = vector.load %arg10[%c0_77, %c0_78, %c0_79] : memref<1x1x120xf32, #tpu.memory_space<vmem>>, vector<1x1x120xf32>
    %152 = vector.shape_cast %151 : vector<1x1x120xf32> to vector<1x120xf32>
    %153 = vector.broadcast %152 : vector<1x120xf32> to vector<30x120xf32>
    %154 = arith.addf %150, %153 : vector<30x120xf32>
    %cst_80 = arith.constant 0.000000e+00 : f32
    %155 = vector.broadcast %cst_80 : f32 to vector<30x120xf32>
    %156 = arith.maximumf %154, %155 : vector<30x120xf32>
    %c0_81 = arith.constant 0 : index
    %c0_82 = arith.constant 0 : index
    %c0_83 = arith.constant 0 : index
    %157 = vector.load %arg11[%c0_81, %c0_82, %c0_83] : memref<1x120x100xf32, #tpu.memory_space<vmem>>, vector<1x120x100xf32>
    %158 = vector.shape_cast %157 : vector<1x120x100xf32> to vector<120x100xf32>
    %cst_84 = arith.constant dense<0.000000e+00> : vector<30x100xf32>
    %159 = tpu.matmul %156, %158, %cst_84 {dimension_numbers = #tpu.dot_dimension_numbers<[1], [0], [0], [1], [0, 0, 1, 1], [], []>} : vector<30x120xf32>, vector<120x100xf32>, vector<30x100xf32> -> vector<30x100xf32>
    %c0_85 = arith.constant 0 : index
    %c0_86 = arith.constant 0 : index
    %c0_87 = arith.constant 0 : index
    %160 = vector.load %arg12[%c0_85, %c0_86, %c0_87] : memref<1x1x100xf32, #tpu.memory_space<vmem>>, vector<1x1x100xf32>
    %161 = vector.shape_cast %160 : vector<1x1x100xf32> to vector<1x100xf32>
    %162 = vector.broadcast %161 : vector<1x100xf32> to vector<30x100xf32>
    %163 = arith.addf %159, %162 : vector<30x100xf32>
    %164 = arith.addf %121, %163 : vector<30x100xf32>
    %c0_88 = arith.constant 0 : index
    %c0_89 = arith.constant 0 : index
    %165 = vector.load %arg16[%c0_88, %c0_89] : memref<30x100xf32, #tpu.memory_space<vmem>>, vector<30x100xf32>
    tpu.vector_store %arg16[%c0_88, %c0_89], %164 {strides = array<i32>} : memref<30x100xf32, #tpu.memory_space<vmem>>, vector<30x100xf32>,
    %c1_i32 = arith.constant 1 : i32
    %166 = arith.cmpi eq, %arg1, %c1_i32 : i32
    %167 = arith.extui %166 : i1 to i32
    %c0_i32_90 = arith.constant 0 : i32
    %168 = arith.cmpi ne, %167, %c0_i32_90 : i32
    scf.if %168 {
      %c0_91 = arith.constant 0 : index
      %c0_92 = arith.constant 0 : index
      %169 = vector.load %arg13[%c0_91, %c0_92] : memref<1x100xf32, #tpu.memory_space<vmem>>, vector<1x100xf32>
      %c0_93 = arith.constant 0 : index
      %c0_94 = arith.constant 0 : index
      %170 = vector.load %arg14[%c0_93, %c0_94] : memref<1x100xf32, #tpu.memory_space<vmem>>, vector<1x100xf32>
      %cst_95 = arith.constant dense<0.000000e+00> : vector<30xf32>
      %171 = vector.multi_reduction <add>, %164, %cst_95 [1] : vector<30x100xf32> to vector<30xf32>
      %172 = vector.shape_cast %171 : vector<30xf32> to vector<30x1xf32>
      %cst_96 = arith.constant 1.000000e+02 : f32
      %173 = vector.broadcast %cst_96 : f32 to vector<30x1xf32>
      %174 = arith.divf %172, %173 : vector<30x1xf32>
      %175 = vector.broadcast %174 : vector<30x1xf32> to vector<30x100xf32>
      %176 = arith.subf %164, %175 : vector<30x100xf32>
      %177 = arith.mulf %176, %176 : vector<30x100xf32>
      %cst_97 = arith.constant dense<0.000000e+00> : vector<30xf32>
      %178 = vector.multi_reduction <add>, %177, %cst_97 [1] : vector<30x100xf32> to vector<30xf32>
      %179 = vector.shape_cast %178 : vector<30xf32> to vector<30x1xf32>
      %cst_98 = arith.constant 9.900000e+01 : f32
      %180 = vector.broadcast %cst_98 : f32 to vector<30x1xf32>
      %181 = arith.divf %179, %180 : vector<30x1xf32>
      %182 = vector.broadcast %174 : vector<30x1xf32> to vector<30x100xf32>
      %183 = arith.subf %164, %182 : vector<30x100xf32>
      %184 = vector.broadcast %169 : vector<1x100xf32> to vector<30x100xf32>
      %185 = arith.mulf %184, %183 : vector<30x100xf32>
      %186 = math.sqrt %181 : vector<30x1xf32>
      %cst_99 = arith.constant 9.99999997E-7 : f32
      %187 = vector.broadcast %cst_99 : f32 to vector<30x1xf32>
      %188 = arith.addf %186, %187 : vector<30x1xf32>
      %189 = vector.broadcast %188 : vector<30x1xf32> to vector<30x100xf32>
      %190 = arith.divf %185, %189 : vector<30x100xf32>
      %191 = vector.broadcast %170 : vector<1x100xf32> to vector<30x100xf32>
      %192 = arith.addf %190, %191 : vector<30x100xf32>
      %c0_100 = arith.constant 0 : index
      %c0_101 = arith.constant 0 : index
      %c0_102 = arith.constant 0 : index
      %193 = vector.load %arg15[%c0_100, %c0_101, %c0_102] : memref<1x30x100xf32, #tpu.memory_space<vmem>>, vector<1x30x100xf32>
      %194 = vector.shape_cast %193 : vector<1x30x100xf32> to vector<30x100xf32>
      %195 = vector.shape_cast %192 : vector<30x100xf32> to vector<1x30x100xf32>
      tpu.vector_store %arg15[%c0_100, %c0_101, %c0_102], %195 {strides = array<i32>} : memref<1x30x100xf32, #tpu.memory_space<vmem>>, vector<1x30x100xf32>,
    } else {
    }
    return
  }
  func.func @transform_0(%arg0: i32, %arg1: i32) -> (i32, i32, i32) {
    %c0_i32 = arith.constant 0 : i32
    %c0_i32_0 = arith.constant 0 : i32
    %c0_i32_1 = arith.constant 0 : i32
    return %arg0, %c0_i32, %c0_i32_0 : i32, i32, i32
  }
  func.func @transform_1(%arg0: i32, %arg1: i32) -> (i32, i32, i32, i32) {
    %c0_i32 = arith.constant 0 : i32
    %c0_i32_0 = arith.constant 0 : i32
    %c0_i32_1 = arith.constant 0 : i32
    %c0_i32_2 = arith.constant 0 : i32
    return %arg1, %c0_i32, %c0_i32_0, %c0_i32_1 : i32, i32, i32, i32
  }
  func.func @transform_2(%arg0: i32, %arg1: i32) -> (i32, i32, i32) {
    %c0_i32 = arith.constant 0 : i32
    %c0_i32_0 = arith.constant 0 : i32
    %c0_i32_1 = arith.constant 0 : i32
    return %arg1, %c0_i32, %c0_i32_0 : i32, i32, i32
  }
  func.func @transform_3(%arg0: i32, %arg1: i32) -> (i32, i32, i32) {
    %c0_i32 = arith.constant 0 : i32
    %c0_i32_0 = arith.constant 0 : i32
    %c0_i32_1 = arith.constant 0 : i32
    return %arg1, %c0_i32, %c0_i32_0 : i32, i32, i32
  }
  func.func @transform_4(%arg0: i32, %arg1: i32) -> (i32, i32, i32) {
    %c0_i32 = arith.constant 0 : i32
    %c0_i32_0 = arith.constant 0 : i32
    %c0_i32_1 = arith.constant 0 : i32
    return %arg1, %c0_i32, %c0_i32_0 : i32, i32, i32
  }
  func.func @transform_5(%arg0: i32, %arg1: i32) -> (i32, i32, i32) {
    %c0_i32 = arith.constant 0 : i32
    %c0_i32_0 = arith.constant 0 : i32
    %c0_i32_1 = arith.constant 0 : i32
    return %arg1, %c0_i32, %c0_i32_0 : i32, i32, i32
  }
  func.func @transform_6(%arg0: i32, %arg1: i32) -> (i32, i32, i32) {
    %c0_i32 = arith.constant 0 : i32
    %c0_i32_0 = arith.constant 0 : i32
    %c0_i32_1 = arith.constant 0 : i32
    return %arg1, %c0_i32, %c0_i32_0 : i32, i32, i32
  }
  func.func @transform_7(%arg0: i32, %arg1: i32) -> (i32, i32, i32) {
    %c0_i32 = arith.constant 0 : i32
    %c0_i32_0 = arith.constant 0 : i32
    %c0_i32_1 = arith.constant 0 : i32
    return %arg1, %c0_i32, %c0_i32_0 : i32, i32, i32
  }
  func.func @transform_8(%arg0: i32, %arg1: i32) -> (i32, i32, i32) {
    %c0_i32 = arith.constant 0 : i32
    %c0_i32_0 = arith.constant 0 : i32
    %c0_i32_1 = arith.constant 0 : i32
    return %arg1, %c0_i32, %c0_i32_0 : i32, i32, i32
  }
  func.func @transform_9(%arg0: i32, %arg1: i32) -> (i32, i32, i32) {
    %c0_i32 = arith.constant 0 : i32
    %c0_i32_0 = arith.constant 0 : i32
    %c0_i32_1 = arith.constant 0 : i32
    return %arg1, %c0_i32, %c0_i32_0 : i32, i32, i32
  }
  func.func @transform_10(%arg0: i32, %arg1: i32) -> (i32, i32, i32) {
    %c0_i32 = arith.constant 0 : i32
    %c0_i32_0 = arith.constant 0 : i32
    %c0_i32_1 = arith.constant 0 : i32
    return %arg1, %c0_i32, %c0_i32_0 : i32, i32, i32
  }
  func.func @transform_11(%arg0: i32, %arg1: i32) -> (i32, i32) {
    %c0_i32 = arith.constant 0 : i32
    %c0_i32_0 = arith.constant 0 : i32
    %c0_i32_1 = arith.constant 0 : i32
    return %c0_i32, %c0_i32_0 : i32, i32
  }
  func.func @transform_12(%arg0: i32, %arg1: i32) -> (i32, i32) {
    %c0_i32 = arith.constant 0 : i32
    %c0_i32_0 = arith.constant 0 : i32
    %c0_i32_1 = arith.constant 0 : i32
    return %c0_i32, %c0_i32_0 : i32, i32
  }
  func.func @transform_13(%arg0: i32, %arg1: i32) -> (i32, i32, i32) {
    %c0_i32 = arith.constant 0 : i32
    %c0_i32_0 = arith.constant 0 : i32
    %c0_i32_1 = arith.constant 0 : i32
    return %arg0, %c0_i32, %c0_i32_0 : i32, i32, i32
  }
}

</mosaic_0001>

<llo_original>
// kernel: tce_forward.1
$region0: #{tce_forward.1}
  #allocation0 [shape = 'u32[]', space=smem, size = 0x4, offset = 0x4, fixed_abs, tag = 'smem constant byte address 0x4 - core index']
  #allocation1 [shape = 'u32[144,128]{1,0:T(1,128)}', space=vmem, size = 0x12000, scoped, tag = 'internal scratch']
  #allocation2 [shape = 'f32[30,100]{1,0:T(8,128)}', space=vmem, size = 0x4000, scoped, tag = 'scratch operand']
  %s0 = inlined_call_operand.vmem [shape: f32[2,30,100], index: 0, kind: input, shape index: {}]
  %s1 = inlined_call_operand.vmem [shape: f32[2,7,90,30], index: 1, kind: input, shape index: {}]
  %s2 = inlined_call_operand.vmem [shape: f32[2,90,1], index: 2, kind: input, shape index: {}]
  %s3 = inlined_call_operand.vmem [shape: f32[2,100,100], index: 3, kind: input, shape index: {}]
  %s4 = inlined_call_operand.vmem [shape: f32[2,1,100], index: 4, kind: input, shape index: {}]
  %s5 = inlined_call_operand.vmem [shape: f32[2,1,100], index: 5, kind: input, shape index: {}]
  %s6 = inlined_call_operand.vmem [shape: f32[2,1,100], index: 6, kind: input, shape index: {}]
  %s7 = inlined_call_operand.vmem [shape: f32[2,100,120], index: 7, kind: input, shape index: {}]
  %s8 = inlined_call_operand.vmem [shape: f32[2,1,120], index: 8, kind: input, shape index: {}]
  %s9 = inlined_call_operand.vmem [shape: f32[2,120,100], index: 9, kind: input, shape index: {}]
  %s10 = inlined_call_operand.vmem [shape: f32[2,1,100], index: 10, kind: input, shape index: {}]
  %s11 = inlined_call_operand.vmem [shape: f32[1,100], index: 11, kind: input, shape index: {}]
  %s12 = inlined_call_operand.vmem [shape: f32[1,100], index: 12, kind: input, shape index: {}]
  %s13 = inlined_call_operand.vmem [shape: f32[2,30,100], index: 13, kind: output, shape index: {}]
  %s14 = sld [smem:[#allocation0]]
  $region93: #{tce_forward.1} parent=0
    _
  %s16 = ssub.s32 1, %s14
  %s17 = scalar_select 0, %s16, %s14
  loop: start=0, step=1, limit=6
  $region2: #{tce_forward.1} parent=0 // loop_pre_header
    _
  $region3: #{tce_forward.1} parent=0 // loop_header
    %s19 = sphi 0, %s23
    %p20 = scmp.ge.s32.totalorder %s19, 6
    %s26 = sphi 0, %s38
    %s27 = sphi 0, %s34
    %s28 = sphi 0, %s26
    %s29 = sphi 0, %s27
    %s30 = sphi 0, %s28
    %s31 = sphi 0, %s29
    %s41 = sphi 0, %s43
    %s44 = sphi 0, %s41
    %s45 = sphi 0, %s44
    %s61 = sphi 0, %s45
    %s67 = sphi 0, %s69
    %s70 = sphi 0, %s67
    %s71 = sphi 0, %s70
    %s87 = sphi 0, %s71
    %s93 = sphi 0, %s95
    %s96 = sphi 0, %s93
    %s97 = sphi 0, %s96
    %s113 = sphi 0, %s97
    %s119 = sphi 0, %s121
    %s122 = sphi 0, %s119
    %s123 = sphi 0, %s122
    %s139 = sphi 0, %s123
    %s145 = sphi 0, %s147
    %s148 = sphi 0, %s145
    %s149 = sphi 0, %s148
    %s165 = sphi 0, %s149
    %s171 = sphi 0, %s173
    %s174 = sphi 0, %s171
    %s175 = sphi 0, %s174
    %s191 = sphi 0, %s175
    %s197 = sphi 0, %s199
    %s200 = sphi 0, %s197
    %s201 = sphi 0, %s200
    %s217 = sphi 0, %s201
    %s223 = sphi 0, %s225
    %s226 = sphi 0, %s223
    %s227 = sphi 0, %s226
    %s243 = sphi 0, %s227
    %s249 = sphi 0, %s251
    %s252 = sphi 0, %s249
    %s253 = sphi 0, %s252
    %s269 = sphi 0, %s253
    %s275 = sphi 0, %s277
    %s278 = sphi 0, %s275
    %s279 = sphi 0, %s278
    %s295 = sphi 0, %s279
    %s301 = sphi 0, %s303
    %s304 = sphi 0, %s301
    %s305 = sphi 0, %s304
    %s321 = sphi 0, %s305
    %s325 = sphi 0, %s325
    %s327 = sphi 0, %s325
    %s328 = sphi 0, %s327
    %s342 = sphi 0, %s328
    %s346 = sphi 0, %s346
    %s348 = sphi 0, %s346
    %s349 = sphi 0, %s348
    %s363 = sphi 0, %s349
    %s369 = sphi 0, %s371
    %s372 = sphi 0, %s369
    %s373 = sphi 0, %s372
    %s389 = sphi 0, %s373
  $region4: #{tce_forward.1} parent=0 // loop_header_branch
    %22 = sbr.rel (%p20) target = $region8
  $region5: #{tce_forward.1} parent=0 // loop_body
    %s24 = ssub.s32 %s19, 1
    %s25 = ssub.s32 %s19, 2
    %s32 = sadd.s32 1, %s27
    %p33 = scmp.ge.s32.totalorder %s32, 2
    %s34 = scalar_select %p33, 0, %s32
    %s35 = sadd.s32 1, %s26
    %s36 = scalar_select %p33, %s35, %s26
    %p37 = scmp.ge.s32.totalorder %s36, 2
    %s38 = scalar_select %p37, 0, %s36
    %s39 = ssub.s32 %s26, %s38
    %p40 = scmp.eq.s32.totalorder %s39, 0
    %s42 = sadd.s32 %s41, 1
    %s43 = scalar_select %p40, %s41, %s42
    %p46 = pneg %p40
    %p47 = scmp.eq.s32.totalorder %s19, 3
    %p48 = por %p46, %p47
    %p49 = scmp.ne.s32.totalorder %s41, %s44
    %p50 = scmp.eq.s32.totalorder %s19, 0
    %p51 = por %p49, %p50
    %p52 = scmp.ne.s32.totalorder %s41, %s44
    %p53 = scmp.eq.s32.totalorder %s24, 3
    %p54 = por %p52, %p53
    %p55 = scmp.ne.s32.totalorder %s44, %s45
    %p56 = scmp.eq.s32.totalorder %s24, 0
    %p57 = por %p55, %p56
    %p58 = scmp.ne.s32.totalorder %s44, %s45
    %p59 = scmp.eq.s32.totalorder %s25, 3
    %p60 = por %p58, %p59
    %p62 = scmp.ne.s32.totalorder %s45, %s61
    %p63 = scmp.eq.s32.totalorder %s25, 0
    %p64 = por %p62, %p63
    %s65 = ssub.s32 %s27, %s34
    %p66 = scmp.eq.s32.totalorder %s65, 0
    %s68 = sadd.s32 %s67, 1
    %s69 = scalar_select %p66, %s67, %s68
    %p72 = pneg %p66
    %p73 = scmp.eq.s32.totalorder %s19, 3
    %p74 = por %p72, %p73
    %p75 = scmp.ne.s32.totalorder %s67, %s70
    %p76 = scmp.eq.s32.totalorder %s19, 0
    %p77 = por %p75, %p76
    %p78 = scmp.ne.s32.totalorder %s67, %s70
    %p79 = scmp.eq.s32.totalorder %s24, 3
    %p80 = por %p78, %p79
    %p81 = scmp.ne.s32.totalorder %s70, %s71
    %p82 = scmp.eq.s32.totalorder %s24, 0
    %p83 = por %p81, %p82
    %p84 = scmp.ne.s32.totalorder %s70, %s71
    %p85 = scmp.eq.s32.totalorder %s25, 3
    %p86 = por %p84, %p85
    %p88 = scmp.ne.s32.totalorder %s71, %s87
    %p89 = scmp.eq.s32.totalorder %s25, 0
    %p90 = por %p88, %p89
    %s91 = ssub.s32 %s27, %s34
    %p92 = scmp.eq.s32.totalorder %s91, 0
    %s94 = sadd.s32 %s93, 1
    %s95 = scalar_select %p92, %s93, %s94
    %p98 = pneg %p92
    %p99 = scmp.eq.s32.totalorder %s19, 3
    %p100 = por %p98, %p99
    %p101 = scmp.ne.s32.totalorder %s93, %s96
    %p102 = scmp.eq.s32.totalorder %s19, 0
    %p103 = por %p101, %p102
    %p104 = scmp.ne.s32.totalorder %s93, %s96
    %p105 = scmp.eq.s32.totalorder %s24, 3
    %p106 = por %p104, %p105
    %p107 = scmp.ne.s32.totalorder %s96, %s97
    %p108 = scmp.eq.s32.totalorder %s24, 0
    %p109 = por %p107, %p108
    %p110 = scmp.ne.s32.totalorder %s96, %s97
    %p111 = scmp.eq.s32.totalorder %s25, 3
    %p112 = por %p110, %p111
    %p114 = scmp.ne.s32.totalorder %s97, %s113
    %p115 = scmp.eq.s32.totalorder %s25, 0
    %p116 = por %p114, %p115
    %s117 = ssub.s32 %s27, %s34
    %p118 = scmp.eq.s32.totalorder %s117, 0
    %s120 = sadd.s32 %s119, 1
    %s121 = scalar_select %p118, %s119, %s120
    %p124 = pneg %p118
    %p125 = scmp.eq.s32.totalorder %s19, 3
    %p126 = por %p124, %p125
    %p127 = scmp.ne.s32.totalorder %s119, %s122
    %p128 = scmp.eq.s32.totalorder %s19, 0
    %p129 = por %p127, %p128
    %p130 = scmp.ne.s32.totalorder %s119, %s122
    %p131 = scmp.eq.s32.totalorder %s24, 3
    %p132 = por %p130, %p131
    %p133 = scmp.ne.s32.totalorder %s122, %s123
    %p134 = scmp.eq.s32.totalorder %s24, 0
    %p135 = por %p133, %p134
    %p136 = scmp.ne.s32.totalorder %s122, %s123
    %p137 = scmp.eq.s32.totalorder %s25, 3
    %p138 = por %p136, %p137
    %p140 = scmp.ne.s32.totalorder %s123, %s139
    %p141 = scmp.eq.s32.totalorder %s25, 0
    %p142 = por %p140, %p141
    %s143 = ssub.s32 %s27, %s34
    %p144 = scmp.eq.s32.totalorder %s143, 0
    %s146 = sadd.s32 %s145, 1
    %s147 = scalar_select %p144, %s145, %s146
    %p150 = pneg %p144
    %p151 = scmp.eq.s32.totalorder %s19, 3
    %p152 = por %p150, %p151
    %p153 = scmp.ne.s32.totalorder %s145, %s148
    %p154 = scmp.eq.s32.totalorder %s19, 0
    %p155 = por %p153, %p154
    %p156 = scmp.ne.s32.totalorder %s145, %s148
    %p157 = scmp.eq.s32.totalorder %s24, 3
    %p158 = por %p156, %p157
    %p159 = scmp.ne.s32.totalorder %s148, %s149
    %p160 = scmp.eq.s32.totalorder %s24, 0
    %p161 = por %p159, %p160
    %p162 = scmp.ne.s32.totalorder %s148, %s149
    %p163 = scmp.eq.s32.totalorder %s25, 3
    %p164 = por %p162, %p163
    %p166 = scmp.ne.s32.totalorder %s149, %s165
    %p167 = scmp.eq.s32.totalorder %s25, 0
    %p168 = por %p166, %p167
    %s169 = ssub.s32 %s27, %s34
    %p170 = scmp.eq.s32.totalorder %s169, 0
    %s172 = sadd.s32 %s171, 1
    %s173 = scalar_select %p170, %s171, %s172
    %p176 = pneg %p170
    %p177 = scmp.eq.s32.totalorder %s19, 3
    %p178 = por %p176, %p177
    %p179 = scmp.ne.s32.totalorder %s171, %s174
    %p180 = scmp.eq.s32.totalorder %s19, 0
    %p181 = por %p179, %p180
    %p182 = scmp.ne.s32.totalorder %s171, %s174
    %p183 = scmp.eq.s32.totalorder %s24, 3
    %p184 = por %p182, %p183
    %p185 = scmp.ne.s32.totalorder %s174, %s175
    %p186 = scmp.eq.s32.totalorder %s24, 0
    %p187 = por %p185, %p186
    %p188 = scmp.ne.s32.totalorder %s174, %s175
    %p189 = scmp.eq.s32.totalorder %s25, 3
    %p190 = por %p188, %p189
    %p192 = scmp.ne.s32.totalorder %s175, %s191
    %p193 = scmp.eq.s32.totalorder %s25, 0
    %p194 = por %p192, %p193
    %s195 = ssub.s32 %s27, %s34
    %p196 = scmp.eq.s32.totalorder %s195, 0
    %s198 = sadd.s32 %s197, 1
    %s199 = scalar_select %p196, %s197, %s198
    %p202 = pneg %p196
    %p203 = scmp.eq.s32.totalorder %s19, 3
    %p204 = por %p202, %p203
    %p205 = scmp.ne.s32.totalorder %s197, %s200
    %p206 = scmp.eq.s32.totalorder %s19, 0
    %p207 = por %p205, %p206
    %p208 = scmp.ne.s32.totalorder %s197, %s200
    %p209 = scmp.eq.s32.totalorder %s24, 3
    %p210 = por %p208, %p209
    %p211 = scmp.ne.s32.totalorder %s200, %s201
    %p212 = scmp.eq.s32.totalorder %s24, 0
    %p213 = por %p211, %p212
    %p214 = scmp.ne.s32.totalorder %s200, %s201
    %p215 = scmp.eq.s32.totalorder %s25, 3
    %p216 = por %p214, %p215
    %p218 = scmp.ne.s32.totalorder %s201, %s217
    %p219 = scmp.eq.s32.totalorder %s25, 0
    %p220 = por %p218, %p219
    %s221 = ssub.s32 %s27, %s34
    %p222 = scmp.eq.s32.totalorder %s221, 0
    %s224 = sadd.s32 %s223, 1
    %s225 = scalar_select %p222, %s223, %s224
    %p228 = pneg %p222
    %p229 = scmp.eq.s32.totalorder %s19, 3
    %p230 = por %p228, %p229
    %p231 = scmp.ne.s32.totalorder %s223, %s226
    %p232 = scmp.eq.s32.totalorder %s19, 0
    %p233 = por %p231, %p232
    %p234 = scmp.ne.s32.totalorder %s223, %s226
    %p235 = scmp.eq.s32.totalorder %s24, 3
    %p236 = por %p234, %p235
    %p237 = scmp.ne.s32.totalorder %s226, %s227
    %p238 = scmp.eq.s32.totalorder %s24, 0
    %p239 = por %p237, %p238
    %p240 = scmp.ne.s32.totalorder %s226, %s227
    %p241 = scmp.eq.s32.totalorder %s25, 3
    %p242 = por %p240, %p241
    %p244 = scmp.ne.s32.totalorder %s227, %s243
    %p245 = scmp.eq.s32.totalorder %s25, 0
    %p246 = por %p244, %p245
    %s247 = ssub.s32 %s27, %s34
    %p248 = scmp.eq.s32.totalorder %s247, 0
    %s250 = sadd.s32 %s249, 1
    %s251 = scalar_select %p248, %s249, %s250
    %p254 = pneg %p248
    %p255 = scmp.eq.s32.totalorder %s19, 3
    %p256 = por %p254, %p255
    %p257 = scmp.ne.s32.totalorder %s249, %s252
    %p258 = scmp.eq.s32.totalorder %s19, 0
    %p259 = por %p257, %p258
    %p260 = scmp.ne.s32.totalorder %s249, %s252
    %p261 = scmp.eq.s32.totalorder %s24, 3
    %p262 = por %p260, %p261
    %p263 = scmp.ne.s32.totalorder %s252, %s253
    %p264 = scmp.eq.s32.totalorder %s24, 0
    %p265 = por %p263, %p264
    %p266 = scmp.ne.s32.totalorder %s252, %s253
    %p267 = scmp.eq.s32.totalorder %s25, 3
    %p268 = por %p266, %p267
    %p270 = scmp.ne.s32.totalorder %s253, %s269
    %p271 = scmp.eq.s32.totalorder %s25, 0
    %p272 = por %p270, %p271
    %s273 = ssub.s32 %s27, %s34
    %p274 = scmp.eq.s32.totalorder %s273, 0
    %s276 = sadd.s32 %s275, 1
    %s277 = scalar_select %p274, %s275, %s276
    %p280 = pneg %p274
    %p281 = scmp.eq.s32.totalorder %s19, 3
    %p282 = por %p280, %p281
    %p283 = scmp.ne.s32.totalorder %s275, %s278
    %p284 = scmp.eq.s32.totalorder %s19, 0
    %p285 = por %p283, %p284
    %p286 = scmp.ne.s32.totalorder %s275, %s278
    %p287 = scmp.eq.s32.totalorder %s24, 3
    %p288 = por %p286, %p287
    %p289 = scmp.ne.s32.totalorder %s278, %s279
    %p290 = scmp.eq.s32.totalorder %s24, 0
    %p291 = por %p289, %p290
    %p292 = scmp.ne.s32.totalorder %s278, %s279
    %p293 = scmp.eq.s32.totalorder %s25, 3
    %p294 = por %p292, %p293
    %p296 = scmp.ne.s32.totalorder %s279, %s295
    %p297 = scmp.eq.s32.totalorder %s25, 0
    %p298 = por %p296, %p297
    %s299 = ssub.s32 %s27, %s34
    %p300 = scmp.eq.s32.totalorder %s299, 0
    %s302 = sadd.s32 %s301, 1
    %s303 = scalar_select %p300, %s301, %s302
    %p306 = pneg %p300
    %p307 = scmp.eq.s32.totalorder %s19, 3
    %p308 = por %p306, %p307
    %p309 = scmp.ne.s32.totalorder %s301, %s304
    %p310 = scmp.eq.s32.totalorder %s19, 0
    %p311 = por %p309, %p310
    %p312 = scmp.ne.s32.totalorder %s301, %s304
    %p313 = scmp.eq.s32.totalorder %s24, 3
    %p314 = por %p312, %p313
    %p315 = scmp.ne.s32.totalorder %s304, %s305
    %p316 = scmp.eq.s32.totalorder %s24, 0
    %p317 = por %p315, %p316
    %p318 = scmp.ne.s32.totalorder %s304, %s305
    %p319 = scmp.eq.s32.totalorder %s25, 3
    %p320 = por %p318, %p319
    %p322 = scmp.ne.s32.totalorder %s305, %s321
    %p323 = scmp.eq.s32.totalorder %s25, 0
    %p324 = por %p322, %p323
    %s326 = sadd.s32 %s325, 1
    %p329 = scmp.eq.s32.totalorder %s19, 3
    %p330 = scmp.ne.s32.totalorder %s325, %s327
    %p331 = scmp.eq.s32.totalorder %s19, 0
    %p332 = por %p330, %p331
    %p333 = scmp.ne.s32.totalorder %s325, %s327
    %p334 = scmp.eq.s32.totalorder %s24, 3
    %p335 = por %p333, %p334
    %p336 = scmp.ne.s32.totalorder %s327, %s328
    %p337 = scmp.eq.s32.totalorder %s24, 0
    %p338 = por %p336, %p337
    %p339 = scmp.ne.s32.totalorder %s327, %s328
    %p340 = scmp.eq.s32.totalorder %s25, 3
    %p341 = por %p339, %p340
    %p343 = scmp.ne.s32.totalorder %s328, %s342
    %p344 = scmp.eq.s32.totalorder %s25, 0
    %p345 = por %p343, %p344
    %s347 = sadd.s32 %s346, 1
    %p350 = scmp.eq.s32.totalorder %s19, 3
    %p351 = scmp.ne.s32.totalorder %s346, %s348
    %p352 = scmp.eq.s32.totalorder %s19, 0
    %p353 = por %p351, %p352
    %p354 = scmp.ne.s32.totalorder %s346, %s348
    %p355 = scmp.eq.s32.totalorder %s24, 3
    %p356 = por %p354, %p355
    %p357 = scmp.ne.s32.totalorder %s348, %s349
    %p358 = scmp.eq.s32.totalorder %s24, 0
    %p359 = por %p357, %p358
    %p360 = scmp.ne.s32.totalorder %s348, %s349
    %p361 = scmp.eq.s32.totalorder %s25, 3
    %p362 = por %p360, %p361
    %p364 = scmp.ne.s32.totalorder %s349, %s363
    %p365 = scmp.eq.s32.totalorder %s25, 0
    %p366 = por %p364, %p365
    %s367 = ssub.s32 %s26, %s38
    %p368 = scmp.eq.s32.totalorder %s367, 0
    %s370 = sadd.s32 %s369, 1
    %s371 = scalar_select %p368, %s369, %s370
    %p374 = pneg %p368
    %p375 = scmp.eq.s32.totalorder %s19, 3
    %p376 = por %p374, %p375
    %p377 = scmp.ne.s32.totalorder %s369, %s372
    %p378 = scmp.eq.s32.totalorder %s19, 0
    %p379 = por %p377, %p378
    %p380 = scmp.ne.s32.totalorder %s369, %s372
    %p381 = scmp.eq.s32.totalorder %s24, 3
    %p382 = por %p380, %p381
    %p383 = scmp.ne.s32.totalorder %s372, %s373
    %p384 = scmp.eq.s32.totalorder %s24, 0
    %p385 = por %p383, %p384
    %p386 = scmp.ne.s32.totalorder %s372, %s373
    %p387 = scmp.eq.s32.totalorder %s25, 3
    %p388 = por %p386, %p387
    %p390 = scmp.ne.s32.totalorder %s373, %s389
    %p391 = scmp.eq.s32.totalorder %s25, 0
    %p392 = por %p390, %p391
    %p393 = scmp.le.s32.totalorder 1, %s19
    %p394 = scmp.lt.s32.totalorder %s19, 5
    %p395 = pnand %p393, %p394
    %p396 = pneg %p395
    // Predicated region
    $region9: #{tce_forward.1} parent=5 // pred_check
      _
    $region10: #{tce_forward.1} parent=5 // pred_check_branch
      %398 = sbr.rel (%p395) target = $region12
    $region11: #{tce_forward.1} parent=5 // pred_region
      %s399 = ssub.s32 %s19, 1
      // Predicated region
      $region13: #{tce_forward.1} parent=11 // pred_check
        %p400 = pneg %p338
      $region14: #{tce_forward.1} parent=11 // pred_check_branch
        %402 = sbr.rel (%p400) target = $region16
      $region15: #{tce_forward.1} parent=11 // pred_region
        _
      $region16: #{tce_forward.1} parent=11 // pred_fallthru
        _
      // Predicated region
      $region17: #{tce_forward.1} parent=11 // pred_check
        %p403 = pneg %p359
      $region18: #{tce_forward.1} parent=11 // pred_check_branch
        %405 = sbr.rel (%p403) target = $region20
      $region19: #{tce_forward.1} parent=11 // pred_region
        _
      $region20: #{tce_forward.1} parent=11 // pred_fallthru
        _
    $region12: #{tce_forward.1} parent=5 // pred_fallthru
      _
    %p406 = scmp.lt.s32.totalorder %s19, 4
    // Predicated region
    $region21: #{tce_forward.1} parent=5 // pred_check
      %p407 = pneg %p406
    $region22: #{tce_forward.1} parent=5 // pred_check_branch
      %409 = sbr.rel (%p407) target = $region24
    $region23: #{tce_forward.1} parent=5 // pred_region
      // Predicated region
      $region25: #{tce_forward.1} parent=23 // pred_check
        %p410 = pneg %p51
      $region26: #{tce_forward.1} parent=23 // pred_check_branch
        %412 = sbr.rel (%p410) target = $region28
      $region27: #{tce_forward.1} parent=23 // pred_region
        %p413 = scmp.lt.s32.totalorder %s26, 1
        %s414 = scalar_select %p413, %s26, 1
        %s415 = smul.addr %s414, 4
        %s416 = smul.addr %s415, 8
        %s417 = scalar_lea.vmem %s0, %s416
      $region28: #{tce_forward.1} parent=23 // pred_fallthru
        _
      // Predicated region
      $region29: #{tce_forward.1} parent=23 // pred_check
        %p418 = pneg %p77
      $region30: #{tce_forward.1} parent=23 // pred_check_branch
        %420 = sbr.rel (%p418) target = $region32
      $region31: #{tce_forward.1} parent=23 // pred_region
        %p421 = scmp.lt.s32.totalorder %s27, 1
        %s422 = scalar_select %p421, %s27, 1
        %s423 = smul.addr %s422, 84
        %s424 = smul.addr %s423, 8
        %s425 = scalar_lea.vmem %s1, %s424
      $region32: #{tce_forward.1} parent=23 // pred_fallthru
        _
      // Predicated region
      $region33: #{tce_forward.1} parent=23 // pred_check
        %p426 = pneg %p103
      $region34: #{tce_forward.1} parent=23 // pred_check_branch
        %428 = sbr.rel (%p426) target = $region36
      $region35: #{tce_forward.1} parent=23 // pred_region
        %p429 = scmp.lt.s32.totalorder %s27, 1
        %s430 = scalar_select %p429, %s27, 1
        %s431 = smul.addr %s430, 12
        %s432 = smul.addr %s431, 8
        %s433 = scalar_lea.vmem %s2, %s432
      $region36: #{tce_forward.1} parent=23 // pred_fallthru
        _
      // Predicated region
      $region37: #{tce_forward.1} parent=23 // pred_check
        %p434 = pneg %p129
      $region38: #{tce_forward.1} parent=23 // pred_check_branch
        %436 = sbr.rel (%p434) target = $region40
      $region39: #{tce_forward.1} parent=23 // pred_region
        %p437 = scmp.lt.s32.totalorder %s27, 1
        %s438 = scalar_select %p437, %s27, 1
        %s439 = smul.addr %s438, 13
        %s440 = smul.addr %s439, 8
        %s441 = scalar_lea.vmem %s3, %s440
      $region40: #{tce_forward.1} parent=23 // pred_fallthru
        _
      // Predicated region
      $region41: #{tce_forward.1} parent=23 // pred_check
        %p442 = pneg %p155
      $region42: #{tce_forward.1} parent=23 // pred_check_branch
        %444 = sbr.rel (%p442) target = $region44
      $region43: #{tce_forward.1} parent=23 // pred_region
        %p445 = scmp.lt.s32.totalorder %s27, 1
        %s446 = scalar_select %p445, %s27, 1
        %s447 = scalar_lea.vmem %s4, %s446
      $region44: #{tce_forward.1} parent=23 // pred_fallthru
        _
      // Predicated region
      $region45: #{tce_forward.1} parent=23 // pred_check
        %p448 = pneg %p181
      $region46: #{tce_forward.1} parent=23 // pred_check_branch
        %450 = sbr.rel (%p448) target = $region48
      $region47: #{tce_forward.1} parent=23 // pred_region
        %p451 = scmp.lt.s32.totalorder %s27, 1
        %s452 = scalar_select %p451, %s27, 1
        %s453 = scalar_lea.vmem %s5, %s452
      $region48: #{tce_forward.1} parent=23 // pred_fallthru
        _
      // Predicated region
      $region49: #{tce_forward.1} parent=23 // pred_check
        %p454 = pneg %p207
      $region50: #{tce_forward.1} parent=23 // pred_check_branch
        %456 = sbr.rel (%p454) target = $region52
      $region51: #{tce_forward.1} parent=23 // pred_region
        %p457 = scmp.lt.s32.totalorder %s27, 1
        %s458 = scalar_select %p457, %s27, 1
        %s459 = scalar_lea.vmem %s6, %s458
      $region52: #{tce_forward.1} parent=23 // pred_fallthru
        _
      // Predicated region
      $region53: #{tce_forward.1} parent=23 // pred_check
        %p460 = pneg %p233
      $region54: #{tce_forward.1} parent=23 // pred_check_branch
        %462 = sbr.rel (%p460) target = $region56
      $region55: #{tce_forward.1} parent=23 // pred_region
        %p463 = scmp.lt.s32.totalorder %s27, 1
        %s464 = scalar_select %p463, %s27, 1
        %s465 = smul.addr %s464, 13
        %s466 = smul.addr %s465, 8
        %s467 = scalar_lea.vmem %s7, %s466
      $region56: #{tce_forward.1} parent=23 // pred_fallthru
        _
      // Predicated region
      $region57: #{tce_forward.1} parent=23 // pred_check
        %p468 = pneg %p259
      $region58: #{tce_forward.1} parent=23 // pred_check_branch
        %470 = sbr.rel (%p468) target = $region60
      $region59: #{tce_forward.1} parent=23 // pred_region
        %p471 = scmp.lt.s32.totalorder %s27, 1
        %s472 = scalar_select %p471, %s27, 1
        %s473 = scalar_lea.vmem %s8, %s472
      $region60: #{tce_forward.1} parent=23 // pred_fallthru
        _
      // Predicated region
      $region61: #{tce_forward.1} parent=23 // pred_check
        %p474 = pneg %p285
      $region62: #{tce_forward.1} parent=23 // pred_check_branch
        %476 = sbr.rel (%p474) target = $region64
      $region63: #{tce_forward.1} parent=23 // pred_region
        %p477 = scmp.lt.s32.totalorder %s27, 1
        %s478 = scalar_select %p477, %s27, 1
        %s479 = smul.addr %s478, 15
        %s480 = smul.addr %s479, 8
        %s481 = scalar_lea.vmem %s9, %s480
      $region64: #{tce_forward.1} parent=23 // pred_fallthru
        _
      // Predicated region
      $region65: #{tce_forward.1} parent=23 // pred_check
        %p482 = pneg %p311
      $region66: #{tce_forward.1} parent=23 // pred_check_branch
        %484 = sbr.rel (%p482) target = $region68
      $region67: #{tce_forward.1} parent=23 // pred_region
        %p485 = scmp.lt.s32.totalorder %s27, 1
        %s486 = scalar_select %p485, %s27, 1
        %s487 = scalar_lea.vmem %s10, %s486
      $region68: #{tce_forward.1} parent=23 // pred_fallthru
        _
    $region24: #{tce_forward.1} parent=5 // pred_fallthru
      _
    %p488 = scmp.le.s32.totalorder 1, %s19
    %p489 = scmp.lt.s32.totalorder %s19, 5
    %p490 = pnand %p488, %p489
    %p491 = pneg %p490
    // Predicated region
    $region69: #{tce_forward.1} parent=5 // pred_check
      _
    $region70: #{tce_forward.1} parent=5 // pred_check_branch
      %493 = sbr.rel (%p490) target = $region72
    $region71: #{tce_forward.1} parent=5 // pred_region
      %s494 = ssub.s32 %s19, 1
      %p495 = scmp.lt.s32.totalorder %s28, 1
      %s496 = scalar_select %p495, %s28, 1
      %s497 = smul.addr %s496, 4
      %s498 = smul.addr %s497, 8
      %s499 = scalar_lea.vmem %s0, %s498
      %p500 = pneg %p57
      %p501 = pneg %p54
      %p502 = scmp.lt.s32.totalorder %s29, 1
      %s503 = scalar_select %p502, %s29, 1
      %s504 = smul.addr %s503, 84
      %s505 = smul.addr %s504, 8
      %s506 = scalar_lea.vmem %s1, %s505
      %p507 = pneg %p83
      %p508 = pneg %p80
      %p509 = scmp.lt.s32.totalorder %s29, 1
      %s510 = scalar_select %p509, %s29, 1
      %s511 = smul.addr %s510, 12
      %s512 = smul.addr %s511, 8
      %s513 = scalar_lea.vmem %s2, %s512
      %p514 = pneg %p109
      %p515 = pneg %p106
      %p516 = scmp.lt.s32.totalorder %s29, 1
      %s517 = scalar_select %p516, %s29, 1
      %s518 = smul.addr %s517, 13
      %s519 = smul.addr %s518, 8
      %s520 = scalar_lea.vmem %s3, %s519
      %p521 = pneg %p135
      %p522 = pneg %p132
      %p523 = scmp.lt.s32.totalorder %s29, 1
      %s524 = scalar_select %p523, %s29, 1
      %s525 = scalar_lea.vmem %s4, %s524
      %p526 = pneg %p161
      %p527 = pneg %p158
      %p528 = scmp.lt.s32.totalorder %s29, 1
      %s529 = scalar_select %p528, %s29, 1
      %s530 = scalar_lea.vmem %s5, %s529
      %p531 = pneg %p187
      %p532 = pneg %p184
      %p533 = scmp.lt.s32.totalorder %s29, 1
      %s534 = scalar_select %p533, %s29, 1
      %s535 = scalar_lea.vmem %s6, %s534
      %p536 = pneg %p213
      %p537 = pneg %p210
      %p538 = scmp.lt.s32.totalorder %s29, 1
      %s539 = scalar_select %p538, %s29, 1
      %s540 = smul.addr %s539, 13
      %s541 = smul.addr %s540, 8
      %s542 = scalar_lea.vmem %s7, %s541
      %p543 = pneg %p239
      %p544 = pneg %p236
      %p545 = scmp.lt.s32.totalorder %s29, 1
      %s546 = scalar_select %p545, %s29, 1
      %s547 = scalar_lea.vmem %s8, %s546
      %p548 = pneg %p265
      %p549 = pneg %p262
      %p550 = scmp.lt.s32.totalorder %s29, 1
      %s551 = scalar_select %p550, %s29, 1
      %s552 = smul.addr %s551, 15
      %s553 = smul.addr %s552, 8
      %s554 = scalar_lea.vmem %s9, %s553
      %p555 = pneg %p291
      %p556 = pneg %p288
      %p557 = scmp.lt.s32.totalorder %s29, 1
      %s558 = scalar_select %p557, %s29, 1
      %s559 = scalar_lea.vmem %s10, %s558
      %p560 = pneg %p317
      %p561 = pneg %p314
      %p562 = pneg %p338
      %p563 = pneg %p335
      %p564 = pneg %p359
      %p565 = pneg %p356
      %p566 = pneg %p385
      %p567 = pneg %p382
      %p568 = scmp.lt.s32.totalorder %s28, 1
      %s569 = scalar_select %p568, %s28, 1
      %s570 = smul.addr %s569, 4
      %s571 = smul.addr %s570, 8
      %s572 = scalar_lea.vmem %s13, %s571
      %p573 = scmp.lt.s32.totalorder %s28, 1
      %s574 = scalar_select %p573, %s28, 1
      %s575 = smul.addr %s574, 4
      %s576 = smul.addr %s575, 8
      %s577 = scalar_lea.vmem %s0, %s576
      %p578 = scmp.lt.s32.totalorder %s29, 1
      %s579 = scalar_select %p578, %s29, 1
      %s580 = smul.addr %s579, 84
      %s581 = smul.addr %s580, 8
      %s582 = scalar_lea.vmem %s1, %s581
      %p583 = scmp.lt.s32.totalorder %s29, 1
      %s584 = scalar_select %p583, %s29, 1
      %s585 = smul.addr %s584, 12
      %s586 = smul.addr %s585, 8
      %s587 = scalar_lea.vmem %s2, %s586
      %p588 = scmp.lt.s32.totalorder %s29, 1
      %s589 = scalar_select %p588, %s29, 1
      %s590 = smul.addr %s589, 13
      %s591 = smul.addr %s590, 8
      %s592 = scalar_lea.vmem %s3, %s591
      %p593 = scmp.lt.s32.totalorder %s29, 1
      %s594 = scalar_select %p593, %s29, 1
      %s595 = scalar_lea.vmem %s4, %s594
      %p596 = scmp.lt.s32.totalorder %s29, 1
      %s597 = scalar_select %p596, %s29, 1
      %s598 = scalar_lea.vmem %s5, %s597
      %p599 = scmp.lt.s32.totalorder %s29, 1
      %s600 = scalar_select %p599, %s29, 1
      %s601 = scalar_lea.vmem %s6, %s600
      %p602 = scmp.lt.s32.totalorder %s29, 1
      %s603 = scalar_select %p602, %s29, 1
      %s604 = smul.addr %s603, 13
      %s605 = smul.addr %s604, 8
      %s606 = scalar_lea.vmem %s7, %s605
      %p607 = scmp.lt.s32.totalorder %s29, 1
      %s608 = scalar_select %p607, %s29, 1
      %s609 = scalar_lea.vmem %s8, %s608
      %p610 = scmp.lt.s32.totalorder %s29, 1
      %s611 = scalar_select %p610, %s29, 1
      %s612 = smul.addr %s611, 15
      %s613 = smul.addr %s612, 8
      %s614 = scalar_lea.vmem %s9, %s613
      %p615 = scmp.lt.s32.totalorder %s29, 1
      %s616 = scalar_select %p615, %s29, 1
      %s617 = scalar_lea.vmem %s10, %s616
      %p618 = scmp.lt.s32.totalorder %s28, 1
      %s619 = scalar_select %p618, %s28, 1
      %s620 = smul.addr %s619, 4
      %s621 = smul.addr %s620, 8
      %s622 = scalar_lea.vmem %s13, %s621
      %p623 = scmp.eq.s32.totalorder %s29, 0
      // Predicated region
      $region73: #{tce_forward.1} parent=71 // pred_check
        %p624 = pneg %p623
      $region74: #{tce_forward.1} parent=71 // pred_check_branch
        %626 = sbr.rel (%p624) target = $region76
      $region75: #{tce_forward.1} parent=71 // pred_region
        %v627 = vld [vmem:[%s577] sm:$0xff]
        %v628 = vld [vmem:[%s577 + $0x8] sm:$0xff]
        %v629 = vld [vmem:[%s577 + $0x10] sm:$0xff]
        %v630 = vld [vmem:[%s577 + $0x18] sm:$0x3f]
        %vm631 = vcmask 818176
        %632 = vst.msk [vmem:[#allocation2] sm:$0xff] %vm631, %v627
        %633 = vst.msk [vmem:[#allocation2 + $0x8] sm:$0xff] %vm631, %v628
        %634 = vst.msk [vmem:[#allocation2 + $0x10] sm:$0xff] %vm631, %v629
        %vm635 = vcmask 816128
        %636 = vst.msk [vmem:[#allocation2 + $0x18] sm:$0x3f] %vm635, %v630
      $region76: #{tce_forward.1} parent=71 // pred_fallthru
        _
      %v637 = vld [vmem:[#allocation2] sm:$0xff]
      %v638 = vld [vmem:[#allocation2 + $0x8] sm:$0xff]
      %v639 = vld [vmem:[#allocation2 + $0x10] sm:$0xff]
      %v640 = vld [vmem:[#allocation2 + $0x18] sm:$0x3f]
      %645 = vrot.lane.b32.xlu0 %v637, 6
      %v646 = vpop.permute.xlu0 %645
      %647 = vrot.lane.b32.xlu0 %v638, 6
      %v648 = vpop.permute.xlu0 %647
      %649 = vrot.lane.b32.xlu0 %v639, 6
      %v650 = vpop.permute.xlu0 %649
      %651 = vrot.lane.b32.xlu0 %v640, 6
      %v652 = vpop.permute.xlu0 %651
      %vm657 = vcmask 48128
      %v658 = vsel %vm657, 0.0, %v646
      %v659 = vsel %vm657, 0.0, %v648
      %v660 = vsel %vm657, 0.0, %v650
      %v661 = vsel %vm657, 0.0, %v652
      %v662 = vld [vmem:[%s582] sm:$0xff]
      %v663 = vld [vmem:[%s582 + $0x8] sm:$0xff]
      %v664 = vld [vmem:[%s582 + $0x10] sm:$0xff]
      %v665 = vld [vmem:[%s582 + $0x18] sm:$0xff]
      %v666 = vld [vmem:[%s582 + $0x20] sm:$0xff]
      %v667 = vld [vmem:[%s582 + $0x28] sm:$0xff]
      %v668 = vld [vmem:[%s582 + $0x30] sm:$0xff]
      %v669 = vld [vmem:[%s582 + $0x38] sm:$0xff]
      %v670 = vld [vmem:[%s582 + $0x40] sm:$0xff]
      %v671 = vld [vmem:[%s582 + $0x48] sm:$0xff]
      %v672 = vld [vmem:[%s582 + $0x50] sm:$0xff]
      %v673 = vld [vmem:[%s582 + $0x58] sm:$0x3]
      %s674 = scalar_lea.vmem %s582, 96
      %v675 = vld [vmem:[%s674] sm:$0xff]
      %v676 = vld [vmem:[%s674 + $0x8] sm:$0xff]
      %v677 = vld [vmem:[%s674 + $0x10] sm:$0xff]
      %v678 = vld [vmem:[%s674 + $0x18] sm:$0xff]
      %v679 = vld [vmem:[%s674 + $0x20] sm:$0xff]
      %v680 = vld [vmem:[%s674 + $0x28] sm:$0xff]
      %v681 = vld [vmem:[%s674 + $0x30] sm:$0xff]
      %v682 = vld [vmem:[%s674 + $0x38] sm:$0xff]
      %v683 = vld [vmem:[%s674 + $0x40] sm:$0xff]
      %v684 = vld [vmem:[%s674 + $0x48] sm:$0xff]
      %v685 = vld [vmem:[%s674 + $0x50] sm:$0xff]
      %v686 = vld [vmem:[%s674 + $0x58] sm:$0x3]
      %691 = vrot.lane.b32.xlu0 %v658, 127
      %v692 = vpop.permute.xlu0 %691
      %693 = vrot.lane.b32.xlu0 %v659, 127
      %v694 = vpop.permute.xlu0 %693
      %695 = vrot.lane.b32.xlu0 %v660, 127
      %v696 = vpop.permute.xlu0 %695
      %697 = vrot.lane.b32.xlu0 %v661, 127
      %v698 = vpop.permute.xlu0 %697
      %vm702 = vcmask 244736
      %v704 = vsel %vm702, %v675, 0
      %v707 = vsel %vm702, %v676, 0
      %v710 = vsel %vm702, %v677, 0
      %v713 = vsel %vm702, %v678, 0
      %v716 = vsel %vm702, %v679, 0
      %v719 = vsel %vm702, %v680, 0
      %v722 = vsel %vm702, %v681, 0
      %v725 = vsel %vm702, %v682, 0
      %v728 = vsel %vm702, %v683, 0
      %v731 = vsel %vm702, %v684, 0
      %v734 = vsel %vm702, %v685, 0
      %v737 = vsel %vm702, %v686, 0
      %vm739 = vcmask 1045504
      %v740 = vsel %vm739, %v698, 0
      %742 = vmatprep.subr.mxu0 0.0
      %743 = vmatpush1.msra.mxu0 %v692
      %744 = vmatprep.subr.mxu0 0.0
      %745 = vmatpush1.msra.mxu0 %v694
      %746 = vmatprep.subr.mxu0 0.0
      %747 = vmatpush1.msra.mxu0 %v696
      %748 = vmatprep.subr.mxu0 0.0
      %749 = vmatpush1.msra.mxu0 %v740
      %750 = vmatprep.subr.mxu0 0.0
      %751 = vmatpush1.msra.mxu0 0.0
      %752 = vmatprep.subr.mxu0 0.0
      %753 = vmatpush1.msra.mxu0 0.0
      %754 = vmatprep.subr.mxu0 0.0
      %755 = vmatpush1.msra.mxu0 0.0
      %756 = vmatprep.subr.mxu0 0.0
      %757 = vmatpush1.msra.mxu0 0.0
      %758 = vmatprep.subr.mxu0 0.0
      %759 = vmatpush1.msra.mxu0 0.0
      %760 = vmatprep.subr.mxu0 0.0
      %761 = vmatpush1.msra.mxu0 0.0
      %762 = vmatprep.subr.mxu0 0.0
      %763 = vmatpush1.msra.mxu0 0.0
      %764 = vmatprep.subr.mxu0 0.0
      %765 = vmatpush1.msra.mxu0 0.0
      %766 = vmatprep.subr.mxu0 0.0
      %767 = vmatpush1.msra.mxu0 0.0
      %768 = vmatprep.subr.mxu0 0.0
      %769 = vmatpush1.msra.mxu0 0.0
      %770 = vmatprep.subr.mxu0 0.0
      %771 = vmatpush1.msra.mxu0 0.0
      %772 = vmatprep.subr.mxu0 0.0
      %773 = vmatpush1.msra.mxu0 0.0
      %774 = vmatprep.subr.mxu0 0.0
      %775 = vmatpush1.msra.mxu0 0.0
      %776 = vmatprep.subr.mxu0 0.0
      %777 = vmatpush1.msra.mxu0 0.0
      %778 = vmatprep.subr.mxu0 0.0
      %779 = vmatpush1.msra.mxu0 0.0
      %780 = vmatprep.subr.mxu0 0.0
      %781 = vmatpush1.msra.mxu0 0.0
      %782 = vmatprep.subr.mxu0 0.0
      %783 = vmatpush1.msra.mxu0 0.0
      %784 = vmatprep.subr.mxu0 0.0
      %785 = vmatpush1.msra.mxu0 0.0
      %786 = vmatprep.subr.mxu0 0.0
      %787 = vmatpush1.msra.mxu0 0.0
      %788 = vmatprep.subr.mxu0 0.0
      %789 = vmatpush1.msra.mxu0 0.0
      %790 = vmatprep.subr.mxu0 0.0
      %791 = vmatpush1.msra.mxu0 0.0
      %792 = vmatprep.subr.mxu0 0.0
      %793 = vmatpush1.msra.mxu0 0.0
      %794 = vmatprep.subr.mxu0 0.0
      %795 = vmatpush1.msra.mxu0 0.0
      %796 = vmatprep.subr.mxu0 0.0
      %797 = vmatpush1.msra.mxu0 0.0
      %798 = vmatprep.subr.mxu0 0.0
      %799 = vmatpush1.msra.mxu0 0.0
      %800 = vmatprep.subr.mxu0 0.0
      %801 = vmatpush1.msra.mxu0 0.0
      %802 = vmatprep.subr.mxu0 0.0
      %803 = vmatpush1.msra.mxu0 0.0
      %804 = vmatprep.subr.mxu0 0.0
      %805 = vmatpush1.msra.mxu0 0.0
      %806 = vmatprep.mubr.f32.mxu0 0.0
      %807 = vmatmul.mubr.f32.gmra.mrb[0].mxu0 %v704
      %v808 = vpop.f32.mrb[0].mxu0
      %v809 = vadd.f32 0.0, %v808
      %v810 = vpop.f32.mrb[0].mxu0
      %811 = vmatprep.mubr.f32.mxu0 0.0
      %812 = vmatmul.mubr.f32.gmra.mrb[0].mxu0 %v707
      %v813 = vpop.f32.mrb[0].mxu0
      %v814 = vadd.f32 0.0, %v813
      %v815 = vpop.f32.mrb[0].mxu0
      %816 = vmatprep.mubr.f32.mxu0 0.0
      %817 = vmatmul.mubr.f32.gmra.mrb[0].mxu0 %v710
      %v818 = vpop.f32.mrb[0].mxu0
      %v819 = vadd.f32 0.0, %v818
      %v820 = vpop.f32.mrb[0].mxu0
      %821 = vmatprep.mubr.f32.mxu0 0.0
      %822 = vmatmul.mubr.f32.gmra.mrb[0].mxu0 %v713
      %v823 = vpop.f32.mrb[0].mxu0
      %v824 = vadd.f32 0.0, %v823
      %v825 = vpop.f32.mrb[0].mxu0
      %826 = vmatprep.mubr.f32.mxu0 0.0
      %827 = vmatmul.mubr.f32.gmra.mrb[0].mxu0 %v716
      %v828 = vpop.f32.mrb[0].mxu0
      %v829 = vadd.f32 0.0, %v828
      %v830 = vpop.f32.mrb[0].mxu0
      %831 = vmatprep.mubr.f32.mxu0 0.0
      %832 = vmatmul.mubr.f32.gmra.mrb[0].mxu0 %v719
      %v833 = vpop.f32.mrb[0].mxu0
      %v834 = vadd.f32 0.0, %v833
      %v835 = vpop.f32.mrb[0].mxu0
      %836 = vmatprep.mubr.f32.mxu0 0.0
      %837 = vmatmul.mubr.f32.gmra.mrb[0].mxu0 %v722
      %v838 = vpop.f32.mrb[0].mxu0
      %v839 = vadd.f32 0.0, %v838
      %v840 = vpop.f32.mrb[0].mxu0
      %841 = vmatprep.mubr.f32.mxu0 0.0
      %842 = vmatmul.mubr.f32.gmra.mrb[0].mxu0 %v725
      %v843 = vpop.f32.mrb[0].mxu0
      %v844 = vadd.f32 0.0, %v843
      %v845 = vpop.f32.mrb[0].mxu0
      %846 = vmatprep.mubr.f32.mxu0 0.0
      %847 = vmatmul.mubr.f32.gmra.mrb[0].mxu0 %v728
      %v848 = vpop.f32.mrb[0].mxu0
      %v849 = vadd.f32 0.0, %v848
      %v850 = vpop.f32.mrb[0].mxu0
      %851 = vmatprep.mubr.f32.mxu0 0.0
      %852 = vmatmul.mubr.f32.gmra.mrb[0].mxu0 %v731
      %v853 = vpop.f32.mrb[0].mxu0
      %v854 = vadd.f32 0.0, %v853
      %v855 = vpop.f32.mrb[0].mxu0
      %856 = vmatprep.mubr.f32.mxu0 0.0
      %857 = vmatmul.mubr.f32.gmra.mrb[0].mxu0 %v734
      %v858 = vpop.f32.mrb[0].mxu0
      %v859 = vadd.f32 0.0, %v858
      %v860 = vpop.f32.mrb[0].mxu0
      %861 = vmatprep.mubr.f32.mxu0 0.0
      %862 = vmatmul.mubr.f32.gmra.mrb[0].mxu0 %v737
      %v863 = vpop.f32.mrb[0].mxu0
      %v864 = vadd.f32 0.0, %v863
      %v865 = vpop.f32.mrb[0].mxu0
      %866 = vdwg.mxu0
      %v868 = vsel %vm702, %v662, 0
      %v871 = vsel %vm702, %v663, 0
      %v874 = vsel %vm702, %v664, 0
      %v877 = vsel %vm702, %v665, 0
      %v880 = vsel %vm702, %v666, 0
      %v883 = vsel %vm702, %v667, 0
      %v886 = vsel %vm702, %v668, 0
      %v889 = vsel %vm702, %v669, 0
      %v892 = vsel %vm702, %v670, 0
      %v895 = vsel %vm702, %v671, 0
      %v898 = vsel %vm702, %v672, 0
      %v901 = vsel %vm702, %v673, 0
      %v903 = vsel %vm739, %v661, 0
      %905 = vmatprep.subr.mxu0 0.0
      %906 = vmatpush1.msra.mxu0 %v658
      %907 = vmatprep.subr.mxu0 0.0
      %908 = vmatpush1.msra.mxu0 %v659
      %909 = vmatprep.subr.mxu0 0.0
      %910 = vmatpush1.msra.mxu0 %v660
      %911 = vmatprep.subr.mxu0 0.0
      %912 = vmatpush1.msra.mxu0 %v903
      %913 = vmatprep.subr.mxu0 0.0
      %914 = vmatpush1.msra.mxu0 0.0
      %915 = vmatprep.subr.mxu0 0.0
      %916 = vmatpush1.msra.mxu0 0.0
      %917 = vmatprep.subr.mxu0 0.0
      %918 = vmatpush1.msra.mxu0 0.0
      %919 = vmatprep.subr.mxu0 0.0
      %920 = vmatpush1.msra.mxu0 0.0
      %921 = vmatprep.subr.mxu0 0.0
      %922 = vmatpush1.msra.mxu0 0.0
      %923 = vmatprep.subr.mxu0 0.0
      %924 = vmatpush1.msra.mxu0 0.0
      %925 = vmatprep.subr.mxu0 0.0
      %926 = vmatpush1.msra.mxu0 0.0
      %927 = vmatprep.subr.mxu0 0.0
      %928 = vmatpush1.msra.mxu0 0.0
      %929 = vmatprep.subr.mxu0 0.0
      %930 = vmatpush1.msra.mxu0 0.0
      %931 = vmatprep.subr.mxu0 0.0
      %932 = vmatpush1.msra.mxu0 0.0
      %933 = vmatprep.subr.mxu0 0.0
      %934 = vmatpush1.msra.mxu0 0.0
      %935 = vmatprep.subr.mxu0 0.0
      %936 = vmatpush1.msra.mxu0 0.0
      %937 = vmatprep.subr.mxu0 0.0
      %938 = vmatpush1.msra.mxu0 0.0
      %939 = vmatprep.subr.mxu0 0.0
      %940 = vmatpush1.msra.mxu0 0.0
      %941 = vmatprep.subr.mxu0 0.0
      %942 = vmatpush1.msra.mxu0 0.0
      %943 = vmatprep.subr.mxu0 0.0
      %944 = vmatpush1.msra.mxu0 0.0
      %945 = vmatprep.subr.mxu0 0.0
      %946 = vmatpush1.msra.mxu0 0.0
      %947 = vmatprep.subr.mxu0 0.0
      %948 = vmatpush1.msra.mxu0 0.0
      %949 = vmatprep.subr.mxu0 0.0
      %950 = vmatpush1.msra.mxu0 0.0
      %951 = vmatprep.subr.mxu0 0.0
      %952 = vmatpush1.msra.mxu0 0.0
      %953 = vmatprep.subr.mxu0 0.0
      %954 = vmatpush1.msra.mxu0 0.0
      %955 = vmatprep.subr.mxu0 0.0
      %956 = vmatpush1.msra.mxu0 0.0
      %957 = vmatprep.subr.mxu0 0.0
      %958 = vmatpush1.msra.mxu0 0.0
      %959 = vmatprep.subr.mxu0 0.0
      %960 = vmatpush1.msra.mxu0 0.0
      %961 = vmatprep.subr.mxu0 0.0
      %962 = vmatpush1.msra.mxu0 0.0
      %963 = vmatprep.subr.mxu0 0.0
      %964 = vmatpush1.msra.mxu0 0.0
      %965 = vmatprep.subr.mxu0 0.0
      %966 = vmatpush1.msra.mxu0 0.0
      %967 = vmatprep.subr.mxu0 0.0
      %968 = vmatpush1.msra.mxu0 0.0
      %969 = vmatprep.mubr.f32.mxu0 0.0
      %970 = vmatmul.mubr.f32.gmra.mrb[0].mxu0 %v868
      %v971 = vpop.f32.mrb[0].mxu0
      %v972 = vadd.f32 %v809, %v971
      %v973 = vpop.f32.mrb[0].mxu0
      %974 = vmatprep.mubr.f32.mxu0 0.0
      %975 = vmatmul.mubr.f32.gmra.mrb[0].mxu0 %v871
      %v976 = vpop.f32.mrb[0].mxu0
      %v977 = vadd.f32 %v814, %v976
      %v978 = vpop.f32.mrb[0].mxu0
      %979 = vmatprep.mubr.f32.mxu0 0.0
      %980 = vmatmul.mubr.f32.gmra.mrb[0].mxu0 %v874
      %v981 = vpop.f32.mrb[0].mxu0
      %v982 = vadd.f32 %v819, %v981
      %v983 = vpop.f32.mrb[0].mxu0
      %984 = vmatprep.mubr.f32.mxu0 0.0
      %985 = vmatmul.mubr.f32.gmra.mrb[0].mxu0 %v877
      %v986 = vpop.f32.mrb[0].mxu0
      %v987 = vadd.f32 %v824, %v986
      %v988 = vpop.f32.mrb[0].mxu0
      %989 = vmatprep.mubr.f32.mxu0 0.0
      %990 = vmatmul.mubr.f32.gmra.mrb[0].mxu0 %v880
      %v991 = vpop.f32.mrb[0].mxu0
      %v992 = vadd.f32 %v829, %v991
      %v993 = vpop.f32.mrb[0].mxu0
      %994 = vmatprep.mubr.f32.mxu0 0.0
      %995 = vmatmul.mubr.f32.gmra.mrb[0].mxu0 %v883
      %v996 = vpop.f32.mrb[0].mxu0
      %v997 = vadd.f32 %v834, %v996
      %v998 = vpop.f32.mrb[0].mxu0
      %999 = vmatprep.mubr.f32.mxu0 0.0
      %1000 = vmatmul.mubr.f32.gmra.mrb[0].mxu0 %v886
      %v1001 = vpop.f32.mrb[0].mxu0
      %v1002 = vadd.f32 %v839, %v1001
      %v1003 = vpop.f32.mrb[0].mxu0
      %1004 = vmatprep.mubr.f32.mxu0 0.0
      %1005 = vmatmul.mubr.f32.gmra.mrb[0].mxu0 %v889
      %v1006 = vpop.f32.mrb[0].mxu0
      %v1007 = vadd.f32 %v844, %v1006
      %v1008 = vpop.f32.mrb[0].mxu0
      %1009 = vmatprep.mubr.f32.mxu0 0.0
      %1010 = vmatmul.mubr.f32.gmra.mrb[0].mxu0 %v892
      %v1011 = vpop.f32.mrb[0].mxu0
      %v1012 = vadd.f32 %v849, %v1011
      %v1013 = vpop.f32.mrb[0].mxu0
      %1014 = vmatprep.mubr.f32.mxu0 0.0
      %1015 = vmatmul.mubr.f32.gmra.mrb[0].mxu0 %v895
      %v1016 = vpop.f32.mrb[0].mxu0
      %v1017 = vadd.f32 %v854, %v1016
      %v1018 = vpop.f32.mrb[0].mxu0
      %1019 = vmatprep.mubr.f32.mxu0 0.0
      %1020 = vmatmul.mubr.f32.gmra.mrb[0].mxu0 %v898
      %v1021 = vpop.f32.mrb[0].mxu0
      %v1022 = vadd.f32 %v859, %v1021
      %v1023 = vpop.f32.mrb[0].mxu0
      %1024 = vmatprep.mubr.f32.mxu0 0.0
      %1025 = vmatmul.mubr.f32.gmra.mrb[0].mxu0 %v901
      %v1026 = vpop.f32.mrb[0].mxu0
      %v1027 = vadd.f32 %v864, %v1026
      %v1028 = vpop.f32.mrb[0].mxu0
      %1029 = vdwg.mxu0
      %s1030 = scalar_lea.vmem %s582, 192
      %v1031 = vld [vmem:[%s1030] sm:$0xff]
      %v1032 = vld [vmem:[%s1030 + $0x8] sm:$0xff]
      %v1033 = vld [vmem:[%s1030 + $0x10] sm:$0xff]
      %v1034 = vld [vmem:[%s1030 + $0x18] sm:$0xff]
      %v1035 = vld [vmem:[%s1030 + $0x20] sm:$0xff]
      %v1036 = vld [vmem:[%s1030 + $0x28] sm:$0xff]
      %v1037 = vld [vmem:[%s1030 + $0x30] sm:$0xff]
      %v1038 = vld [vmem:[%s1030 + $0x38] sm:$0xff]
      %v1039 = vld [vmem:[%s1030 + $0x40] sm:$0xff]
      %v1040 = vld [vmem:[%s1030 + $0x48] sm:$0xff]
      %v1041 = vld [vmem:[%s1030 + $0x50] sm:$0xff]
      %v1042 = vld [vmem:[%s1030 + $0x58] sm:$0x3]
      %1043 = vrot.lane.b32.xlu0 %v658, 126
      %v1044 = vpop.permute.xlu0 %1043
      %1045 = vrot.lane.b32.xlu0 %v659, 126
      %v1046 = vpop.permute.xlu0 %1045
      %1047 = vrot.lane.b32.xlu0 %v660, 126
      %v1048 = vpop.permute.xlu0 %1047
      %1049 = vrot.lane.b32.xlu0 %v661, 126
      %v1050 = vpop.permute.xlu0 %1049
      %v1055 = vsel %vm702, %v1031, 0
      %v1058 = vsel %vm702, %v1032, 0
      %v1061 = vsel %vm702, %v1033, 0
      %v1064 = vsel %vm702, %v1034, 0
      %v1067 = vsel %vm702, %v1035, 0
      %v1070 = vsel %vm702, %v1036, 0
      %v1073 = vsel %vm702, %v1037, 0
      %v1076 = vsel %vm702, %v1038, 0
      %v1079 = vsel %vm702, %v1039, 0
      %v1082 = vsel %vm702, %v1040, 0
      %v1085 = vsel %vm702, %v1041, 0
      %v1088 = vsel %vm702, %v1042, 0
      %v1090 = vsel %vm739, %v1050, 0
      %1092 = vmatprep.subr.mxu0 0.0
      %1093 = vmatpush1.msra.mxu0 %v1044
      %1094 = vmatprep.subr.mxu0 0.0
      %1095 = vmatpush1.msra.mxu0 %v1046
      %1096 = vmatprep.subr.mxu0 0.0
      %1097 = vmatpush1.msra.mxu0 %v1048
      %1098 = vmatprep.subr.mxu0 0.0
      %1099 = vmatpush1.msra.mxu0 %v1090
      %1100 = vmatprep.subr.mxu0 0.0
      %1101 = vmatpush1.msra.mxu0 0.0
      %1102 = vmatprep.subr.mxu0 0.0
      %1103 = vmatpush1.msra.mxu0 0.0
      %1104 = vmatprep.subr.mxu0 0.0
      %1105 = vmatpush1.msra.mxu0 0.0
      %1106 = vmatprep.subr.mxu0 0.0
      %1107 = vmatpush1.msra.mxu0 0.0
      %1108 = vmatprep.subr.mxu0 0.0
      %1109 = vmatpush1.msra.mxu0 0.0
      %1110 = vmatprep.subr.mxu0 0.0
      %1111 = vmatpush1.msra.mxu0 0.0
      %1112 = vmatprep.subr.mxu0 0.0
      %1113 = vmatpush1.msra.mxu0 0.0
      %1114 = vmatprep.subr.mxu0 0.0
      %1115 = vmatpush1.msra.mxu0 0.0
      %1116 = vmatprep.subr.mxu0 0.0
      %1117 = vmatpush1.msra.mxu0 0.0
      %1118 = vmatprep.subr.mxu0 0.0
      %1119 = vmatpush1.msra.mxu0 0.0
      %1120 = vmatprep.subr.mxu0 0.0
      %1121 = vmatpush1.msra.mxu0 0.0
      %1122 = vmatprep.subr.mxu0 0.0
      %1123 = vmatpush1.msra.mxu0 0.0
      %1124 = vmatprep.subr.mxu0 0.0
      %1125 = vmatpush1.msra.mxu0 0.0
      %1126 = vmatprep.subr.mxu0 0.0
      %1127 = vmatpush1.msra.mxu0 0.0
      %1128 = vmatprep.subr.mxu0 0.0
      %1129 = vmatpush1.msra.mxu0 0.0
      %1130 = vmatprep.subr.mxu0 0.0
      %1131 = vmatpush1.msra.mxu0 0.0
      %1132 = vmatprep.subr.mxu0 0.0
      %1133 = vmatpush1.msra.mxu0 0.0
      %1134 = vmatprep.subr.mxu0 0.0
      %1135 = vmatpush1.msra.mxu0 0.0
      %1136 = vmatprep.subr.mxu0 0.0
      %1137 = vmatpush1.msra.mxu0 0.0
      %1138 = vmatprep.subr.mxu0 0.0
      %1139 = vmatpush1.msra.mxu0 0.0
      %1140 = vmatprep.subr.mxu0 0.0
      %1141 = vmatpush1.msra.mxu0 0.0
      %1142 = vmatprep.subr.mxu0 0.0
      %1143 = vmatpush1.msra.mxu0 0.0
      %1144 = vmatprep.subr.mxu0 0.0
      %1145 = vmatpush1.msra.mxu0 0.0
      %1146 = vmatprep.subr.mxu0 0.0
      %1147 = vmatpush1.msra.mxu0 0.0
      %1148 = vmatprep.subr.mxu0 0.0
      %1149 = vmatpush1.msra.mxu0 0.0
      %1150 = vmatprep.subr.mxu0 0.0
      %1151 = vmatpush1.msra.mxu0 0.0
      %1152 = vmatprep.subr.mxu0 0.0
      %1153 = vmatpush1.msra.mxu0 0.0
      %1154 = vmatprep.subr.mxu0 0.0
      %1155 = vmatpush1.msra.mxu0 0.0
      %1156 = vmatprep.mubr.f32.mxu0 0.0
      %1157 = vmatmul.mubr.f32.gmra.mrb[0].mxu0 %v1055
      %v1158 = vpop.f32.mrb[0].mxu0
      %v1159 = vadd.f32 0.0, %v1158
      %v1160 = vpop.f32.mrb[0].mxu0
      %1161 = vmatprep.mubr.f32.mxu0 0.0
      %1162 = vmatmul.mubr.f32.gmra.mrb[0].mxu0 %v1058
      %v1163 = vpop.f32.mrb[0].mxu0
      %v1164 = vadd.f32 0.0, %v1163
      %v1165 = vpop.f32.mrb[0].mxu0
      %1166 = vmatprep.mubr.f32.mxu0 0.0
      %1167 = vmatmul.mubr.f32.gmra.mrb[0].mxu0 %v1061
      %v1168 = vpop.f32.mrb[0].mxu0
      %v1169 = vadd.f32 0.0, %v1168
      %v1170 = vpop.f32.mrb[0].mxu0
      %1171 = vmatprep.mubr.f32.mxu0 0.0
      %1172 = vmatmul.mubr.f32.gmra.mrb[0].mxu0 %v1064
      %v1173 = vpop.f32.mrb[0].mxu0
      %v1174 = vadd.f32 0.0, %v1173
      %v1175 = vpop.f32.mrb[0].mxu0
      %1176 = vmatprep.mubr.f32.mxu0 0.0
      %1177 = vmatmul.mubr.f32.gmra.mrb[0].mxu0 %v1067
      %v1178 = vpop.f32.mrb[0].mxu0
      %v1179 = vadd.f32 0.0, %v1178
      %v1180 = vpop.f32.mrb[0].mxu0
      %1181 = vmatprep.mubr.f32.mxu0 0.0
      %1182 = vmatmul.mubr.f32.gmra.mrb[0].mxu0 %v1070
      %v1183 = vpop.f32.mrb[0].mxu0
      %v1184 = vadd.f32 0.0, %v1183
      %v1185 = vpop.f32.mrb[0].mxu0
      %1186 = vmatprep.mubr.f32.mxu0 0.0
      %1187 = vmatmul.mubr.f32.gmra.mrb[0].mxu0 %v1073
      %v1188 = vpop.f32.mrb[0].mxu0
      %v1189 = vadd.f32 0.0, %v1188
      %v1190 = vpop.f32.mrb[0].mxu0
      %1191 = vmatprep.mubr.f32.mxu0 0.0
      %1192 = vmatmul.mubr.f32.gmra.mrb[0].mxu0 %v1076
      %v1193 = vpop.f32.mrb[0].mxu0
      %v1194 = vadd.f32 0.0, %v1193
      %v1195 = vpop.f32.mrb[0].mxu0
      %1196 = vmatprep.mubr.f32.mxu0 0.0
      %1197 = vmatmul.mubr.f32.gmra.mrb[0].mxu0 %v1079
      %v1198 = vpop.f32.mrb[0].mxu0
      %v1199 = vadd.f32 0.0, %v1198
      %v1200 = vpop.f32.mrb[0].mxu0
      %1201 = vmatprep.mubr.f32.mxu0 0.0
      %1202 = vmatmul.mubr.f32.gmra.mrb[0].mxu0 %v1082
      %v1203 = vpop.f32.mrb[0].mxu0
      %v1204 = vadd.f32 0.0, %v1203
      %v1205 = vpop.f32.mrb[0].mxu0
      %1206 = vmatprep.mubr.f32.mxu0 0.0
      %1207 = vmatmul.mubr.f32.gmra.mrb[0].mxu0 %v1085
      %v1208 = vpop.f32.mrb[0].mxu0
      %v1209 = vadd.f32 0.0, %v1208
      %v1210 = vpop.f32.mrb[0].mxu0
      %1211 = vmatprep.mubr.f32.mxu0 0.0
      %1212 = vmatmul.mubr.f32.gmra.mrb[0].mxu0 %v1088
      %v1213 = vpop.f32.mrb[0].mxu0
      %v1214 = vadd.f32 0.0, %v1213
      %v1215 = vpop.f32.mrb[0].mxu0
      %1216 = vdwg.mxu0
      %v1217 = vadd.f32 %v972, %v1159
      %v1218 = vadd.f32 %v977, %v1164
      %v1219 = vadd.f32 %v982, %v1169
      %v1220 = vadd.f32 %v987, %v1174
      %v1221 = vadd.f32 %v992, %v1179
      %v1222 = vadd.f32 %v997, %v1184
      %v1223 = vadd.f32 %v1002, %v1189
      %v1224 = vadd.f32 %v1007, %v1194
      %v1225 = vadd.f32 %v1012, %v1199
      %v1226 = vadd.f32 %v1017, %v1204
      %v1227 = vadd.f32 %v1022, %v1209
      %v1228 = vadd.f32 %v1027, %v1214
      %s1229 = scalar_lea.vmem %s582, 288
      %v1230 = vld [vmem:[%s1229] sm:$0xff]
      %v1231 = vld [vmem:[%s1229 + $0x8] sm:$0xff]
      %v1232 = vld [vmem:[%s1229 + $0x10] sm:$0xff]
      %v1233 = vld [vmem:[%s1229 + $0x18] sm:$0xff]
      %v1234 = vld [vmem:[%s1229 + $0x20] sm:$0xff]
      %v1235 = vld [vmem:[%s1229 + $0x28] sm:$0xff]
      %v1236 = vld [vmem:[%s1229 + $0x30] sm:$0xff]
      %v1237 = vld [vmem:[%s1229 + $0x38] sm:$0xff]
      %v1238 = vld [vmem:[%s1229 + $0x40] sm:$0xff]
      %v1239 = vld [vmem:[%s1229 + $0x48] sm:$0xff]
      %v1240 = vld [vmem:[%s1229 + $0x50] sm:$0xff]
      %v1241 = vld [vmem:[%s1229 + $0x58] sm:$0x3]
      %1242 = vrot.lane.b32.xlu0 %v658, 125
      %v1243 = vpop.permute.xlu0 %1242
      %1244 = vrot.lane.b32.xlu0 %v659, 125
      %v1245 = vpop.permute.xlu0 %1244
      %1246 = vrot.lane.b32.xlu0 %v660, 125
      %v1247 = vpop.permute.xlu0 %1246
      %1248 = vrot.lane.b32.xlu0 %v661, 125
      %v1249 = vpop.permute.xlu0 %1248
      %v1254 = vsel %vm702, %v1230, 0
      %v1257 = vsel %vm702, %v1231, 0
      %v1260 = vsel %vm702, %v1232, 0
      %v1263 = vsel %vm702, %v1233, 0
      %v1266 = vsel %vm702, %v1234, 0
      %v1269 = vsel %vm702, %v1235, 0
      %v1272 = vsel %vm702, %v1236, 0
      %v1275 = vsel %vm702, %v1237, 0
      %v1278 = vsel %vm702, %v1238, 0
      %v1281 = vsel %vm702, %v1239, 0
      %v1284 = vsel %vm702, %v1240, 0
      %v1287 = vsel %vm702, %v1241, 0
      %v1289 = vsel %vm739, %v1249, 0
      %1291 = vmatprep.subr.mxu0 0.0
      %1292 = vmatpush1.msra.mxu0 %v1243
      %1293 = vmatprep.subr.mxu0 0.0
      %1294 = vmatpush1.msra.mxu0 %v1245
      %1295 = vmatprep.subr.mxu0 0.0
      %1296 = vmatpush1.msra.mxu0 %v1247
      %1297 = vmatprep.subr.mxu0 0.0
      %1298 = vmatpush1.msra.mxu0 %v1289
      %1299 = vmatprep.subr.mxu0 0.0
      %1300 = vmatpush1.msra.mxu0 0.0
      %1301 = vmatprep.subr.mxu0 0.0
      %1302 = vmatpush1.msra.mxu0 0.0
      %1303 = vmatprep.subr.mxu0 0.0
      %1304 = vmatpush1.msra.mxu0 0.0
      %1305 = vmatprep.subr.mxu0 0.0
      %1306 = vmatpush1.msra.mxu0 0.0
      %1307 = vmatprep.subr.mxu0 0.0
      %1308 = vmatpush1.msra.mxu0 0.0
      %1309 = vmatprep.subr.mxu0 0.0
      %1310 = vmatpush1.msra.mxu0 0.0
      %1311 = vmatprep.subr.mxu0 0.0
      %1312 = vmatpush1.msra.mxu0 0.0
      %1313 = vmatprep.subr.mxu0 0.0
      %1314 = vmatpush1.msra.mxu0 0.0
      %1315 = vmatprep.subr.mxu0 0.0
      %1316 = vmatpush1.msra.mxu0 0.0
      %1317 = vmatprep.subr.mxu0 0.0
      %1318 = vmatpush1.msra.mxu0 0.0
      %1319 = vmatprep.subr.mxu0 0.0
      %1320 = vmatpush1.msra.mxu0 0.0
      %1321 = vmatprep.subr.mxu0 0.0
      %1322 = vmatpush1.msra.mxu0 0.0
      %1323 = vmatprep.subr.mxu0 0.0
      %1324 = vmatpush1.msra.mxu0 0.0
      %1325 = vmatprep.subr.mxu0 0.0
      %1326 = vmatpush1.msra.mxu0 0.0
      %1327 = vmatprep.subr.mxu0 0.0
      %1328 = vmatpush1.msra.mxu0 0.0
      %1329 = vmatprep.subr.mxu0 0.0
      %1330 = vmatpush1.msra.mxu0 0.0
      %1331 = vmatprep.subr.mxu0 0.0
      %1332 = vmatpush1.msra.mxu0 0.0
      %1333 = vmatprep.subr.mxu0 0.0
      %1334 = vmatpush1.msra.mxu0 0.0
      %1335 = vmatprep.subr.mxu0 0.0
      %1336 = vmatpush1.msra.mxu0 0.0
      %1337 = vmatprep.subr.mxu0 0.0
      %1338 = vmatpush1.msra.mxu0 0.0
      %1339 = vmatprep.subr.mxu0 0.0
      %1340 = vmatpush1.msra.mxu0 0.0
      %1341 = vmatprep.subr.mxu0 0.0
      %1342 = vmatpush1.msra.mxu0 0.0
      %1343 = vmatprep.subr.mxu0 0.0
      %1344 = vmatpush1.msra.mxu0 0.0
      %1345 = vmatprep.subr.mxu0 0.0
      %1346 = vmatpush1.msra.mxu0 0.0
      %1347 = vmatprep.subr.mxu0 0.0
      %1348 = vmatpush1.msra.mxu0 0.0
      %1349 = vmatprep.subr.mxu0 0.0
      %1350 = vmatpush1.msra.mxu0 0.0
      %1351 = vmatprep.subr.mxu0 0.0
      %1352 = vmatpush1.msra.mxu0 0.0
      %1353 = vmatprep.subr.mxu0 0.0
      %1354 = vmatpush1.msra.mxu0 0.0
      %1355 = vmatprep.mubr.f32.mxu0 0.0
      %1356 = vmatmul.mubr.f32.gmra.mrb[0].mxu0 %v1254
      %v1357 = vpop.f32.mrb[0].mxu0
      %v1358 = vadd.f32 0.0, %v1357
      %v1359 = vpop.f32.mrb[0].mxu0
      %1360 = vmatprep.mubr.f32.mxu0 0.0
      %1361 = vmatmul.mubr.f32.gmra.mrb[0].mxu0 %v1257
      %v1362 = vpop.f32.mrb[0].mxu0
      %v1363 = vadd.f32 0.0, %v1362
      %v1364 = vpop.f32.mrb[0].mxu0
      %1365 = vmatprep.mubr.f32.mxu0 0.0
      %1366 = vmatmul.mubr.f32.gmra.mrb[0].mxu0 %v1260
      %v1367 = vpop.f32.mrb[0].mxu0
      %v1368 = vadd.f32 0.0, %v1367
      %v1369 = vpop.f32.mrb[0].mxu0
      %1370 = vmatprep.mubr.f32.mxu0 0.0
      %1371 = vmatmul.mubr.f32.gmra.mrb[0].mxu0 %v1263
      %v1372 = vpop.f32.mrb[0].mxu0
      %v1373 = vadd.f32 0.0, %v1372
      %v1374 = vpop.f32.mrb[0].mxu0
      %1375 = vmatprep.mubr.f32.mxu0 0.0
      %1376 = vmatmul.mubr.f32.gmra.mrb[0].mxu0 %v1266
      %v1377 = vpop.f32.mrb[0].mxu0
      %v1378 = vadd.f32 0.0, %v1377
      %v1379 = vpop.f32.mrb[0].mxu0
      %1380 = vmatprep.mubr.f32.mxu0 0.0
      %1381 = vmatmul.mubr.f32.gmra.mrb[0].mxu0 %v1269
      %v1382 = vpop.f32.mrb[0].mxu0
      %v1383 = vadd.f32 0.0, %v1382
      %v1384 = vpop.f32.mrb[0].mxu0
      %1385 = vmatprep.mubr.f32.mxu0 0.0
      %1386 = vmatmul.mubr.f32.gmra.mrb[0].mxu0 %v1272
      %v1387 = vpop.f32.mrb[0].mxu0
      %v1388 = vadd.f32 0.0, %v1387
      %v1389 = vpop.f32.mrb[0].mxu0
      %1390 = vmatprep.mubr.f32.mxu0 0.0
      %1391 = vmatmul.mubr.f32.gmra.mrb[0].mxu0 %v1275
      %v1392 = vpop.f32.mrb[0].mxu0
      %v1393 = vadd.f32 0.0, %v1392
      %v1394 = vpop.f32.mrb[0].mxu0
      %1395 = vmatprep.mubr.f32.mxu0 0.0
      %1396 = vmatmul.mubr.f32.gmra.mrb[0].mxu0 %v1278
      %v1397 = vpop.f32.mrb[0].mxu0
      %v1398 = vadd.f32 0.0, %v1397
      %v1399 = vpop.f32.mrb[0].mxu0
      %1400 = vmatprep.mubr.f32.mxu0 0.0
      %1401 = vmatmul.mubr.f32.gmra.mrb[0].mxu0 %v1281
      %v1402 = vpop.f32.mrb[0].mxu0
      %v1403 = vadd.f32 0.0, %v1402
      %v1404 = vpop.f32.mrb[0].mxu0
      %1405 = vmatprep.mubr.f32.mxu0 0.0
      %1406 = vmatmul.mubr.f32.gmra.mrb[0].mxu0 %v1284
      %v1407 = vpop.f32.mrb[0].mxu0
      %v1408 = vadd.f32 0.0, %v1407
      %v1409 = vpop.f32.mrb[0].mxu0
      %1410 = vmatprep.mubr.f32.mxu0 0.0
      %1411 = vmatmul.mubr.f32.gmra.mrb[0].mxu0 %v1287
      %v1412 = vpop.f32.mrb[0].mxu0
      %v1413 = vadd.f32 0.0, %v1412
      %v1414 = vpop.f32.mrb[0].mxu0
      %1415 = vdwg.mxu0
      %v1416 = vadd.f32 %v1217, %v1358
      %v1417 = vadd.f32 %v1218, %v1363
      %v1418 = vadd.f32 %v1219, %v1368
      %v1419 = vadd.f32 %v1220, %v1373
      %v1420 = vadd.f32 %v1221, %v1378
      %v1421 = vadd.f32 %v1222, %v1383
      %v1422 = vadd.f32 %v1223, %v1388
      %v1423 = vadd.f32 %v1224, %v1393
      %v1424 = vadd.f32 %v1225, %v1398
      %v1425 = vadd.f32 %v1226, %v1403
      %v1426 = vadd.f32 %v1227, %v1408
      %v1427 = vadd.f32 %v1228, %v1413
      %s1428 = scalar_lea.vmem %s582, 384
      %v1429 = vld [vmem:[%s1428] sm:$0xff]
      %v1430 = vld [vmem:[%s1428 + $0x8] sm:$0xff]
      %v1431 = vld [vmem:[%s1428 + $0x10] sm:$0xff]
      %v1432 = vld [vmem:[%s1428 + $0x18] sm:$0xff]
      %v1433 = vld [vmem:[%s1428 + $0x20] sm:$0xff]
      %v1434 = vld [vmem:[%s1428 + $0x28] sm:$0xff]
      %v1435 = vld [vmem:[%s1428 + $0x30] sm:$0xff]
      %v1436 = vld [vmem:[%s1428 + $0x38] sm:$0xff]
      %v1437 = vld [vmem:[%s1428 + $0x40] sm:$0xff]
      %v1438 = vld [vmem:[%s1428 + $0x48] sm:$0xff]
      %v1439 = vld [vmem:[%s1428 + $0x50] sm:$0xff]
      %v1440 = vld [vmem:[%s1428 + $0x58] sm:$0x3]
      %1441 = vrot.lane.b32.xlu0 %v658, 124
      %v1442 = vpop.permute.xlu0 %1441
      %1443 = vrot.lane.b32.xlu0 %v659, 124
      %v1444 = vpop.permute.xlu0 %1443
      %1445 = vrot.lane.b32.xlu0 %v660, 124
      %v1446 = vpop.permute.xlu0 %1445
      %1447 = vrot.lane.b32.xlu0 %v661, 124
      %v1448 = vpop.permute.xlu0 %1447
      %v1453 = vsel %vm702, %v1429, 0
      %v1456 = vsel %vm702, %v1430, 0
      %v1459 = vsel %vm702, %v1431, 0
      %v1462 = vsel %vm702, %v1432, 0
      %v1465 = vsel %vm702, %v1433, 0
      %v1468 = vsel %vm702, %v1434, 0
      %v1471 = vsel %vm702, %v1435, 0
      %v1474 = vsel %vm702, %v1436, 0
      %v1477 = vsel %vm702, %v1437, 0
      %v1480 = vsel %vm702, %v1438, 0
      %v1483 = vsel %vm702, %v1439, 0
      %v1486 = vsel %vm702, %v1440, 0
      %v1488 = vsel %vm739, %v1448, 0
      %1490 = vmatprep.subr.mxu0 0.0
      %1491 = vmatpush1.msra.mxu0 %v1442
      %1492 = vmatprep.subr.mxu0 0.0
      %1493 = vmatpush1.msra.mxu0 %v1444
      %1494 = vmatprep.subr.mxu0 0.0
      %1495 = vmatpush1.msra.mxu0 %v1446
      %1496 = vmatprep.subr.mxu0 0.0
      %1497 = vmatpush1.msra.mxu0 %v1488
      %1498 = vmatprep.subr.mxu0 0.0
      %1499 = vmatpush1.msra.mxu0 0.0
      %1500 = vmatprep.subr.mxu0 0.0
      %1501 = vmatpush1.msra.mxu0 0.0
      %1502 = vmatprep.subr.mxu0 0.0
      %1503 = vmatpush1.msra.mxu0 0.0
      %1504 = vmatprep.subr.mxu0 0.0
      %1505 = vmatpush1.msra.mxu0 0.0
      %1506 = vmatprep.subr.mxu0 0.0
      %1507 = vmatpush1.msra.mxu0 0.0
      %1508 = vmatprep.subr.mxu0 0.0
      %1509 = vmatpush1.msra.mxu0 0.0
      %1510 = vmatprep.subr.mxu0 0.0
      %1511 = vmatpush1.msra.mxu0 0.0
      %1512 = vmatprep.subr.mxu0 0.0
      %1513 = vmatpush1.msra.mxu0 0.0
      %1514 = vmatprep.subr.mxu0 0.0
      %1515 = vmatpush1.msra.mxu0 0.0
      %1516 = vmatprep.subr.mxu0 0.0
      %1517 = vmatpush1.msra.mxu0 0.0
      %1518 = vmatprep.subr.mxu0 0.0
      %1519 = vmatpush1.msra.mxu0 0.0
      %1520 = vmatprep.subr.mxu0 0.0
      %1521 = vmatpush1.msra.mxu0 0.0
      %1522 = vmatprep.subr.mxu0 0.0
      %1523 = vmatpush1.msra.mxu0 0.0
      %1524 = vmatprep.subr.mxu0 0.0
      %1525 = vmatpush1.msra.mxu0 0.0
      %1526 = vmatprep.subr.mxu0 0.0
      %1527 = vmatpush1.msra.mxu0 0.0
      %1528 = vmatprep.subr.mxu0 0.0
      %1529 = vmatpush1.msra.mxu0 0.0
      %1530 = vmatprep.subr.mxu0 0.0
      %1531 = vmatpush1.msra.mxu0 0.0
      %1532 = vmatprep.subr.mxu0 0.0
      %1533 = vmatpush1.msra.mxu0 0.0
      %1534 = vmatprep.subr.mxu0 0.0
      %1535 = vmatpush1.msra.mxu0 0.0
      %1536 = vmatprep.subr.mxu0 0.0
      %1537 = vmatpush1.msra.mxu0 0.0
      %1538 = vmatprep.subr.mxu0 0.0
      %1539 = vmatpush1.msra.mxu0 0.0
      %1540 = vmatprep.subr.mxu0 0.0
      %1541 = vmatpush1.msra.mxu0 0.0
      %1542 = vmatprep.subr.mxu0 0.0
      %1543 = vmatpush1.msra.mxu0 0.0
      %1544 = vmatprep.subr.mxu0 0.0
      %1545 = vmatpush1.msra.mxu0 0.0
      %1546 = vmatprep.subr.mxu0 0.0
      %1547 = vmatpush1.msra.mxu0 0.0
      %1548 = vmatprep.subr.mxu0 0.0
      %1549 = vmatpush1.msra.mxu0 0.0
      %1550 = vmatprep.subr.mxu0 0.0
      %1551 = vmatpush1.msra.mxu0 0.0
      %1552 = vmatprep.subr.mxu0 0.0
      %1553 = vmatpush1.msra.mxu0 0.0
      %1554 = vmatprep.mubr.f32.mxu0 0.0
      %1555 = vmatmul.mubr.f32.gmra.mrb[0].mxu0 %v1453
      %v1556 = vpop.f32.mrb[0].mxu0
      %v1557 = vadd.f32 0.0, %v1556
      %v1558 = vpop.f32.mrb[0].mxu0
      %1559 = vmatprep.mubr.f32.mxu0 0.0
      %1560 = vmatmul.mubr.f32.gmra.mrb[0].mxu0 %v1456
      %v1561 = vpop.f32.mrb[0].mxu0
      %v1562 = vadd.f32 0.0, %v1561
      %v1563 = vpop.f32.mrb[0].mxu0
      %1564 = vmatprep.mubr.f32.mxu0 0.0
      %1565 = vmatmul.mubr.f32.gmra.mrb[0].mxu0 %v1459
      %v1566 = vpop.f32.mrb[0].mxu0
      %v1567 = vadd.f32 0.0, %v1566
      %v1568 = vpop.f32.mrb[0].mxu0
      %1569 = vmatprep.mubr.f32.mxu0 0.0
      %1570 = vmatmul.mubr.f32.gmra.mrb[0].mxu0 %v1462
      %v1571 = vpop.f32.mrb[0].mxu0
      %v1572 = vadd.f32 0.0, %v1571
      %v1573 = vpop.f32.mrb[0].mxu0
      %1574 = vmatprep.mubr.f32.mxu0 0.0
      %1575 = vmatmul.mubr.f32.gmra.mrb[0].mxu0 %v1465
      %v1576 = vpop.f32.mrb[0].mxu0
      %v1577 = vadd.f32 0.0, %v1576
      %v1578 = vpop.f32.mrb[0].mxu0
      %1579 = vmatprep.mubr.f32.mxu0 0.0
      %1580 = vmatmul.mubr.f32.gmra.mrb[0].mxu0 %v1468
      %v1581 = vpop.f32.mrb[0].mxu0
      %v1582 = vadd.f32 0.0, %v1581
      %v1583 = vpop.f32.mrb[0].mxu0
      %1584 = vmatprep.mubr.f32.mxu0 0.0
      %1585 = vmatmul.mubr.f32.gmra.mrb[0].mxu0 %v1471
      %v1586 = vpop.f32.mrb[0].mxu0
      %v1587 = vadd.f32 0.0, %v1586
      %v1588 = vpop.f32.mrb[0].mxu0
      %1589 = vmatprep.mubr.f32.mxu0 0.0
      %1590 = vmatmul.mubr.f32.gmra.mrb[0].mxu0 %v1474
      %v1591 = vpop.f32.mrb[0].mxu0
      %v1592 = vadd.f32 0.0, %v1591
      %v1593 = vpop.f32.mrb[0].mxu0
      %1594 = vmatprep.mubr.f32.mxu0 0.0
      %1595 = vmatmul.mubr.f32.gmra.mrb[0].mxu0 %v1477
      %v1596 = vpop.f32.mrb[0].mxu0
      %v1597 = vadd.f32 0.0, %v1596
      %v1598 = vpop.f32.mrb[0].mxu0
      %1599 = vmatprep.mubr.f32.mxu0 0.0
      %1600 = vmatmul.mubr.f32.gmra.mrb[0].mxu0 %v1480
      %v1601 = vpop.f32.mrb[0].mxu0
      %v1602 = vadd.f32 0.0, %v1601
      %v1603 = vpop.f32.mrb[0].mxu0
      %1604 = vmatprep.mubr.f32.mxu0 0.0
      %1605 = vmatmul.mubr.f32.gmra.mrb[0].mxu0 %v1483
      %v1606 = vpop.f32.mrb[0].mxu0
      %v1607 = vadd.f32 0.0, %v1606
      %v1608 = vpop.f32.mrb[0].mxu0
      %1609 = vmatprep.mubr.f32.mxu0 0.0
      %1610 = vmatmul.mubr.f32.gmra.mrb[0].mxu0 %v1486
      %v1611 = vpop.f32.mrb[0].mxu0
      %v1612 = vadd.f32 0.0, %v1611
      %v1613 = vpop.f32.mrb[0].mxu0
      %1614 = vdwg.mxu0
      %v1615 = vadd.f32 %v1416, %v1557
      %v1616 = vadd.f32 %v1417, %v1562
      %v1617 = vadd.f32 %v1418, %v1567
      %v1618 = vadd.f32 %v1419, %v1572
      %v1619 = vadd.f32 %v1420, %v1577
      %v1620 = vadd.f32 %v1421, %v1582
      %v1621 = vadd.f32 %v1422, %v1587
      %v1622 = vadd.f32 %v1423, %v1592
      %v1623 = vadd.f32 %v1424, %v1597
      %v1624 = vadd.f32 %v1425, %v1602
      %v1625 = vadd.f32 %v1426, %v1607
      %v1626 = vadd.f32 %v1427, %v1612
      %s1627 = scalar_lea.vmem %s582, 480
      %v1628 = vld [vmem:[%s1627] sm:$0xff]
      %v1629 = vld [vmem:[%s1627 + $0x8] sm:$0xff]
      %v1630 = vld [vmem:[%s1627 + $0x10] sm:$0xff]
      %v1631 = vld [vmem:[%s1627 + $0x18] sm:$0xff]
      %v1632 = vld [vmem:[%s1627 + $0x20] sm:$0xff]
      %v1633 = vld [vmem:[%s1627 + $0x28] sm:$0xff]
      %v1634 = vld [vmem:[%s1627 + $0x30] sm:$0xff]
      %v1635 = vld [vmem:[%s1627 + $0x38] sm:$0xff]
      %v1636 = vld [vmem:[%s1627 + $0x40] sm:$0xff]
      %v1637 = vld [vmem:[%s1627 + $0x48] sm:$0xff]
      %v1638 = vld [vmem:[%s1627 + $0x50] sm:$0xff]
      %v1639 = vld [vmem:[%s1627 + $0x58] sm:$0x3]
      %1640 = vrot.lane.b32.xlu0 %v658, 123
      %v1641 = vpop.permute.xlu0 %1640
      %1642 = vrot.lane.b32.xlu0 %v659, 123
      %v1643 = vpop.permute.xlu0 %1642
      %1644 = vrot.lane.b32.xlu0 %v660, 123
      %v1645 = vpop.permute.xlu0 %1644
      %1646 = vrot.lane.b32.xlu0 %v661, 123
      %v1647 = vpop.permute.xlu0 %1646
      %v1652 = vsel %vm702, %v1628, 0
      %v1655 = vsel %vm702, %v1629, 0
      %v1658 = vsel %vm702, %v1630, 0
      %v1661 = vsel %vm702, %v1631, 0
      %v1664 = vsel %vm702, %v1632, 0
      %v1667 = vsel %vm702, %v1633, 0
      %v1670 = vsel %vm702, %v1634, 0
      %v1673 = vsel %vm702, %v1635, 0
      %v1676 = vsel %vm702, %v1636, 0
      %v1679 = vsel %vm702, %v1637, 0
      %v1682 = vsel %vm702, %v1638, 0
      %v1685 = vsel %vm702, %v1639, 0
      %v1687 = vsel %vm739, %v1647, 0
      %1689 = vmatprep.subr.mxu0 0.0
      %1690 = vmatpush1.msra.mxu0 %v1641
      %1691 = vmatprep.subr.mxu0 0.0
      %1692 = vmatpush1.msra.mxu0 %v1643
      %1693 = vmatprep.subr.mxu0 0.0
      %1694 = vmatpush1.msra.mxu0 %v1645
      %1695 = vmatprep.subr.mxu0 0.0
      %1696 = vmatpush1.msra.mxu0 %v1687
      %1697 = vmatprep.subr.mxu0 0.0
      %1698 = vmatpush1.msra.mxu0 0.0
      %1699 = vmatprep.subr.mxu0 0.0
      %1700 = vmatpush1.msra.mxu0 0.0
      %1701 = vmatprep.subr.mxu0 0.0
      %1702 = vmatpush1.msra.mxu0 0.0
      %1703 = vmatprep.subr.mxu0 0.0
      %1704 = vmatpush1.msra.mxu0 0.0
      %1705 = vmatprep.subr.mxu0 0.0
      %1706 = vmatpush1.msra.mxu0 0.0
      %1707 = vmatprep.subr.mxu0 0.0
      %1708 = vmatpush1.msra.mxu0 0.0
      %1709 = vmatprep.subr.mxu0 0.0
      %1710 = vmatpush1.msra.mxu0 0.0
      %1711 = vmatprep.subr.mxu0 0.0
      %1712 = vmatpush1.msra.mxu0 0.0
      %1713 = vmatprep.subr.mxu0 0.0
      %1714 = vmatpush1.msra.mxu0 0.0
      %1715 = vmatprep.subr.mxu0 0.0
      %1716 = vmatpush1.msra.mxu0 0.0
      %1717 = vmatprep.subr.mxu0 0.0
      %1718 = vmatpush1.msra.mxu0 0.0
      %1719 = vmatprep.subr.mxu0 0.0
      %1720 = vmatpush1.msra.mxu0 0.0
      %1721 = vmatprep.subr.mxu0 0.0
      %1722 = vmatpush1.msra.mxu0 0.0
      %1723 = vmatprep.subr.mxu0 0.0
      %1724 = vmatpush1.msra.mxu0 0.0
      %1725 = vmatprep.subr.mxu0 0.0
      %1726 = vmatpush1.msra.mxu0 0.0
      %1727 = vmatprep.subr.mxu0 0.0
      %1728 = vmatpush1.msra.mxu0 0.0
      %1729 = vmatprep.subr.mxu0 0.0
      %1730 = vmatpush1.msra.mxu0 0.0
      %1731 = vmatprep.subr.mxu0 0.0
      %1732 = vmatpush1.msra.mxu0 0.0
      %1733 = vmatprep.subr.mxu0 0.0
      %1734 = vmatpush1.msra.mxu0 0.0
      %1735 = vmatprep.subr.mxu0 0.0
      %1736 = vmatpush1.msra.mxu0 0.0
      %1737 = vmatprep.subr.mxu0 0.0
      %1738 = vmatpush1.msra.mxu0 0.0
      %1739 = vmatprep.subr.mxu0 0.0
      %1740 = vmatpush1.msra.mxu0 0.0
      %1741 = vmatprep.subr.mxu0 0.0
      %1742 = vmatpush1.msra.mxu0 0.0
      %1743 = vmatprep.subr.mxu0 0.0
      %1744 = vmatpush1.msra.mxu0 0.0
      %1745 = vmatprep.subr.mxu0 0.0
      %1746 = vmatpush1.msra.mxu0 0.0
      %1747 = vmatprep.subr.mxu0 0.0
      %1748 = vmatpush1.msra.mxu0 0.0
      %1749 = vmatprep.subr.mxu0 0.0
      %1750 = vmatpush1.msra.mxu0 0.0
      %1751 = vmatprep.subr.mxu0 0.0
      %1752 = vmatpush1.msra.mxu0 0.0
      %1753 = vmatprep.mubr.f32.mxu0 0.0
      %1754 = vmatmul.mubr.f32.gmra.mrb[0].mxu0 %v1652
      %v1755 = vpop.f32.mrb[0].mxu0
      %v1756 = vadd.f32 0.0, %v1755
      %v1757 = vpop.f32.mrb[0].mxu0
      %1758 = vmatprep.mubr.f32.mxu0 0.0
      %1759 = vmatmul.mubr.f32.gmra.mrb[0].mxu0 %v1655
      %v1760 = vpop.f32.mrb[0].mxu0
      %v1761 = vadd.f32 0.0, %v1760
      %v1762 = vpop.f32.mrb[0].mxu0
      %1763 = vmatprep.mubr.f32.mxu0 0.0
      %1764 = vmatmul.mubr.f32.gmra.mrb[0].mxu0 %v1658
      %v1765 = vpop.f32.mrb[0].mxu0
      %v1766 = vadd.f32 0.0, %v1765
      %v1767 = vpop.f32.mrb[0].mxu0
      %1768 = vmatprep.mubr.f32.mxu0 0.0
      %1769 = vmatmul.mubr.f32.gmra.mrb[0].mxu0 %v1661
      %v1770 = vpop.f32.mrb[0].mxu0
      %v1771 = vadd.f32 0.0, %v1770
      %v1772 = vpop.f32.mrb[0].mxu0
      %1773 = vmatprep.mubr.f32.mxu0 0.0
      %1774 = vmatmul.mubr.f32.gmra.mrb[0].mxu0 %v1664
      %v1775 = vpop.f32.mrb[0].mxu0
      %v1776 = vadd.f32 0.0, %v1775
      %v1777 = vpop.f32.mrb[0].mxu0
      %1778 = vmatprep.mubr.f32.mxu0 0.0
      %1779 = vmatmul.mubr.f32.gmra.mrb[0].mxu0 %v1667
      %v1780 = vpop.f32.mrb[0].mxu0
      %v1781 = vadd.f32 0.0, %v1780
      %v1782 = vpop.f32.mrb[0].mxu0
      %1783 = vmatprep.mubr.f32.mxu0 0.0
      %1784 = vmatmul.mubr.f32.gmra.mrb[0].mxu0 %v1670
      %v1785 = vpop.f32.mrb[0].mxu0
      %v1786 = vadd.f32 0.0, %v1785
      %v1787 = vpop.f32.mrb[0].mxu0
      %1788 = vmatprep.mubr.f32.mxu0 0.0
      %1789 = vmatmul.mubr.f32.gmra.mrb[0].mxu0 %v1673
      %v1790 = vpop.f32.mrb[0].mxu0
      %v1791 = vadd.f32 0.0, %v1790
      %v1792 = vpop.f32.mrb[0].mxu0
      %1793 = vmatprep.mubr.f32.mxu0 0.0
      %1794 = vmatmul.mubr.f32.gmra.mrb[0].mxu0 %v1676
      %v1795 = vpop.f32.mrb[0].mxu0
      %v1796 = vadd.f32 0.0, %v1795
      %v1797 = vpop.f32.mrb[0].mxu0
      %1798 = vmatprep.mubr.f32.mxu0 0.0
      %1799 = vmatmul.mubr.f32.gmra.mrb[0].mxu0 %v1679
      %v1800 = vpop.f32.mrb[0].mxu0
      %v1801 = vadd.f32 0.0, %v1800
      %v1802 = vpop.f32.mrb[0].mxu0
      %1803 = vmatprep.mubr.f32.mxu0 0.0
      %1804 = vmatmul.mubr.f32.gmra.mrb[0].mxu0 %v1682
      %v1805 = vpop.f32.mrb[0].mxu0
      %v1806 = vadd.f32 0.0, %v1805
      %v1807 = vpop.f32.mrb[0].mxu0
      %1808 = vmatprep.mubr.f32.mxu0 0.0
      %1809 = vmatmul.mubr.f32.gmra.mrb[0].mxu0 %v1685
      %v1810 = vpop.f32.mrb[0].mxu0
      %v1811 = vadd.f32 0.0, %v1810
      %v1812 = vpop.f32.mrb[0].mxu0
      %1813 = vdwg.mxu0
      %v1814 = vadd.f32 %v1615, %v1756
      %v1815 = vadd.f32 %v1616, %v1761
      %v1816 = vadd.f32 %v1617, %v1766
      %v1817 = vadd.f32 %v1618, %v1771
      %v1818 = vadd.f32 %v1619, %v1776
      %v1819 = vadd.f32 %v1620, %v1781
      %v1820 = vadd.f32 %v1621, %v1786
      %v1821 = vadd.f32 %v1622, %v1791
      %v1822 = vadd.f32 %v1623, %v1796
      %v1823 = vadd.f32 %v1624, %v1801
      %v1824 = vadd.f32 %v1625, %v1806
      %v1825 = vadd.f32 %v1626, %v1811
      %s1826 = scalar_lea.vmem %s582, 576
      %v1827 = vld [vmem:[%s1826] sm:$0xff]
      %v1828 = vld [vmem:[%s1826 + $0x8] sm:$0xff]
      %v1829 = vld [vmem:[%s1826 + $0x10] sm:$0xff]
      %v1830 = vld [vmem:[%s1826 + $0x18] sm:$0xff]
      %v1831 = vld [vmem:[%s1826 + $0x20] sm:$0xff]
      %v1832 = vld [vmem:[%s1826 + $0x28] sm:$0xff]
      %v1833 = vld [vmem:[%s1826 + $0x30] sm:$0xff]
      %v1834 = vld [vmem:[%s1826 + $0x38] sm:$0xff]
      %v1835 = vld [vmem:[%s1826 + $0x40] sm:$0xff]
      %v1836 = vld [vmem:[%s1826 + $0x48] sm:$0xff]
      %v1837 = vld [vmem:[%s1826 + $0x50] sm:$0xff]
      %v1838 = vld [vmem:[%s1826 + $0x58] sm:$0x3]
      %1839 = vrot.lane.b32.xlu0 %v658, 122
      %v1840 = vpop.permute.xlu0 %1839
      %1841 = vrot.lane.b32.xlu0 %v659, 122
      %v1842 = vpop.permute.xlu0 %1841
      %1843 = vrot.lane.b32.xlu0 %v660, 122
      %v1844 = vpop.permute.xlu0 %1843
      %1845 = vrot.lane.b32.xlu0 %v661, 122
      %v1846 = vpop.permute.xlu0 %1845
      %v1851 = vsel %vm702, %v1827, 0
      %v1854 = vsel %vm702, %v1828, 0
      %v1857 = vsel %vm702, %v1829, 0
      %v1860 = vsel %vm702, %v1830, 0
      %v1863 = vsel %vm702, %v1831, 0
      %v1866 = vsel %vm702, %v1832, 0
      %v1869 = vsel %vm702, %v1833, 0
      %v1872 = vsel %vm702, %v1834, 0
      %v1875 = vsel %vm702, %v1835, 0
      %v1878 = vsel %vm702, %v1836, 0
      %v1881 = vsel %vm702, %v1837, 0
      %v1884 = vsel %vm702, %v1838, 0
      %v1886 = vsel %vm739, %v1846, 0
      %1888 = vmatprep.subr.mxu0 0.0
      %1889 = vmatpush1.msra.mxu0 %v1840
      %1890 = vmatprep.subr.mxu0 0.0
      %1891 = vmatpush1.msra.mxu0 %v1842
      %1892 = vmatprep.subr.mxu0 0.0
      %1893 = vmatpush1.msra.mxu0 %v1844
      %1894 = vmatprep.subr.mxu0 0.0
      %1895 = vmatpush1.msra.mxu0 %v1886
      %1896 = vmatprep.subr.mxu0 0.0
      %1897 = vmatpush1.msra.mxu0 0.0
      %1898 = vmatprep.subr.mxu0 0.0
      %1899 = vmatpush1.msra.mxu0 0.0
      %1900 = vmatprep.subr.mxu0 0.0
      %1901 = vmatpush1.msra.mxu0 0.0
      %1902 = vmatprep.subr.mxu0 0.0
      %1903 = vmatpush1.msra.mxu0 0.0
      %1904 = vmatprep.subr.mxu0 0.0
      %1905 = vmatpush1.msra.mxu0 0.0
      %1906 = vmatprep.subr.mxu0 0.0
      %1907 = vmatpush1.msra.mxu0 0.0
      %1908 = vmatprep.subr.mxu0 0.0
      %1909 = vmatpush1.msra.mxu0 0.0
      %1910 = vmatprep.subr.mxu0 0.0
      %1911 = vmatpush1.msra.mxu0 0.0
      %1912 = vmatprep.subr.mxu0 0.0
      %1913 = vmatpush1.msra.mxu0 0.0
      %1914 = vmatprep.subr.mxu0 0.0
      %1915 = vmatpush1.msra.mxu0 0.0
      %1916 = vmatprep.subr.mxu0 0.0
      %1917 = vmatpush1.msra.mxu0 0.0
      %1918 = vmatprep.subr.mxu0 0.0
      %1919 = vmatpush1.msra.mxu0 0.0
      %1920 = vmatprep.subr.mxu0 0.0
      %1921 = vmatpush1.msra.mxu0 0.0
      %1922 = vmatprep.subr.mxu0 0.0
      %1923 = vmatpush1.msra.mxu0 0.0
      %1924 = vmatprep.subr.mxu0 0.0
      %1925 = vmatpush1.msra.mxu0 0.0
      %1926 = vmatprep.subr.mxu0 0.0
      %1927 = vmatpush1.msra.mxu0 0.0
      %1928 = vmatprep.subr.mxu0 0.0
      %1929 = vmatpush1.msra.mxu0 0.0
      %1930 = vmatprep.subr.mxu0 0.0
      %1931 = vmatpush1.msra.mxu0 0.0
      %1932 = vmatprep.subr.mxu0 0.0
      %1933 = vmatpush1.msra.mxu0 0.0
      %1934 = vmatprep.subr.mxu0 0.0
      %1935 = vmatpush1.msra.mxu0 0.0
      %1936 = vmatprep.subr.mxu0 0.0
      %1937 = vmatpush1.msra.mxu0 0.0
      %1938 = vmatprep.subr.mxu0 0.0
      %1939 = vmatpush1.msra.mxu0 0.0
      %1940 = vmatprep.subr.mxu0 0.0
      %1941 = vmatpush1.msra.mxu0 0.0
      %1942 = vmatprep.subr.mxu0 0.0
      %1943 = vmatpush1.msra.mxu0 0.0
      %1944 = vmatprep.subr.mxu0 0.0
      %1945 = vmatpush1.msra.mxu0 0.0
      %1946 = vmatprep.subr.mxu0 0.0
      %1947 = vmatpush1.msra.mxu0 0.0
      %1948 = vmatprep.subr.mxu0 0.0
      %1949 = vmatpush1.msra.mxu0 0.0
      %1950 = vmatprep.subr.mxu0 0.0
      %1951 = vmatpush1.msra.mxu0 0.0
      %1952 = vmatprep.mubr.f32.mxu0 0.0
      %1953 = vmatmul.mubr.f32.gmra.mrb[0].mxu0 %v1851
      %v1954 = vpop.f32.mrb[0].mxu0
      %v1955 = vadd.f32 0.0, %v1954
      %v1956 = vpop.f32.mrb[0].mxu0
      %1957 = vmatprep.mubr.f32.mxu0 0.0
      %1958 = vmatmul.mubr.f32.gmra.mrb[0].mxu0 %v1854
      %v1959 = vpop.f32.mrb[0].mxu0
      %v1960 = vadd.f32 0.0, %v1959
      %v1961 = vpop.f32.mrb[0].mxu0
      %1962 = vmatprep.mubr.f32.mxu0 0.0
      %1963 = vmatmul.mubr.f32.gmra.mrb[0].mxu0 %v1857
      %v1964 = vpop.f32.mrb[0].mxu0
      %v1965 = vadd.f32 0.0, %v1964
      %v1966 = vpop.f32.mrb[0].mxu0
      %1967 = vmatprep.mubr.f32.mxu0 0.0
      %1968 = vmatmul.mubr.f32.gmra.mrb[0].mxu0 %v1860
      %v1969 = vpop.f32.mrb[0].mxu0
      %v1970 = vadd.f32 0.0, %v1969
      %v1971 = vpop.f32.mrb[0].mxu0
      %1972 = vmatprep.mubr.f32.mxu0 0.0
      %1973 = vmatmul.mubr.f32.gmra.mrb[0].mxu0 %v1863
      %v1974 = vpop.f32.mrb[0].mxu0
      %v1975 = vadd.f32 0.0, %v1974
      %v1976 = vpop.f32.mrb[0].mxu0
      %1977 = vmatprep.mubr.f32.mxu0 0.0
      %1978 = vmatmul.mubr.f32.gmra.mrb[0].mxu0 %v1866
      %v1979 = vpop.f32.mrb[0].mxu0
      %v1980 = vadd.f32 0.0, %v1979
      %v1981 = vpop.f32.mrb[0].mxu0
      %1982 = vmatprep.mubr.f32.mxu0 0.0
      %1983 = vmatmul.mubr.f32.gmra.mrb[0].mxu0 %v1869
      %v1984 = vpop.f32.mrb[0].mxu0
      %v1985 = vadd.f32 0.0, %v1984
      %v1986 = vpop.f32.mrb[0].mxu0
      %1987 = vmatprep.mubr.f32.mxu0 0.0
      %1988 = vmatmul.mubr.f32.gmra.mrb[0].mxu0 %v1872
      %v1989 = vpop.f32.mrb[0].mxu0
      %v1990 = vadd.f32 0.0, %v1989
      %v1991 = vpop.f32.mrb[0].mxu0
      %1992 = vmatprep.mubr.f32.mxu0 0.0
      %1993 = vmatmul.mubr.f32.gmra.mrb[0].mxu0 %v1875
      %v1994 = vpop.f32.mrb[0].mxu0
      %v1995 = vadd.f32 0.0, %v1994
      %v1996 = vpop.f32.mrb[0].mxu0
      %1997 = vmatprep.mubr.f32.mxu0 0.0
      %1998 = vmatmul.mubr.f32.gmra.mrb[0].mxu0 %v1878
      %v1999 = vpop.f32.mrb[0].mxu0
      %v2000 = vadd.f32 0.0, %v1999
      %v2001 = vpop.f32.mrb[0].mxu0
      %2002 = vmatprep.mubr.f32.mxu0 0.0
      %2003 = vmatmul.mubr.f32.gmra.mrb[0].mxu0 %v1881
      %v2004 = vpop.f32.mrb[0].mxu0
      %v2005 = vadd.f32 0.0, %v2004
      %v2006 = vpop.f32.mrb[0].mxu0
      %2007 = vmatprep.mubr.f32.mxu0 0.0
      %2008 = vmatmul.mubr.f32.gmra.mrb[0].mxu0 %v1884
      %v2009 = vpop.f32.mrb[0].mxu0
      %v2010 = vadd.f32 0.0, %v2009
      %v2011 = vpop.f32.mrb[0].mxu0
      %2012 = vdwg.mxu0
      %v2013 = vadd.f32 %v1814, %v1955
      %v2014 = vadd.f32 %v1815, %v1960
      %v2015 = vadd.f32 %v1816, %v1965
      %v2016 = vadd.f32 %v1817, %v1970
      %v2017 = vadd.f32 %v1818, %v1975
      %v2018 = vadd.f32 %v1819, %v1980
      %v2019 = vadd.f32 %v1820, %v1985
      %v2020 = vadd.f32 %v1821, %v1990
      %v2021 = vadd.f32 %v1822, %v1995
      %v2022 = vadd.f32 %v1823, %v2000
      %v2023 = vadd.f32 %v1824, %v2005
      %v2024 = vadd.f32 %v1825, %v2010
      %v2025 = vld [vmem:[%s587] sm:$0xff]
      %v2026 = vld [vmem:[%s587 + $0x8] sm:$0xff]
      %v2027 = vld [vmem:[%s587 + $0x10] sm:$0xff]
      %v2028 = vld [vmem:[%s587 + $0x18] sm:$0xff]
      %v2029 = vld [vmem:[%s587 + $0x20] sm:$0xff]
      %v2030 = vld [vmem:[%s587 + $0x28] sm:$0xff]
      %v2031 = vld [vmem:[%s587 + $0x30] sm:$0xff]
      %v2032 = vld [vmem:[%s587 + $0x38] sm:$0xff]
      %v2033 = vld [vmem:[%s587 + $0x40] sm:$0xff]
      %v2034 = vld [vmem:[%s587 + $0x48] sm:$0xff]
      %v2035 = vld [vmem:[%s587 + $0x50] sm:$0xff]
      %v2036 = vld [vmem:[%s587 + $0x58] sm:$0x3]
      %2038 = vset.pattern.permute.xlu0 0
      %2039 = vperm.xlu0 %2038, %v2025
      %v2040 = vpop.permute.xlu0 %2039
      %2043 = vset.pattern.permute.xlu0 0
      %2044 = vperm.xlu0 %2043, %v2026
      %v2045 = vpop.permute.xlu0 %2044
      %2048 = vset.pattern.permute.xlu0 0
      %2049 = vperm.xlu0 %2048, %v2027
      %v2050 = vpop.permute.xlu0 %2049
      %2053 = vset.pattern.permute.xlu0 0
      %2054 = vperm.xlu0 %2053, %v2028
      %v2055 = vpop.permute.xlu0 %2054
      %2058 = vset.pattern.permute.xlu0 0
      %2059 = vperm.xlu0 %2058, %v2029
      %v2060 = vpop.permute.xlu0 %2059
      %2063 = vset.pattern.permute.xlu0 0
      %2064 = vperm.xlu0 %2063, %v2030
      %v2065 = vpop.permute.xlu0 %2064
      %2068 = vset.pattern.permute.xlu0 0
      %2069 = vperm.xlu0 %2068, %v2031
      %v2070 = vpop.permute.xlu0 %2069
      %2073 = vset.pattern.permute.xlu0 0
      %2074 = vperm.xlu0 %2073, %v2032
      %v2075 = vpop.permute.xlu0 %2074
      %2078 = vset.pattern.permute.xlu0 0
      %2079 = vperm.xlu0 %2078, %v2033
      %v2080 = vpop.permute.xlu0 %2079
      %2083 = vset.pattern.permute.xlu0 0
      %2084 = vperm.xlu0 %2083, %v2034
      %v2085 = vpop.permute.xlu0 %2084
      %2088 = vset.pattern.permute.xlu0 0
      %2089 = vperm.xlu0 %2088, %v2035
      %v2090 = vpop.permute.xlu0 %2089
      %2093 = vset.pattern.permute.xlu0 0
      %2094 = vperm.xlu0 %2093, %v2036
      %v2095 = vpop.permute.xlu0 %2094
      %v2097 = vadd.f32 %v2013, %v2040
      %v2098 = vadd.f32 %v2014, %v2045
      %v2099 = vadd.f32 %v2015, %v2050
      %v2100 = vadd.f32 %v2016, %v2055
      %v2101 = vadd.f32 %v2017, %v2060
      %v2102 = vadd.f32 %v2018, %v2065
      %v2103 = vadd.f32 %v2019, %v2070
      %v2104 = vadd.f32 %v2020, %v2075
      %v2105 = vadd.f32 %v2021, %v2080
      %v2106 = vadd.f32 %v2022, %v2085
      %v2107 = vadd.f32 %v2023, %v2090
      %v2108 = vadd.f32 %v2024, %v2095
      %vm2114 = vcmask 1041408
      %v2115 = vrot.slane %v2100, 6
      %v2116 = vrot.slane %v2101, 6
      %v2117 = vsel %vm2114, %v2115, %v2116
      %v2118 = vrot.slane %v2102, 6
      %v2119 = vsel %vm2114, %v2116, %v2118
      %v2120 = vrot.slane %v2103, 6
      %v2121 = vsel %vm2114, %v2118, %v2120
      %v2122 = vrot.slane %v2104, 6
      %v2123 = vsel %vm2114, %v2120, %v2122
      %vm2124 = vcmask 203776
      %v2126 = vsel %vm2124, %v2097, 0
      %v2129 = vsel %vm2124, %v2098, 0
      %v2132 = vsel %vm2124, %v2099, 0
      %v2134 = vsel %vm2124, %v2100, 0
      %v2136 = vsel %vm2124, %v2117, 0
      %v2138 = vsel %vm2124, %v2119, 0
      %v2140 = vsel %vm2124, %v2121, 0
      %v2142 = vsel %vm2124, %v2123, 0
      %2144 = vmatprep.subr.mxu0 0.0
      %2145 = vmatpush1.xpose.msra.mxu0 %v2136
      %2146 = vmatprep.subr.mxu0 0.0
      %2147 = vmatpush1.xpose.msra.mxu0 %v2138
      %2148 = vmatprep.subr.mxu0 0.0
      %2149 = vmatpush1.xpose.msra.mxu0 %v2140
      %2150 = vmatprep.subr.mxu0 0.0
      %2151 = vmatpush1.xpose.msra.mxu0 %v2142
      %2152 = vmatprep.subr.mxu0 0.0
      %2153 = vmatpush1.xpose.msra.mxu0 0.0
      %2154 = vmatprep.subr.mxu0 0.0
      %2155 = vmatpush1.xpose.msra.mxu0 0.0
      %2156 = vmatprep.subr.mxu0 0.0
      %2157 = vmatpush1.xpose.msra.mxu0 0.0
      %2158 = vmatprep.subr.mxu0 0.0
      %2159 = vmatpush1.xpose.msra.mxu0 0.0
      %2160 = vmatprep.subr.mxu0 0.0
      %2161 = vmatpush1.xpose.msra.mxu0 0.0
      %2162 = vmatprep.subr.mxu0 0.0
      %2163 = vmatpush1.xpose.msra.mxu0 0.0
      %2164 = vmatprep.subr.mxu0 0.0
      %2165 = vmatpush1.xpose.msra.mxu0 0.0
      %2166 = vmatprep.subr.mxu0 0.0
      %2167 = vmatpush1.xpose.msra.mxu0 0.0
      %2168 = vmatprep.subr.mxu0 0.0
      %2169 = vmatpush1.xpose.msra.mxu0 0.0
      %2170 = vmatprep.subr.mxu0 0.0
      %2171 = vmatpush1.xpose.msra.mxu0 0.0
      %2172 = vmatprep.subr.mxu0 0.0
      %2173 = vmatpush1.xpose.msra.mxu0 0.0
      %2174 = vmatprep.subr.mxu0 0.0
      %2175 = vmatpush1.xpose.msra.mxu0 0.0
      %2176 = vmatprep.subr.mxu0 0.0
      %2177 = vmatpush1.xpose.msra.mxu0 0.0
      %2178 = vmatprep.subr.mxu0 0.0
      %2179 = vmatpush1.xpose.msra.mxu0 0.0
      %2180 = vmatprep.subr.mxu0 0.0
      %2181 = vmatpush1.xpose.msra.mxu0 0.0
      %2182 = vmatprep.subr.mxu0 0.0
      %2183 = vmatpush1.xpose.msra.mxu0 0.0
      %2184 = vmatprep.subr.mxu0 0.0
      %2185 = vmatpush1.xpose.msra.mxu0 0.0
      %2186 = vmatprep.subr.mxu0 0.0
      %2187 = vmatpush1.xpose.msra.mxu0 0.0
      %2188 = vmatprep.subr.mxu0 0.0
      %2189 = vmatpush1.xpose.msra.mxu0 0.0
      %2190 = vmatprep.subr.mxu0 0.0
      %2191 = vmatpush1.xpose.msra.mxu0 0.0
      %2192 = vmatprep.subr.mxu0 0.0
      %2193 = vmatpush1.xpose.msra.mxu0 0.0
      %2194 = vmatprep.subr.mxu0 0.0
      %2195 = vmatpush1.xpose.msra.mxu0 0.0
      %2196 = vmatprep.subr.mxu0 0.0
      %2197 = vmatpush1.xpose.msra.mxu0 0.0
      %2198 = vmatprep.subr.mxu0 0.0
      %2199 = vmatpush1.xpose.msra.mxu0 0.0
      %2200 = vmatprep.subr.mxu0 0.0
      %2201 = vmatpush1.xpose.msra.mxu0 0.0
      %2202 = vmatprep.subr.mxu0 0.0
      %2203 = vmatpush1.xpose.msra.mxu0 0.0
      %2204 = vmatprep.subr.mxu0 0.0
      %2205 = vmatpush1.xpose.msra.mxu0 0.0
      %2206 = vmatprep.subr.mxu0 0.0
      %2207 = vmatpush1.xpose.msra.mxu0 0.0
      %2208 = vmatprep.mubr.f32.mxu0 0.0
      %2209 = vmatmul.mubr.f32.gmra.mrb[0].mxu0 %v2126
      %v2210 = vpop.f32.mrb[0].mxu0
      %v2211 = vadd.f32 0.0, %v2210
      %v2212 = vpop.f32.mrb[0].mxu0
      %2213 = vmatprep.mubr.f32.mxu0 0.0
      %2214 = vmatmul.mubr.f32.gmra.mrb[0].mxu0 %v2129
      %v2215 = vpop.f32.mrb[0].mxu0
      %v2216 = vadd.f32 0.0, %v2215
      %v2217 = vpop.f32.mrb[0].mxu0
      %2218 = vmatprep.mubr.f32.mxu0 0.0
      %2219 = vmatmul.mubr.f32.gmra.mrb[0].mxu0 %v2132
      %v2220 = vpop.f32.mrb[0].mxu0
      %v2221 = vadd.f32 0.0, %v2220
      %v2222 = vpop.f32.mrb[0].mxu0
      %2223 = vmatprep.mubr.f32.mxu0 0.0
      %2224 = vmatmul.mubr.f32.gmra.mrb[0].mxu0 %v2134
      %v2225 = vpop.f32.mrb[0].mxu0
      %v2226 = vadd.f32 0.0, %v2225
      %v2227 = vpop.f32.mrb[0].mxu0
      %2228 = vdwg.mxu0
      %v2229 = vmul.f32 %v2211, 0.2
      %v2230 = vmul.f32 %v2216, 0.2
      %v2231 = vmul.f32 %v2221, 0.2
      %v2232 = vmul.f32 %v2226, 0.2
      %v2233 = vsel %vm702, %v2229, -inf
      %2234 = vmax.xlane.f32.xlu0 %v2233
      %v2235 = vpop.xlane.xlu0 %2234
      %v2236 = vsel %vm702, %v2230, -inf
      %2237 = vmax.xlane.f32.xlu0 %v2236
      %v2238 = vpop.xlane.xlu0 %2237
      %v2239 = vsel %vm702, %v2231, -inf
      %2240 = vmax.xlane.f32.xlu0 %v2239
      %v2241 = vpop.xlane.xlu0 %2240
      %vm2242 = vcmask 242688
      %v2243 = vsel %vm2242, %v2232, -inf
      %2244 = vmax.xlane.f32.xlu0 %v2243
      %v2245 = vpop.xlane.xlu0 %2244
      %v2246 = vsub.f32 %v2229, %v2235
      %v2247 = vsub.f32 %v2230, %v2238
      %v2248 = vsub.f32 %v2231, %v2241
      %v2249 = vsub.f32 %v2232, %v2245
      %v2250 = vmul.f32 %v2246, 1.442695
      %v2251 = vpow.pop %v2250
      %v2252 = vmul.f32 %v2247, 1.442695
      %v2253 = vpow.pop %v2252
      %v2254 = vmul.f32 %v2248, 1.442695
      %v2255 = vpow.pop %v2254
      %v2256 = vmul.f32 %v2249, 1.442695
      %v2257 = vpow.pop %v2256
      %v2258 = vsel %vm702, %v2251, 0.0
      %2259 = vadd.xlane.f32.xlu0 %v2258
      %v2260 = vpop.xlane.xlu0 %2259
      %v2261 = vsel %vm702, %v2253, 0.0
      %2262 = vadd.xlane.f32.xlu0 %v2261
      %v2263 = vpop.xlane.xlu0 %2262
      %v2264 = vsel %vm702, %v2255, 0.0
      %2265 = vadd.xlane.f32.xlu0 %v2264
      %v2266 = vpop.xlane.xlu0 %2265
      %v2267 = vsel %vm2242, %v2257, 0.0
      %2268 = vadd.xlane.f32.xlu0 %v2267
      %v2269 = vpop.xlane.xlu0 %2268
      %v2270 = vrcp.pop %v2260
      %v2271 = vmul.f32 %v2251, %v2270
      %v2272 = vrcp.pop %v2263
      %v2273 = vmul.f32 %v2253, %v2272
      %v2274 = vrcp.pop %v2266
      %v2275 = vmul.f32 %v2255, %v2274
      %v2276 = vrcp.pop %v2269
      %v2277 = vmul.f32 %v2257, %v2276
      %vm2282 = vcmask 1043456
      %v2283 = vrot.slane %v2104, 4
      %v2284 = vrot.slane %v2105, 4
      %v2285 = vsel %vm2282, %v2283, %v2284
      %v2286 = vrot.slane %v2106, 4
      %v2287 = vsel %vm2282, %v2284, %v2286
      %v2288 = vrot.slane %v2107, 4
      %v2289 = vsel %vm2282, %v2286, %v2288
      %v2290 = vrot.slane %v2108, 4
      %v2291 = vsel %vm2282, %v2288, %v2290
      %v2296 = vsel %vm702, %v2271, 0
      %v2299 = vsel %vm702, %v2273, 0
      %v2302 = vsel %vm702, %v2275, 0
      %v2305 = vsel %vm702, %v2277, 0
      %v2307 = vsel %vm739, %v2291, 0
      %2309 = vmatprep.subr.mxu0 0.0
      %2310 = vmatpush1.msra.mxu0 %v2285
      %2311 = vmatprep.subr.mxu0 0.0
      %2312 = vmatpush1.msra.mxu0 %v2287
      %2313 = vmatprep.subr.mxu0 0.0
      %2314 = vmatpush1.msra.mxu0 %v2289
      %2315 = vmatprep.subr.mxu0 0.0
      %2316 = vmatpush1.msra.mxu0 %v2307
      %2317 = vmatprep.subr.mxu0 0.0
      %2318 = vmatpush1.msra.mxu0 0.0
      %2319 = vmatprep.subr.mxu0 0.0
      %2320 = vmatpush1.msra.mxu0 0.0
      %2321 = vmatprep.subr.mxu0 0.0
      %2322 = vmatpush1.msra.mxu0 0.0
      %2323 = vmatprep.subr.mxu0 0.0
      %2324 = vmatpush1.msra.mxu0 0.0
      %2325 = vmatprep.subr.mxu0 0.0
      %2326 = vmatpush1.msra.mxu0 0.0
      %2327 = vmatprep.subr.mxu0 0.0
      %2328 = vmatpush1.msra.mxu0 0.0
      %2329 = vmatprep.subr.mxu0 0.0
      %2330 = vmatpush1.msra.mxu0 0.0
      %2331 = vmatprep.subr.mxu0 0.0
      %2332 = vmatpush1.msra.mxu0 0.0
      %2333 = vmatprep.subr.mxu0 0.0
      %2334 = vmatpush1.msra.mxu0 0.0
      %2335 = vmatprep.subr.mxu0 0.0
      %2336 = vmatpush1.msra.mxu0 0.0
      %2337 = vmatprep.subr.mxu0 0.0
      %2338 = vmatpush1.msra.mxu0 0.0
      %2339 = vmatprep.subr.mxu0 0.0
      %2340 = vmatpush1.msra.mxu0 0.0
      %2341 = vmatprep.subr.mxu0 0.0
      %2342 = vmatpush1.msra.mxu0 0.0
      %2343 = vmatprep.subr.mxu0 0.0
      %2344 = vmatpush1.msra.mxu0 0.0
      %2345 = vmatprep.subr.mxu0 0.0
      %2346 = vmatpush1.msra.mxu0 0.0
      %2347 = vmatprep.subr.mxu0 0.0
      %2348 = vmatpush1.msra.mxu0 0.0
      %2349 = vmatprep.subr.mxu0 0.0
      %2350 = vmatpush1.msra.mxu0 0.0
      %2351 = vmatprep.subr.mxu0 0.0
      %2352 = vmatpush1.msra.mxu0 0.0
      %2353 = vmatprep.subr.mxu0 0.0
      %2354 = vmatpush1.msra.mxu0 0.0
      %2355 = vmatprep.subr.mxu0 0.0
      %2356 = vmatpush1.msra.mxu0 0.0
      %2357 = vmatprep.subr.mxu0 0.0
      %2358 = vmatpush1.msra.mxu0 0.0
      %2359 = vmatprep.subr.mxu0 0.0
      %2360 = vmatpush1.msra.mxu0 0.0
      %2361 = vmatprep.subr.mxu0 0.0
      %2362 = vmatpush1.msra.mxu0 0.0
      %2363 = vmatprep.subr.mxu0 0.0
      %2364 = vmatpush1.msra.mxu0 0.0
      %2365 = vmatprep.subr.mxu0 0.0
      %2366 = vmatpush1.msra.mxu0 0.0
      %2367 = vmatprep.subr.mxu0 0.0
      %2368 = vmatpush1.msra.mxu0 0.0
      %2369 = vmatprep.subr.mxu0 0.0
      %2370 = vmatpush1.msra.mxu0 0.0
      %2371 = vmatprep.subr.mxu0 0.0
      %2372 = vmatpush1.msra.mxu0 0.0
      %2373 = vmatprep.mubr.f32.mxu0 0.0
      %2374 = vmatmul.mubr.f32.gmra.mrb[0].mxu0 %v2296
      %v2375 = vpop.f32.mrb[0].mxu0
      %v2376 = vadd.f32 0.0, %v2375
      %v2377 = vpop.f32.mrb[0].mxu0
      %2378 = vmatprep.mubr.f32.mxu0 0.0
      %2379 = vmatmul.mubr.f32.gmra.mrb[0].mxu0 %v2299
      %v2380 = vpop.f32.mrb[0].mxu0
      %v2381 = vadd.f32 0.0, %v2380
      %v2382 = vpop.f32.mrb[0].mxu0
      %2383 = vmatprep.mubr.f32.mxu0 0.0
      %2384 = vmatmul.mubr.f32.gmra.mrb[0].mxu0 %v2302
      %v2385 = vpop.f32.mrb[0].mxu0
      %v2386 = vadd.f32 0.0, %v2385
      %v2387 = vpop.f32.mrb[0].mxu0
      %2388 = vmatprep.mubr.f32.mxu0 0.0
      %2389 = vmatmul.mubr.f32.gmra.mrb[0].mxu0 %v2305
      %v2390 = vpop.f32.mrb[0].mxu0
      %v2391 = vadd.f32 0.0, %v2390
      %v2392 = vpop.f32.mrb[0].mxu0
      %2393 = vdwg.mxu0
      %2394 = vrot.lane.b32.xlu0 %v2097, 103
      %v2395 = vpop.permute.xlu0 %2394
      %2396 = vrot.lane.b32.xlu0 %v2098, 103
      %v2397 = vpop.permute.xlu0 %2396
      %2398 = vrot.lane.b32.xlu0 %v2099, 103
      %v2399 = vpop.permute.xlu0 %2398
      %2400 = vrot.lane.b32.xlu0 %v2100, 103
      %v2401 = vpop.permute.xlu0 %2400
      %2402 = vrot.lane.b32.xlu0 %v2117, 103
      %v2403 = vpop.permute.xlu0 %2402
      %2404 = vrot.lane.b32.xlu0 %v2119, 103
      %v2405 = vpop.permute.xlu0 %2404
      %2406 = vrot.lane.b32.xlu0 %v2121, 103
      %v2407 = vpop.permute.xlu0 %2406
      %2408 = vrot.lane.b32.xlu0 %v2123, 103
      %v2409 = vpop.permute.xlu0 %2408
      %v2410 = vsel %vm2124, %v2395, 0
      %v2412 = vsel %vm2124, %v2397, 0
      %v2414 = vsel %vm2124, %v2399, 0
      %v2416 = vsel %vm2124, %v2401, 0
      %v2418 = vsel %vm2124, %v2403, 0
      %v2420 = vsel %vm2124, %v2405, 0
      %v2422 = vsel %vm2124, %v2407, 0
      %v2424 = vsel %vm2124, %v2409, 0
      %2426 = vmatprep.subr.mxu0 0.0
      %2427 = vmatpush1.xpose.msra.mxu0 %v2418
      %2428 = vmatprep.subr.mxu0 0.0
      %2429 = vmatpush1.xpose.msra.mxu0 %v2420
      %2430 = vmatprep.subr.mxu0 0.0
      %2431 = vmatpush1.xpose.msra.mxu0 %v2422
      %2432 = vmatprep.subr.mxu0 0.0
      %2433 = vmatpush1.xpose.msra.mxu0 %v2424
      %2434 = vmatprep.subr.mxu0 0.0
      %2435 = vmatpush1.xpose.msra.mxu0 0.0
      %2436 = vmatprep.subr.mxu0 0.0
      %2437 = vmatpush1.xpose.msra.mxu0 0.0
      %2438 = vmatprep.subr.mxu0 0.0
      %2439 = vmatpush1.xpose.msra.mxu0 0.0
      %2440 = vmatprep.subr.mxu0 0.0
      %2441 = vmatpush1.xpose.msra.mxu0 0.0
      %2442 = vmatprep.subr.mxu0 0.0
      %2443 = vmatpush1.xpose.msra.mxu0 0.0
      %2444 = vmatprep.subr.mxu0 0.0
      %2445 = vmatpush1.xpose.msra.mxu0 0.0
      %2446 = vmatprep.subr.mxu0 0.0
      %2447 = vmatpush1.xpose.msra.mxu0 0.0
      %2448 = vmatprep.subr.mxu0 0.0
      %2449 = vmatpush1.xpose.msra.mxu0 0.0
      %2450 = vmatprep.subr.mxu0 0.0
      %2451 = vmatpush1.xpose.msra.mxu0 0.0
      %2452 = vmatprep.subr.mxu0 0.0
      %2453 = vmatpush1.xpose.msra.mxu0 0.0
      %2454 = vmatprep.subr.mxu0 0.0
      %2455 = vmatpush1.xpose.msra.mxu0 0.0
      %2456 = vmatprep.subr.mxu0 0.0
      %2457 = vmatpush1.xpose.msra.mxu0 0.0
      %2458 = vmatprep.subr.mxu0 0.0
      %2459 = vmatpush1.xpose.msra.mxu0 0.0
      %2460 = vmatprep.subr.mxu0 0.0
      %2461 = vmatpush1.xpose.msra.mxu0 0.0
      %2462 = vmatprep.subr.mxu0 0.0
      %2463 = vmatpush1.xpose.msra.mxu0 0.0
      %2464 = vmatprep.subr.mxu0 0.0
      %2465 = vmatpush1.xpose.msra.mxu0 0.0
      %2466 = vmatprep.subr.mxu0 0.0
      %2467 = vmatpush1.xpose.msra.mxu0 0.0
      %2468 = vmatprep.subr.mxu0 0.0
      %2469 = vmatpush1.xpose.msra.mxu0 0.0
      %2470 = vmatprep.subr.mxu0 0.0
      %2471 = vmatpush1.xpose.msra.mxu0 0.0
      %2472 = vmatprep.subr.mxu0 0.0
      %2473 = vmatpush1.xpose.msra.mxu0 0.0
      %2474 = vmatprep.subr.mxu0 0.0
      %2475 = vmatpush1.xpose.msra.mxu0 0.0
      %2476 = vmatprep.subr.mxu0 0.0
      %2477 = vmatpush1.xpose.msra.mxu0 0.0
      %2478 = vmatprep.subr.mxu0 0.0
      %2479 = vmatpush1.xpose.msra.mxu0 0.0
      %2480 = vmatprep.subr.mxu0 0.0
      %2481 = vmatpush1.xpose.msra.mxu0 0.0
      %2482 = vmatprep.subr.mxu0 0.0
      %2483 = vmatpush1.xpose.msra.mxu0 0.0
      %2484 = vmatprep.subr.mxu0 0.0
      %2485 = vmatpush1.xpose.msra.mxu0 0.0
      %2486 = vmatprep.subr.mxu0 0.0
      %2487 = vmatpush1.xpose.msra.mxu0 0.0
      %2488 = vmatprep.subr.mxu0 0.0
      %2489 = vmatpush1.xpose.msra.mxu0 0.0
      %2490 = vmatprep.mubr.f32.mxu0 0.0
      %2491 = vmatmul.mubr.f32.gmra.mrb[0].mxu0 %v2410
      %v2492 = vpop.f32.mrb[0].mxu0
      %v2493 = vadd.f32 0.0, %v2492
      %v2494 = vpop.f32.mrb[0].mxu0
      %2495 = vmatprep.mubr.f32.mxu0 0.0
      %2496 = vmatmul.mubr.f32.gmra.mrb[0].mxu0 %v2412
      %v2497 = vpop.f32.mrb[0].mxu0
      %v2498 = vadd.f32 0.0, %v2497
      %v2499 = vpop.f32.mrb[0].mxu0
      %2500 = vmatprep.mubr.f32.mxu0 0.0
      %2501 = vmatmul.mubr.f32.gmra.mrb[0].mxu0 %v2414
      %v2502 = vpop.f32.mrb[0].mxu0
      %v2503 = vadd.f32 0.0, %v2502
      %v2504 = vpop.f32.mrb[0].mxu0
      %2505 = vmatprep.mubr.f32.mxu0 0.0
      %2506 = vmatmul.mubr.f32.gmra.mrb[0].mxu0 %v2416
      %v2507 = vpop.f32.mrb[0].mxu0
      %v2508 = vadd.f32 0.0, %v2507
      %v2509 = vpop.f32.mrb[0].mxu0
      %2510 = vdwg.mxu0
      %v2511 = vmul.f32 %v2493, 0.2
      %v2512 = vmul.f32 %v2498, 0.2
      %v2513 = vmul.f32 %v2503, 0.2
      %v2514 = vmul.f32 %v2508, 0.2
      %v2515 = vsel %vm702, %v2511, -inf
      %2516 = vmax.xlane.f32.xlu0 %v2515
      %v2517 = vpop.xlane.xlu0 %2516
      %v2518 = vsel %vm702, %v2512, -inf
      %2519 = vmax.xlane.f32.xlu0 %v2518
      %v2520 = vpop.xlane.xlu0 %2519
      %v2521 = vsel %vm702, %v2513, -inf
      %2522 = vmax.xlane.f32.xlu0 %v2521
      %v2523 = vpop.xlane.xlu0 %2522
      %v2524 = vsel %vm2242, %v2514, -inf
      %2525 = vmax.xlane.f32.xlu0 %v2524
      %v2526 = vpop.xlane.xlu0 %2525
      %v2527 = vsub.f32 %v2511, %v2517
      %v2528 = vsub.f32 %v2512, %v2520
      %v2529 = vsub.f32 %v2513, %v2523
      %v2530 = vsub.f32 %v2514, %v2526
      %v2531 = vmul.f32 %v2527, 1.442695
      %v2532 = vpow.pop %v2531
      %v2533 = vmul.f32 %v2528, 1.442695
      %v2534 = vpow.pop %v2533
      %v2535 = vmul.f32 %v2529, 1.442695
      %v2536 = vpow.pop %v2535
      %v2537 = vmul.f32 %v2530, 1.442695
      %v2538 = vpow.pop %v2537
      %v2539 = vsel %vm702, %v2532, 0.0
      %2540 = vadd.xlane.f32.xlu0 %v2539
      %v2541 = vpop.xlane.xlu0 %2540
      %v2542 = vsel %vm702, %v2534, 0.0
      %2543 = vadd.xlane.f32.xlu0 %v2542
      %v2544 = vpop.xlane.xlu0 %2543
      %v2545 = vsel %vm702, %v2536, 0.0
      %2546 = vadd.xlane.f32.xlu0 %v2545
      %v2547 = vpop.xlane.xlu0 %2546
      %v2548 = vsel %vm2242, %v2538, 0.0
      %2549 = vadd.xlane.f32.xlu0 %v2548
      %v2550 = vpop.xlane.xlu0 %2549
      %v2551 = vrcp.pop %v2541
      %v2552 = vmul.f32 %v2532, %v2551
      %v2553 = vrcp.pop %v2544
      %v2554 = vmul.f32 %v2534, %v2553
      %v2555 = vrcp.pop %v2547
      %v2556 = vmul.f32 %v2536, %v2555
      %v2557 = vrcp.pop %v2550
      %v2558 = vmul.f32 %v2538, %v2557
      %2559 = vrot.lane.b32.xlu0 %v2285, 103
      %v2560 = vpop.permute.xlu0 %2559
      %2561 = vrot.lane.b32.xlu0 %v2287, 103
      %v2562 = vpop.permute.xlu0 %2561
      %2563 = vrot.lane.b32.xlu0 %v2289, 103
      %v2564 = vpop.permute.xlu0 %2563
      %2565 = vrot.lane.b32.xlu0 %v2291, 103
      %v2566 = vpop.permute.xlu0 %2565
      %v2571 = vsel %vm702, %v2552, 0
      %v2574 = vsel %vm702, %v2554, 0
      %v2577 = vsel %vm702, %v2556, 0
      %v2580 = vsel %vm702, %v2558, 0
      %v2582 = vsel %vm739, %v2566, 0
      %2584 = vmatprep.subr.mxu0 0.0
      %2585 = vmatpush1.msra.mxu0 %v2560
      %2586 = vmatprep.subr.mxu0 0.0
      %2587 = vmatpush1.msra.mxu0 %v2562
      %2588 = vmatprep.subr.mxu0 0.0
      %2589 = vmatpush1.msra.mxu0 %v2564
      %2590 = vmatprep.subr.mxu0 0.0
      %2591 = vmatpush1.msra.mxu0 %v2582
      %2592 = vmatprep.subr.mxu0 0.0
      %2593 = vmatpush1.msra.mxu0 0.0
      %2594 = vmatprep.subr.mxu0 0.0
      %2595 = vmatpush1.msra.mxu0 0.0
      %2596 = vmatprep.subr.mxu0 0.0
      %2597 = vmatpush1.msra.mxu0 0.0
      %2598 = vmatprep.subr.mxu0 0.0
      %2599 = vmatpush1.msra.mxu0 0.0
      %2600 = vmatprep.subr.mxu0 0.0
      %2601 = vmatpush1.msra.mxu0 0.0
      %2602 = vmatprep.subr.mxu0 0.0
      %2603 = vmatpush1.msra.mxu0 0.0
      %2604 = vmatprep.subr.mxu0 0.0
      %2605 = vmatpush1.msra.mxu0 0.0
      %2606 = vmatprep.subr.mxu0 0.0
      %2607 = vmatpush1.msra.mxu0 0.0
      %2608 = vmatprep.subr.mxu0 0.0
      %2609 = vmatpush1.msra.mxu0 0.0
      %2610 = vmatprep.subr.mxu0 0.0
      %2611 = vmatpush1.msra.mxu0 0.0
      %2612 = vmatprep.subr.mxu0 0.0
      %2613 = vmatpush1.msra.mxu0 0.0
      %2614 = vmatprep.subr.mxu0 0.0
      %2615 = vmatpush1.msra.mxu0 0.0
      %2616 = vmatprep.subr.mxu0 0.0
      %2617 = vmatpush1.msra.mxu0 0.0
      %2618 = vmatprep.subr.mxu0 0.0
      %2619 = vmatpush1.msra.mxu0 0.0
      %2620 = vmatprep.subr.mxu0 0.0
      %2621 = vmatpush1.msra.mxu0 0.0
      %2622 = vmatprep.subr.mxu0 0.0
      %2623 = vmatpush1.msra.mxu0 0.0
      %2624 = vmatprep.subr.mxu0 0.0
      %2625 = vmatpush1.msra.mxu0 0.0
      %2626 = vmatprep.subr.mxu0 0.0
      %2627 = vmatpush1.msra.mxu0 0.0
      %2628 = vmatprep.subr.mxu0 0.0
      %2629 = vmatpush1.msra.mxu0 0.0
      %2630 = vmatprep.subr.mxu0 0.0
      %2631 = vmatpush1.msra.mxu0 0.0
      %2632 = vmatprep.subr.mxu0 0.0
      %2633 = vmatpush1.msra.mxu0 0.0
      %2634 = vmatprep.subr.mxu0 0.0
      %2635 = vmatpush1.msra.mxu0 0.0
      %2636 = vmatprep.subr.mxu0 0.0
      %2637 = vmatpush1.msra.mxu0 0.0
      %2638 = vmatprep.subr.mxu0 0.0
      %2639 = vmatpush1.msra.mxu0 0.0
      %2640 = vmatprep.subr.mxu0 0.0
      %2641 = vmatpush1.msra.mxu0 0.0
      %2642 = vmatprep.subr.mxu0 0.0
      %2643 = vmatpush1.msra.mxu0 0.0
      %2644 = vmatprep.subr.mxu0 0.0
      %2645 = vmatpush1.msra.mxu0 0.0
      %2646 = vmatprep.subr.mxu0 0.0
      %2647 = vmatpush1.msra.mxu0 0.0
      %2648 = vmatprep.mubr.f32.mxu0 0.0
      %2649 = vmatmul.mubr.f32.gmra.mrb[0].mxu0 %v2571
      %v2650 = vpop.f32.mrb[0].mxu0
      %v2651 = vadd.f32 0.0, %v2650
      %v2652 = vpop.f32.mrb[0].mxu0
      %2653 = vmatprep.mubr.f32.mxu0 0.0
      %2654 = vmatmul.mubr.f32.gmra.mrb[0].mxu0 %v2574
      %v2655 = vpop.f32.mrb[0].mxu0
      %v2656 = vadd.f32 0.0, %v2655
      %v2657 = vpop.f32.mrb[0].mxu0
      %2658 = vmatprep.mubr.f32.mxu0 0.0
      %2659 = vmatmul.mubr.f32.gmra.mrb[0].mxu0 %v2577
      %v2660 = vpop.f32.mrb[0].mxu0
      %v2661 = vadd.f32 0.0, %v2660
      %v2662 = vpop.f32.mrb[0].mxu0
      %2663 = vmatprep.mubr.f32.mxu0 0.0
      %2664 = vmatmul.mubr.f32.gmra.mrb[0].mxu0 %v2580
      %v2665 = vpop.f32.mrb[0].mxu0
      %v2666 = vadd.f32 0.0, %v2665
      %v2667 = vpop.f32.mrb[0].mxu0
      %2668 = vdwg.mxu0
      %2669 = vrot.lane.b32.xlu0 %v2097, 78
      %v2670 = vpop.permute.xlu0 %2669
      %2671 = vrot.lane.b32.xlu0 %v2098, 78
      %v2672 = vpop.permute.xlu0 %2671
      %2673 = vrot.lane.b32.xlu0 %v2099, 78
      %v2674 = vpop.permute.xlu0 %2673
      %2675 = vrot.lane.b32.xlu0 %v2100, 78
      %v2676 = vpop.permute.xlu0 %2675
      %2677 = vrot.lane.b32.xlu0 %v2117, 78
      %v2678 = vpop.permute.xlu0 %2677
      %2679 = vrot.lane.b32.xlu0 %v2119, 78
      %v2680 = vpop.permute.xlu0 %2679
      %2681 = vrot.lane.b32.xlu0 %v2121, 78
      %v2682 = vpop.permute.xlu0 %2681
      %2683 = vrot.lane.b32.xlu0 %v2123, 78
      %v2684 = vpop.permute.xlu0 %2683
      %v2685 = vsel %vm2124, %v2670, 0
      %v2687 = vsel %vm2124, %v2672, 0
      %v2689 = vsel %vm2124, %v2674, 0
      %v2691 = vsel %vm2124, %v2676, 0
      %v2693 = vsel %vm2124, %v2678, 0
      %v2695 = vsel %vm2124, %v2680, 0
      %v2697 = vsel %vm2124, %v2682, 0
      %v2699 = vsel %vm2124, %v2684, 0
      %2701 = vmatprep.subr.mxu0 0.0
      %2702 = vmatpush1.xpose.msra.mxu0 %v2693
      %2703 = vmatprep.subr.mxu0 0.0
      %2704 = vmatpush1.xpose.msra.mxu0 %v2695
      %2705 = vmatprep.subr.mxu0 0.0
      %2706 = vmatpush1.xpose.msra.mxu0 %v2697
      %2707 = vmatprep.subr.mxu0 0.0
      %2708 = vmatpush1.xpose.msra.mxu0 %v2699
      %2709 = vmatprep.subr.mxu0 0.0
      %2710 = vmatpush1.xpose.msra.mxu0 0.0
      %2711 = vmatprep.subr.mxu0 0.0
      %2712 = vmatpush1.xpose.msra.mxu0 0.0
      %2713 = vmatprep.subr.mxu0 0.0
      %2714 = vmatpush1.xpose.msra.mxu0 0.0
      %2715 = vmatprep.subr.mxu0 0.0
      %2716 = vmatpush1.xpose.msra.mxu0 0.0
      %2717 = vmatprep.subr.mxu0 0.0
      %2718 = vmatpush1.xpose.msra.mxu0 0.0
      %2719 = vmatprep.subr.mxu0 0.0
      %2720 = vmatpush1.xpose.msra.mxu0 0.0
      %2721 = vmatprep.subr.mxu0 0.0
      %2722 = vmatpush1.xpose.msra.mxu0 0.0
      %2723 = vmatprep.subr.mxu0 0.0
      %2724 = vmatpush1.xpose.msra.mxu0 0.0
      %2725 = vmatprep.subr.mxu0 0.0
      %2726 = vmatpush1.xpose.msra.mxu0 0.0
      %2727 = vmatprep.subr.mxu0 0.0
      %2728 = vmatpush1.xpose.msra.mxu0 0.0
      %2729 = vmatprep.subr.mxu0 0.0
      %2730 = vmatpush1.xpose.msra.mxu0 0.0
      %2731 = vmatprep.subr.mxu0 0.0
      %2732 = vmatpush1.xpose.msra.mxu0 0.0
      %2733 = vmatprep.subr.mxu0 0.0
      %2734 = vmatpush1.xpose.msra.mxu0 0.0
      %2735 = vmatprep.subr.mxu0 0.0
      %2736 = vmatpush1.xpose.msra.mxu0 0.0
      %2737 = vmatprep.subr.mxu0 0.0
      %2738 = vmatpush1.xpose.msra.mxu0 0.0
      %2739 = vmatprep.subr.mxu0 0.0
      %2740 = vmatpush1.xpose.msra.mxu0 0.0
      %2741 = vmatprep.subr.mxu0 0.0
      %2742 = vmatpush1.xpose.msra.mxu0 0.0
      %2743 = vmatprep.subr.mxu0 0.0
      %2744 = vmatpush1.xpose.msra.mxu0 0.0
      %2745 = vmatprep.subr.mxu0 0.0
      %2746 = vmatpush1.xpose.msra.mxu0 0.0
      %2747 = vmatprep.subr.mxu0 0.0
      %2748 = vmatpush1.xpose.msra.mxu0 0.0
      %2749 = vmatprep.subr.mxu0 0.0
      %2750 = vmatpush1.xpose.msra.mxu0 0.0
      %2751 = vmatprep.subr.mxu0 0.0
      %2752 = vmatpush1.xpose.msra.mxu0 0.0
      %2753 = vmatprep.subr.mxu0 0.0
      %2754 = vmatpush1.xpose.msra.mxu0 0.0
      %2755 = vmatprep.subr.mxu0 0.0
      %2756 = vmatpush1.xpose.msra.mxu0 0.0
      %2757 = vmatprep.subr.mxu0 0.0
      %2758 = vmatpush1.xpose.msra.mxu0 0.0
      %2759 = vmatprep.subr.mxu0 0.0
      %2760 = vmatpush1.xpose.msra.mxu0 0.0
      %2761 = vmatprep.subr.mxu0 0.0
      %2762 = vmatpush1.xpose.msra.mxu0 0.0
      %2763 = vmatprep.subr.mxu0 0.0
      %2764 = vmatpush1.xpose.msra.mxu0 0.0
      %2765 = vmatprep.mubr.f32.mxu0 0.0
      %2766 = vmatmul.mubr.f32.gmra.mrb[0].mxu0 %v2685
      %v2767 = vpop.f32.mrb[0].mxu0
      %v2768 = vadd.f32 0.0, %v2767
      %v2769 = vpop.f32.mrb[0].mxu0
      %2770 = vmatprep.mubr.f32.mxu0 0.0
      %2771 = vmatmul.mubr.f32.gmra.mrb[0].mxu0 %v2687
      %v2772 = vpop.f32.mrb[0].mxu0
      %v2773 = vadd.f32 0.0, %v2772
      %v2774 = vpop.f32.mrb[0].mxu0
      %2775 = vmatprep.mubr.f32.mxu0 0.0
      %2776 = vmatmul.mubr.f32.gmra.mrb[0].mxu0 %v2689
      %v2777 = vpop.f32.mrb[0].mxu0
      %v2778 = vadd.f32 0.0, %v2777
      %v2779 = vpop.f32.mrb[0].mxu0
      %2780 = vmatprep.mubr.f32.mxu0 0.0
      %2781 = vmatmul.mubr.f32.gmra.mrb[0].mxu0 %v2691
      %v2782 = vpop.f32.mrb[0].mxu0
      %v2783 = vadd.f32 0.0, %v2782
      %v2784 = vpop.f32.mrb[0].mxu0
      %2785 = vdwg.mxu0
      %v2786 = vmul.f32 %v2768, 0.2
      %v2787 = vmul.f32 %v2773, 0.2
      %v2788 = vmul.f32 %v2778, 0.2
      %v2789 = vmul.f32 %v2783, 0.2
      %v2790 = vsel %vm702, %v2786, -inf
      %2791 = vmax.xlane.f32.xlu0 %v2790
      %v2792 = vpop.xlane.xlu0 %2791
      %v2793 = vsel %vm702, %v2787, -inf
      %2794 = vmax.xlane.f32.xlu0 %v2793
      %v2795 = vpop.xlane.xlu0 %2794
      %v2796 = vsel %vm702, %v2788, -inf
      %2797 = vmax.xlane.f32.xlu0 %v2796
      %v2798 = vpop.xlane.xlu0 %2797
      %v2799 = vsel %vm2242, %v2789, -inf
      %2800 = vmax.xlane.f32.xlu0 %v2799
      %v2801 = vpop.xlane.xlu0 %2800
      %v2802 = vsub.f32 %v2786, %v2792
      %v2803 = vsub.f32 %v2787, %v2795
      %v2804 = vsub.f32 %v2788, %v2798
      %v2805 = vsub.f32 %v2789, %v2801
      %v2806 = vmul.f32 %v2802, 1.442695
      %v2807 = vpow.pop %v2806
      %v2808 = vmul.f32 %v2803, 1.442695
      %v2809 = vpow.pop %v2808
      %v2810 = vmul.f32 %v2804, 1.442695
      %v2811 = vpow.pop %v2810
      %v2812 = vmul.f32 %v2805, 1.442695
      %v2813 = vpow.pop %v2812
      %v2814 = vsel %vm702, %v2807, 0.0
      %2815 = vadd.xlane.f32.xlu0 %v2814
      %v2816 = vpop.xlane.xlu0 %2815
      %v2817 = vsel %vm702, %v2809, 0.0
      %2818 = vadd.xlane.f32.xlu0 %v2817
      %v2819 = vpop.xlane.xlu0 %2818
      %v2820 = vsel %vm702, %v2811, 0.0
      %2821 = vadd.xlane.f32.xlu0 %v2820
      %v2822 = vpop.xlane.xlu0 %2821
      %v2823 = vsel %vm2242, %v2813, 0.0
      %2824 = vadd.xlane.f32.xlu0 %v2823
      %v2825 = vpop.xlane.xlu0 %2824
      %v2826 = vrcp.pop %v2816
      %v2827 = vmul.f32 %v2807, %v2826
      %v2828 = vrcp.pop %v2819
      %v2829 = vmul.f32 %v2809, %v2828
      %v2830 = vrcp.pop %v2822
      %v2831 = vmul.f32 %v2811, %v2830
      %v2832 = vrcp.pop %v2825
      %v2833 = vmul.f32 %v2813, %v2832
      %2834 = vrot.lane.b32.xlu0 %v2285, 78
      %v2835 = vpop.permute.xlu0 %2834
      %2836 = vrot.lane.b32.xlu0 %v2287, 78
      %v2837 = vpop.permute.xlu0 %2836
      %2838 = vrot.lane.b32.xlu0 %v2289, 78
      %v2839 = vpop.permute.xlu0 %2838
      %2840 = vrot.lane.b32.xlu0 %v2291, 78
      %v2841 = vpop.permute.xlu0 %2840
      %v2846 = vsel %vm702, %v2827, 0
      %v2849 = vsel %vm702, %v2829, 0
      %v2852 = vsel %vm702, %v2831, 0
      %v2855 = vsel %vm702, %v2833, 0
      %v2857 = vsel %vm739, %v2841, 0
      %2859 = vmatprep.subr.mxu0 0.0
      %2860 = vmatpush1.msra.mxu0 %v2835
      %2861 = vmatprep.subr.mxu0 0.0
      %2862 = vmatpush1.msra.mxu0 %v2837
      %2863 = vmatprep.subr.mxu0 0.0
      %2864 = vmatpush1.msra.mxu0 %v2839
      %2865 = vmatprep.subr.mxu0 0.0
      %2866 = vmatpush1.msra.mxu0 %v2857
      %2867 = vmatprep.subr.mxu0 0.0
      %2868 = vmatpush1.msra.mxu0 0.0
      %2869 = vmatprep.subr.mxu0 0.0
      %2870 = vmatpush1.msra.mxu0 0.0
      %2871 = vmatprep.subr.mxu0 0.0
      %2872 = vmatpush1.msra.mxu0 0.0
      %2873 = vmatprep.subr.mxu0 0.0
      %2874 = vmatpush1.msra.mxu0 0.0
      %2875 = vmatprep.subr.mxu0 0.0
      %2876 = vmatpush1.msra.mxu0 0.0
      %2877 = vmatprep.subr.mxu0 0.0
      %2878 = vmatpush1.msra.mxu0 0.0
      %2879 = vmatprep.subr.mxu0 0.0
      %2880 = vmatpush1.msra.mxu0 0.0
      %2881 = vmatprep.subr.mxu0 0.0
      %2882 = vmatpush1.msra.mxu0 0.0
      %2883 = vmatprep.subr.mxu0 0.0
      %2884 = vmatpush1.msra.mxu0 0.0
      %2885 = vmatprep.subr.mxu0 0.0
      %2886 = vmatpush1.msra.mxu0 0.0
      %2887 = vmatprep.subr.mxu0 0.0
      %2888 = vmatpush1.msra.mxu0 0.0
      %2889 = vmatprep.subr.mxu0 0.0
      %2890 = vmatpush1.msra.mxu0 0.0
      %2891 = vmatprep.subr.mxu0 0.0
      %2892 = vmatpush1.msra.mxu0 0.0
      %2893 = vmatprep.subr.mxu0 0.0
      %2894 = vmatpush1.msra.mxu0 0.0
      %2895 = vmatprep.subr.mxu0 0.0
      %2896 = vmatpush1.msra.mxu0 0.0
      %2897 = vmatprep.subr.mxu0 0.0
      %2898 = vmatpush1.msra.mxu0 0.0
      %2899 = vmatprep.subr.mxu0 0.0
      %2900 = vmatpush1.msra.mxu0 0.0
      %2901 = vmatprep.subr.mxu0 0.0
      %2902 = vmatpush1.msra.mxu0 0.0
      %2903 = vmatprep.subr.mxu0 0.0
      %2904 = vmatpush1.msra.mxu0 0.0
      %2905 = vmatprep.subr.mxu0 0.0
      %2906 = vmatpush1.msra.mxu0 0.0
      %2907 = vmatprep.subr.mxu0 0.0
      %2908 = vmatpush1.msra.mxu0 0.0
      %2909 = vmatprep.subr.mxu0 0.0
      %2910 = vmatpush1.msra.mxu0 0.0
      %2911 = vmatprep.subr.mxu0 0.0
      %2912 = vmatpush1.msra.mxu0 0.0
      %2913 = vmatprep.subr.mxu0 0.0
      %2914 = vmatpush1.msra.mxu0 0.0
      %2915 = vmatprep.subr.mxu0 0.0
      %2916 = vmatpush1.msra.mxu0 0.0
      %2917 = vmatprep.subr.mxu0 0.0
      %2918 = vmatpush1.msra.mxu0 0.0
      %2919 = vmatprep.subr.mxu0 0.0
      %2920 = vmatpush1.msra.mxu0 0.0
      %2921 = vmatprep.subr.mxu0 0.0
      %2922 = vmatpush1.msra.mxu0 0.0
      %2923 = vmatprep.mubr.f32.mxu0 0.0
      %2924 = vmatmul.mubr.f32.gmra.mrb[0].mxu0 %v2846
      %v2925 = vpop.f32.mrb[0].mxu0
      %v2926 = vadd.f32 0.0, %v2925
      %v2927 = vpop.f32.mrb[0].mxu0
      %2928 = vmatprep.mubr.f32.mxu0 0.0
      %2929 = vmatmul.mubr.f32.gmra.mrb[0].mxu0 %v2849
      %v2930 = vpop.f32.mrb[0].mxu0
      %v2931 = vadd.f32 0.0, %v2930
      %v2932 = vpop.f32.mrb[0].mxu0
      %2933 = vmatprep.mubr.f32.mxu0 0.0
      %2934 = vmatmul.mubr.f32.gmra.mrb[0].mxu0 %v2852
      %v2935 = vpop.f32.mrb[0].mxu0
      %v2936 = vadd.f32 0.0, %v2935
      %v2937 = vpop.f32.mrb[0].mxu0
      %2938 = vmatprep.mubr.f32.mxu0 0.0
      %2939 = vmatmul.mubr.f32.gmra.mrb[0].mxu0 %v2855
      %v2940 = vpop.f32.mrb[0].mxu0
      %v2941 = vadd.f32 0.0, %v2940
      %v2942 = vpop.f32.mrb[0].mxu0
      %2943 = vdwg.mxu0
      %2944 = vrot.lane.b32.xlu0 %v2097, 53
      %v2945 = vpop.permute.xlu0 %2944
      %2946 = vrot.lane.b32.xlu0 %v2098, 53
      %v2947 = vpop.permute.xlu0 %2946
      %2948 = vrot.lane.b32.xlu0 %v2099, 53
      %v2949 = vpop.permute.xlu0 %2948
      %2950 = vrot.lane.b32.xlu0 %v2100, 53
      %v2951 = vpop.permute.xlu0 %2950
      %2952 = vrot.lane.b32.xlu0 %v2117, 53
      %v2953 = vpop.permute.xlu0 %2952
      %2954 = vrot.lane.b32.xlu0 %v2119, 53
      %v2955 = vpop.permute.xlu0 %2954
      %2956 = vrot.lane.b32.xlu0 %v2121, 53
      %v2957 = vpop.permute.xlu0 %2956
      %2958 = vrot.lane.b32.xlu0 %v2123, 53
      %v2959 = vpop.permute.xlu0 %2958
      %v2960 = vsel %vm2124, %v2945, 0
      %v2962 = vsel %vm2124, %v2947, 0
      %v2964 = vsel %vm2124, %v2949, 0
      %v2966 = vsel %vm2124, %v2951, 0
      %v2968 = vsel %vm2124, %v2953, 0
      %v2970 = vsel %vm2124, %v2955, 0
      %v2972 = vsel %vm2124, %v2957, 0
      %v2974 = vsel %vm2124, %v2959, 0
      %2976 = vmatprep.subr.mxu0 0.0
      %2977 = vmatpush1.xpose.msra.mxu0 %v2968
      %2978 = vmatprep.subr.mxu0 0.0
      %2979 = vmatpush1.xpose.msra.mxu0 %v2970
      %2980 = vmatprep.subr.mxu0 0.0
      %2981 = vmatpush1.xpose.msra.mxu0 %v2972
      %2982 = vmatprep.subr.mxu0 0.0
      %2983 = vmatpush1.xpose.msra.mxu0 %v2974
      %2984 = vmatprep.subr.mxu0 0.0
      %2985 = vmatpush1.xpose.msra.mxu0 0.0
      %2986 = vmatprep.subr.mxu0 0.0
      %2987 = vmatpush1.xpose.msra.mxu0 0.0
      %2988 = vmatprep.subr.mxu0 0.0
      %2989 = vmatpush1.xpose.msra.mxu0 0.0
      %2990 = vmatprep.subr.mxu0 0.0
      %2991 = vmatpush1.xpose.msra.mxu0 0.0
      %2992 = vmatprep.subr.mxu0 0.0
      %2993 = vmatpush1.xpose.msra.mxu0 0.0
      %2994 = vmatprep.subr.mxu0 0.0
      %2995 = vmatpush1.xpose.msra.mxu0 0.0
      %2996 = vmatprep.subr.mxu0 0.0
      %2997 = vmatpush1.xpose.msra.mxu0 0.0
      %2998 = vmatprep.subr.mxu0 0.0
      %2999 = vmatpush1.xpose.msra.mxu0 0.0
      %3000 = vmatprep.subr.mxu0 0.0
      %3001 = vmatpush1.xpose.msra.mxu0 0.0
      %3002 = vmatprep.subr.mxu0 0.0
      %3003 = vmatpush1.xpose.msra.mxu0 0.0
      %3004 = vmatprep.subr.mxu0 0.0
      %3005 = vmatpush1.xpose.msra.mxu0 0.0
      %3006 = vmatprep.subr.mxu0 0.0
      %3007 = vmatpush1.xpose.msra.mxu0 0.0
      %3008 = vmatprep.subr.mxu0 0.0
      %3009 = vmatpush1.xpose.msra.mxu0 0.0
      %3010 = vmatprep.subr.mxu0 0.0
      %3011 = vmatpush1.xpose.msra.mxu0 0.0
      %3012 = vmatprep.subr.mxu0 0.0
      %3013 = vmatpush1.xpose.msra.mxu0 0.0
      %3014 = vmatprep.subr.mxu0 0.0
      %3015 = vmatpush1.xpose.msra.mxu0 0.0
      %3016 = vmatprep.subr.mxu0 0.0
      %3017 = vmatpush1.xpose.msra.mxu0 0.0
      %3018 = vmatprep.subr.mxu0 0.0
      %3019 = vmatpush1.xpose.msra.mxu0 0.0
      %3020 = vmatprep.subr.mxu0 0.0
      %3021 = vmatpush1.xpose.msra.mxu0 0.0
      %3022 = vmatprep.subr.mxu0 0.0
      %3023 = vmatpush1.xpose.msra.mxu0 0.0
      %3024 = vmatprep.subr.mxu0 0.0
      %3025 = vmatpush1.xpose.msra.mxu0 0.0
      %3026 = vmatprep.subr.mxu0 0.0
      %3027 = vmatpush1.xpose.msra.mxu0 0.0
      %3028 = vmatprep.subr.mxu0 0.0
      %3029 = vmatpush1.xpose.msra.mxu0 0.0
      %3030 = vmatprep.subr.mxu0 0.0
      %3031 = vmatpush1.xpose.msra.mxu0 0.0
      %3032 = vmatprep.subr.mxu0 0.0
      %3033 = vmatpush1.xpose.msra.mxu0 0.0
      %3034 = vmatprep.subr.mxu0 0.0
      %3035 = vmatpush1.xpose.msra.mxu0 0.0
      %3036 = vmatprep.subr.mxu0 0.0
      %3037 = vmatpush1.xpose.msra.mxu0 0.0
      %3038 = vmatprep.subr.mxu0 0.0
      %3039 = vmatpush1.xpose.msra.mxu0 0.0
      %3040 = vmatprep.mubr.f32.mxu0 0.0
      %3041 = vmatmul.mubr.f32.gmra.mrb[0].mxu0 %v2960
      %v3042 = vpop.f32.mrb[0].mxu0
      %v3043 = vadd.f32 0.0, %v3042
      %v3044 = vpop.f32.mrb[0].mxu0
      %3045 = vmatprep.mubr.f32.mxu0 0.0
      %3046 = vmatmul.mubr.f32.gmra.mrb[0].mxu0 %v2962
      %v3047 = vpop.f32.mrb[0].mxu0
      %v3048 = vadd.f32 0.0, %v3047
      %v3049 = vpop.f32.mrb[0].mxu0
      %3050 = vmatprep.mubr.f32.mxu0 0.0
      %3051 = vmatmul.mubr.f32.gmra.mrb[0].mxu0 %v2964
      %v3052 = vpop.f32.mrb[0].mxu0
      %v3053 = vadd.f32 0.0, %v3052
      %v3054 = vpop.f32.mrb[0].mxu0
      %3055 = vmatprep.mubr.f32.mxu0 0.0
      %3056 = vmatmul.mubr.f32.gmra.mrb[0].mxu0 %v2966
      %v3057 = vpop.f32.mrb[0].mxu0
      %v3058 = vadd.f32 0.0, %v3057
      %v3059 = vpop.f32.mrb[0].mxu0
      %3060 = vdwg.mxu0
      %v3061 = vmul.f32 %v3043, 0.2
      %v3062 = vmul.f32 %v3048, 0.2
      %v3063 = vmul.f32 %v3053, 0.2
      %v3064 = vmul.f32 %v3058, 0.2
      %v3065 = vsel %vm702, %v3061, -inf
      %3066 = vmax.xlane.f32.xlu0 %v3065
      %v3067 = vpop.xlane.xlu0 %3066
      %v3068 = vsel %vm702, %v3062, -inf
      %3069 = vmax.xlane.f32.xlu0 %v3068
      %v3070 = vpop.xlane.xlu0 %3069
      %v3071 = vsel %vm702, %v3063, -inf
      %3072 = vmax.xlane.f32.xlu0 %v3071
      %v3073 = vpop.xlane.xlu0 %3072
      %v3074 = vsel %vm2242, %v3064, -inf
      %3075 = vmax.xlane.f32.xlu0 %v3074
      %v3076 = vpop.xlane.xlu0 %3075
      %v3077 = vsub.f32 %v3061, %v3067
      %v3078 = vsub.f32 %v3062, %v3070
      %v3079 = vsub.f32 %v3063, %v3073
      %v3080 = vsub.f32 %v3064, %v3076
      %v3081 = vmul.f32 %v3077, 1.442695
      %v3082 = vpow.pop %v3081
      %v3083 = vmul.f32 %v3078, 1.442695
      %v3084 = vpow.pop %v3083
      %v3085 = vmul.f32 %v3079, 1.442695
      %v3086 = vpow.pop %v3085
      %v3087 = vmul.f32 %v3080, 1.442695
      %v3088 = vpow.pop %v3087
      %v3089 = vsel %vm702, %v3082, 0.0
      %3090 = vadd.xlane.f32.xlu0 %v3089
      %v3091 = vpop.xlane.xlu0 %3090
      %v3092 = vsel %vm702, %v3084, 0.0
      %3093 = vadd.xlane.f32.xlu0 %v3092
      %v3094 = vpop.xlane.xlu0 %3093
      %v3095 = vsel %vm702, %v3086, 0.0
      %3096 = vadd.xlane.f32.xlu0 %v3095
      %v3097 = vpop.xlane.xlu0 %3096
      %v3098 = vsel %vm2242, %v3088, 0.0
      %3099 = vadd.xlane.f32.xlu0 %v3098
      %v3100 = vpop.xlane.xlu0 %3099
      %v3101 = vrcp.pop %v3091
      %v3102 = vmul.f32 %v3082, %v3101
      %v3103 = vrcp.pop %v3094
      %v3104 = vmul.f32 %v3084, %v3103
      %v3105 = vrcp.pop %v3097
      %v3106 = vmul.f32 %v3086, %v3105
      %v3107 = vrcp.pop %v3100
      %v3108 = vmul.f32 %v3088, %v3107
      %3109 = vrot.lane.b32.xlu0 %v2285, 53
      %v3110 = vpop.permute.xlu0 %3109
      %3111 = vrot.lane.b32.xlu0 %v2287, 53
      %v3112 = vpop.permute.xlu0 %3111
      %3113 = vrot.lane.b32.xlu0 %v2289, 53
      %v3114 = vpop.permute.xlu0 %3113
      %3115 = vrot.lane.b32.xlu0 %v2291, 53
      %v3116 = vpop.permute.xlu0 %3115
      %v3121 = vsel %vm702, %v3102, 0
      %v3124 = vsel %vm702, %v3104, 0
      %v3127 = vsel %vm702, %v3106, 0
      %v3130 = vsel %vm702, %v3108, 0
      %v3132 = vsel %vm739, %v3116, 0
      %3134 = vmatprep.subr.mxu0 0.0
      %3135 = vmatpush1.msra.mxu0 %v3110
      %3136 = vmatprep.subr.mxu0 0.0
      %3137 = vmatpush1.msra.mxu0 %v3112
      %3138 = vmatprep.subr.mxu0 0.0
      %3139 = vmatpush1.msra.mxu0 %v3114
      %3140 = vmatprep.subr.mxu0 0.0
      %3141 = vmatpush1.msra.mxu0 %v3132
      %3142 = vmatprep.subr.mxu0 0.0
      %3143 = vmatpush1.msra.mxu0 0.0
      %3144 = vmatprep.subr.mxu0 0.0
      %3145 = vmatpush1.msra.mxu0 0.0
      %3146 = vmatprep.subr.mxu0 0.0
      %3147 = vmatpush1.msra.mxu0 0.0
      %3148 = vmatprep.subr.mxu0 0.0
      %3149 = vmatpush1.msra.mxu0 0.0
      %3150 = vmatprep.subr.mxu0 0.0
      %3151 = vmatpush1.msra.mxu0 0.0
      %3152 = vmatprep.subr.mxu0 0.0
      %3153 = vmatpush1.msra.mxu0 0.0
      %3154 = vmatprep.subr.mxu0 0.0
      %3155 = vmatpush1.msra.mxu0 0.0
      %3156 = vmatprep.subr.mxu0 0.0
      %3157 = vmatpush1.msra.mxu0 0.0
      %3158 = vmatprep.subr.mxu0 0.0
      %3159 = vmatpush1.msra.mxu0 0.0
      %3160 = vmatprep.subr.mxu0 0.0
      %3161 = vmatpush1.msra.mxu0 0.0
      %3162 = vmatprep.subr.mxu0 0.0
      %3163 = vmatpush1.msra.mxu0 0.0
      %3164 = vmatprep.subr.mxu0 0.0
      %3165 = vmatpush1.msra.mxu0 0.0
      %3166 = vmatprep.subr.mxu0 0.0
      %3167 = vmatpush1.msra.mxu0 0.0
      %3168 = vmatprep.subr.mxu0 0.0
      %3169 = vmatpush1.msra.mxu0 0.0
      %3170 = vmatprep.subr.mxu0 0.0
      %3171 = vmatpush1.msra.mxu0 0.0
      %3172 = vmatprep.subr.mxu0 0.0
      %3173 = vmatpush1.msra.mxu0 0.0
      %3174 = vmatprep.subr.mxu0 0.0
      %3175 = vmatpush1.msra.mxu0 0.0
      %3176 = vmatprep.subr.mxu0 0.0
      %3177 = vmatpush1.msra.mxu0 0.0
      %3178 = vmatprep.subr.mxu0 0.0
      %3179 = vmatpush1.msra.mxu0 0.0
      %3180 = vmatprep.subr.mxu0 0.0
      %3181 = vmatpush1.msra.mxu0 0.0
      %3182 = vmatprep.subr.mxu0 0.0
      %3183 = vmatpush1.msra.mxu0 0.0
      %3184 = vmatprep.subr.mxu0 0.0
      %3185 = vmatpush1.msra.mxu0 0.0
      %3186 = vmatprep.subr.mxu0 0.0
      %3187 = vmatpush1.msra.mxu0 0.0
      %3188 = vmatprep.subr.mxu0 0.0
      %3189 = vmatpush1.msra.mxu0 0.0
      %3190 = vmatprep.subr.mxu0 0.0
      %3191 = vmatpush1.msra.mxu0 0.0
      %3192 = vmatprep.subr.mxu0 0.0
      %3193 = vmatpush1.msra.mxu0 0.0
      %3194 = vmatprep.subr.mxu0 0.0
      %3195 = vmatpush1.msra.mxu0 0.0
      %3196 = vmatprep.subr.mxu0 0.0
      %3197 = vmatpush1.msra.mxu0 0.0
      %3198 = vmatprep.mubr.f32.mxu0 0.0
      %3199 = vmatmul.mubr.f32.gmra.mrb[0].mxu0 %v3121
      %v3200 = vpop.f32.mrb[0].mxu0
      %v3201 = vadd.f32 0.0, %v3200
      %v3202 = vpop.f32.mrb[0].mxu0
      %3203 = vmatprep.mubr.f32.mxu0 0.0
      %3204 = vmatmul.mubr.f32.gmra.mrb[0].mxu0 %v3124
      %v3205 = vpop.f32.mrb[0].mxu0
      %v3206 = vadd.f32 0.0, %v3205
      %v3207 = vpop.f32.mrb[0].mxu0
      %3208 = vmatprep.mubr.f32.mxu0 0.0
      %3209 = vmatmul.mubr.f32.gmra.mrb[0].mxu0 %v3127
      %v3210 = vpop.f32.mrb[0].mxu0
      %v3211 = vadd.f32 0.0, %v3210
      %v3212 = vpop.f32.mrb[0].mxu0
      %3213 = vmatprep.mubr.f32.mxu0 0.0
      %3214 = vmatmul.mubr.f32.gmra.mrb[0].mxu0 %v3130
      %v3215 = vpop.f32.mrb[0].mxu0
      %v3216 = vadd.f32 0.0, %v3215
      %v3217 = vpop.f32.mrb[0].mxu0
      %3218 = vdwg.mxu0
      %3223 = vrot.lane.b32.xlu0 %v2651, 25
      %v3224 = vpop.permute.xlu0 %3223
      %3225 = vrot.lane.b32.xlu0 %v2656, 25
      %v3226 = vpop.permute.xlu0 %3225
      %3227 = vrot.lane.b32.xlu0 %v2661, 25
      %v3228 = vpop.permute.xlu0 %3227
      %3229 = vrot.lane.b32.xlu0 %v2666, 25
      %v3230 = vpop.permute.xlu0 %3229
      %3239 = vrot.lane.b32.xlu0 %v2926, 50
      %v3240 = vpop.permute.xlu0 %3239
      %3241 = vrot.lane.b32.xlu0 %v2931, 50
      %v3242 = vpop.permute.xlu0 %3241
      %3243 = vrot.lane.b32.xlu0 %v2936, 50
      %v3244 = vpop.permute.xlu0 %3243
      %3245 = vrot.lane.b32.xlu0 %v2941, 50
      %v3246 = vpop.permute.xlu0 %3245
      %3255 = vrot.lane.b32.xlu0 %v3201, 75
      %v3256 = vpop.permute.xlu0 %3255
      %3257 = vrot.lane.b32.xlu0 %v3206, 75
      %v3258 = vpop.permute.xlu0 %3257
      %3259 = vrot.lane.b32.xlu0 %v3211, 75
      %v3260 = vpop.permute.xlu0 %3259
      %3261 = vrot.lane.b32.xlu0 %v3216, 75
      %v3262 = vpop.permute.xlu0 %3261
      %v3267 = vsel %vm2124, %v2376, %v3224
      %v3268 = vsel %vm2124, %v2381, %v3226
      %v3269 = vsel %vm2124, %v2386, %v3228
      %v3270 = vsel %vm2124, %v2391, %v3230
      %vm3271 = vcmask 408576
      %v3272 = vsel %vm3271, %v3267, %v3240
      %v3273 = vsel %vm3271, %v3268, %v3242
      %v3274 = vsel %vm3271, %v3269, %v3244
      %v3275 = vsel %vm3271, %v3270, %v3246
      %vm3276 = vcmask 613376
      %v3277 = vsel %vm3276, %v3272, %v3256
      %v3278 = vsel %vm3276, %v3273, %v3258
      %v3279 = vsel %vm3276, %v3274, %v3260
      %v3280 = vsel %vm3276, %v3275, %v3262
      %v3281 = vld [vmem:[%s592] sm:$0xff]
      %v3282 = vld [vmem:[%s592 + $0x8] sm:$0xff]
      %v3283 = vld [vmem:[%s592 + $0x10] sm:$0xff]
      %v3284 = vld [vmem:[%s592 + $0x18] sm:$0xff]
      %v3285 = vld [vmem:[%s592 + $0x20] sm:$0xff]
      %v3286 = vld [vmem:[%s592 + $0x28] sm:$0xff]
      %v3287 = vld [vmem:[%s592 + $0x30] sm:$0xff]
      %v3288 = vld [vmem:[%s592 + $0x38] sm:$0xff]
      %v3289 = vld [vmem:[%s592 + $0x40] sm:$0xff]
      %v3290 = vld [vmem:[%s592 + $0x48] sm:$0xff]
      %v3291 = vld [vmem:[%s592 + $0x50] sm:$0xff]
      %v3292 = vld [vmem:[%s592 + $0x58] sm:$0xff]
      %v3293 = vld [vmem:[%s592 + $0x60] sm:$0xf]
      %v3294 = vld [vmem:[%s595] sm:$0x1]
      %v3296 = vlaneseq
      %v3297 = vshrl.u32 %v3296, 7
      %v3298 = vsub.s32 0, %v3297
      %v3299 = vrot.slane %v3294, %v3298
      %vm3301 = vcmask 818176
      %v3303 = vsel %vm3301, %v3277, 0
      %v3306 = vsel %vm3301, %v3278, 0
      %v3309 = vsel %vm3301, %v3279, 0
      %v3312 = vsel %vm3301, %v3280, 0
      %v3315 = vsel %vm2282, %v3293, 0
      %3317 = vmatprep.subr.mxu0 0.0
      %3318 = vmatpush1.msra.mxu0 %v3281
      %3319 = vmatprep.subr.mxu0 0.0
      %3320 = vmatpush1.msra.mxu0 %v3282
      %3321 = vmatprep.subr.mxu0 0.0
      %3322 = vmatpush1.msra.mxu0 %v3283
      %3323 = vmatprep.subr.mxu0 0.0
      %3324 = vmatpush1.msra.mxu0 %v3284
      %3325 = vmatprep.subr.mxu0 0.0
      %3326 = vmatpush1.msra.mxu0 %v3285
      %3327 = vmatprep.subr.mxu0 0.0
      %3328 = vmatpush1.msra.mxu0 %v3286
      %3329 = vmatprep.subr.mxu0 0.0
      %3330 = vmatpush1.msra.mxu0 %v3287
      %3331 = vmatprep.subr.mxu0 0.0
      %3332 = vmatpush1.msra.mxu0 %v3288
      %3333 = vmatprep.subr.mxu0 0.0
      %3334 = vmatpush1.msra.mxu0 %v3289
      %3335 = vmatprep.subr.mxu0 0.0
      %3336 = vmatpush1.msra.mxu0 %v3290
      %3337 = vmatprep.subr.mxu0 0.0
      %3338 = vmatpush1.msra.mxu0 %v3291
      %3339 = vmatprep.subr.mxu0 0.0
      %3340 = vmatpush1.msra.mxu0 %v3292
      %3341 = vmatprep.subr.mxu0 0.0
      %3342 = vmatpush1.msra.mxu0 %v3315
      %3343 = vmatprep.subr.mxu0 0.0
      %3344 = vmatpush1.msra.mxu0 0.0
      %3345 = vmatprep.subr.mxu0 0.0
      %3346 = vmatpush1.msra.mxu0 0.0
      %3347 = vmatprep.subr.mxu0 0.0
      %3348 = vmatpush1.msra.mxu0 0.0
      %3349 = vmatprep.subr.mxu0 0.0
      %3350 = vmatpush1.msra.mxu0 0.0
      %3351 = vmatprep.subr.mxu0 0.0
      %3352 = vmatpush1.msra.mxu0 0.0
      %3353 = vmatprep.subr.mxu0 0.0
      %3354 = vmatpush1.msra.mxu0 0.0
      %3355 = vmatprep.subr.mxu0 0.0
      %3356 = vmatpush1.msra.mxu0 0.0
      %3357 = vmatprep.subr.mxu0 0.0
      %3358 = vmatpush1.msra.mxu0 0.0
      %3359 = vmatprep.subr.mxu0 0.0
      %3360 = vmatpush1.msra.mxu0 0.0
      %3361 = vmatprep.subr.mxu0 0.0
      %3362 = vmatpush1.msra.mxu0 0.0
      %3363 = vmatprep.subr.mxu0 0.0
      %3364 = vmatpush1.msra.mxu0 0.0
      %3365 = vmatprep.subr.mxu0 0.0
      %3366 = vmatpush1.msra.mxu0 0.0
      %3367 = vmatprep.subr.mxu0 0.0
      %3368 = vmatpush1.msra.mxu0 0.0
      %3369 = vmatprep.subr.mxu0 0.0
      %3370 = vmatpush1.msra.mxu0 0.0
      %3371 = vmatprep.subr.mxu0 0.0
      %3372 = vmatpush1.msra.mxu0 0.0
      %3373 = vmatprep.subr.mxu0 0.0
      %3374 = vmatpush1.msra.mxu0 0.0
      %3375 = vmatprep.subr.mxu0 0.0
      %3376 = vmatpush1.msra.mxu0 0.0
      %3377 = vmatprep.subr.mxu0 0.0
      %3378 = vmatpush1.msra.mxu0 0.0
      %3379 = vmatprep.subr.mxu0 0.0
      %3380 = vmatpush1.msra.mxu0 0.0
      %3381 = vmatprep.mubr.f32.mxu0 0.0
      %3382 = vmatmul.mubr.f32.gmra.mrb[0].mxu0 %v3303
      %v3383 = vpop.f32.mrb[0].mxu0
      %v3384 = vadd.f32 %v3299, %v3383
      %v3385 = vpop.f32.mrb[0].mxu0
      %3386 = vmatprep.mubr.f32.mxu0 0.0
      %3387 = vmatmul.mubr.f32.gmra.mrb[0].mxu0 %v3306
      %v3388 = vpop.f32.mrb[0].mxu0
      %v3389 = vadd.f32 %v3299, %v3388
      %v3390 = vpop.f32.mrb[0].mxu0
      %3391 = vmatprep.mubr.f32.mxu0 0.0
      %3392 = vmatmul.mubr.f32.gmra.mrb[0].mxu0 %v3309
      %v3393 = vpop.f32.mrb[0].mxu0
      %v3394 = vadd.f32 %v3299, %v3393
      %v3395 = vpop.f32.mrb[0].mxu0
      %3396 = vmatprep.mubr.f32.mxu0 0.0
      %3397 = vmatmul.mubr.f32.gmra.mrb[0].mxu0 %v3312
      %v3398 = vpop.f32.mrb[0].mxu0
      %v3399 = vadd.f32 %v3299, %v3398
      %v3400 = vpop.f32.mrb[0].mxu0
      %3401 = vdwg.mxu0
      %v3402 = vadd.f32 %v2097, %v3384
      %v3403 = vadd.f32 %v2098, %v3389
      %v3404 = vadd.f32 %v2099, %v3394
      %v3405 = vadd.f32 %v2100, %v3399
      %v3406 = vld [vmem:[%s598] sm:$0x1]
      %v3407 = vld [vmem:[%s601] sm:$0x1]
      %v3408 = vsel %vm3301, %v3402, 0.0
      %3409 = vadd.xlane.f32.xlu0 %v3408
      %v3410 = vpop.xlane.xlu0 %3409
      %v3411 = vsel %vm3301, %v3403, 0.0
      %3412 = vadd.xlane.f32.xlu0 %v3411
      %v3413 = vpop.xlane.xlu0 %3412
      %v3414 = vsel %vm3301, %v3404, 0.0
      %3415 = vadd.xlane.f32.xlu0 %v3414
      %v3416 = vpop.xlane.xlu0 %3415
      %vm3417 = vcmask 816128
      %v3418 = vsel %vm3417, %v3405, 0.0
      %3419 = vadd.xlane.f32.xlu0 %v3418
      %v3420 = vpop.xlane.xlu0 %3419
      %v3421 = vrcp.pop 100.0
      %v3422 = vmul.f32 %v3410, %v3421
      %v3423 = vmul.f32 %v3413, %v3421
      %v3424 = vmul.f32 %v3416, %v3421
      %v3425 = vmul.f32 %v3420, %v3421
      %v3426 = vsub.f32 %v3402, %v3422
      %v3427 = vsub.f32 %v3403, %v3423
      %v3428 = vsub.f32 %v3404, %v3424
      %v3429 = vsub.f32 %v3405, %v3425
      %v3430 = vmul.f32 %v3426, %v3426
      %v3431 = vmul.f32 %v3427, %v3427
      %v3432 = vmul.f32 %v3428, %v3428
      %v3433 = vmul.f32 %v3429, %v3429
      %v3434 = vsel %vm3301, %v3430, 0.0
      %3435 = vadd.xlane.f32.xlu0 %v3434
      %v3436 = vpop.xlane.xlu0 %3435
      %v3437 = vsel %vm3301, %v3431, 0.0
      %3438 = vadd.xlane.f32.xlu0 %v3437
      %v3439 = vpop.xlane.xlu0 %3438
      %v3440 = vsel %vm3301, %v3432, 0.0
      %3441 = vadd.xlane.f32.xlu0 %v3440
      %v3442 = vpop.xlane.xlu0 %3441
      %v3443 = vsel %vm3417, %v3433, 0.0
      %3444 = vadd.xlane.f32.xlu0 %v3443
      %v3445 = vpop.xlane.xlu0 %3444
      %v3446 = vrcp.pop 99.0
      %v3447 = vmul.f32 %v3436, %v3446
      %v3448 = vmul.f32 %v3439, %v3446
      %v3449 = vmul.f32 %v3442, %v3446
      %v3450 = vmul.f32 %v3445, %v3446
      %v3452 = vlaneseq
      %v3453 = vshrl.u32 %v3452, 7
      %v3454 = vsub.s32 0, %v3453
      %v3455 = vrot.slane %v3406, %v3454
      %v3457 = vmul.f32 %v3455, %v3426
      %v3458 = vmul.f32 %v3455, %v3427
      %v3459 = vmul.f32 %v3455, %v3428
      %v3460 = vmul.f32 %v3455, %v3429
      %v3461 = vrsqrt.pop %v3447
      %v3462 = vmul.f32 %v3447, %v3461
      %vm3463 = vcmp.eq.f32.partialorder %v3447, inf
      %v3464 = vsel %vm3463, %v3447, %v3462
      %vm3465 = vcmp.eq.f32.partialorder %v3447, 0.0
      %v3466 = vand.u32 %v3447, 2147483648
      %v3467 = vsel %vm3465, %v3466, %v3464
      %v3468 = vrsqrt.pop %v3448
      %v3469 = vmul.f32 %v3448, %v3468
      %vm3470 = vcmp.eq.f32.partialorder %v3448, inf
      %v3471 = vsel %vm3470, %v3448, %v3469
      %vm3472 = vcmp.eq.f32.partialorder %v3448, 0.0
      %v3473 = vand.u32 %v3448, 2147483648
      %v3474 = vsel %vm3472, %v3473, %v3471
      %v3475 = vrsqrt.pop %v3449
      %v3476 = vmul.f32 %v3449, %v3475
      %vm3477 = vcmp.eq.f32.partialorder %v3449, inf
      %v3478 = vsel %vm3477, %v3449, %v3476
      %vm3479 = vcmp.eq.f32.partialorder %v3449, 0.0
      %v3480 = vand.u32 %v3449, 2147483648
      %v3481 = vsel %vm3479, %v3480, %v3478
      %v3482 = vrsqrt.pop %v3450
      %v3483 = vmul.f32 %v3450, %v3482
      %vm3484 = vcmp.eq.f32.partialorder %v3450, inf
      %v3485 = vsel %vm3484, %v3450, %v3483
      %vm3486 = vcmp.eq.f32.partialorder %v3450, 0.0
      %v3487 = vand.u32 %v3450, 2147483648
      %v3488 = vsel %vm3486, %v3487, %v3485
      %v3489 = vadd.f32 %v3467, 1e-06
      %v3490 = vadd.f32 %v3474, 1e-06
      %v3491 = vadd.f32 %v3481, 1e-06
      %v3492 = vadd.f32 %v3488, 1e-06
      %v3493 = vrcp.pop %v3489
      %v3494 = vmul.f32 %v3457, %v3493
      %v3495 = vrcp.pop %v3490
      %v3496 = vmul.f32 %v3458, %v3495
      %v3497 = vrcp.pop %v3491
      %v3498 = vmul.f32 %v3459, %v3497
      %v3499 = vrcp.pop %v3492
      %v3500 = vmul.f32 %v3460, %v3499
      %v3502 = vlaneseq
      %v3503 = vshrl.u32 %v3502, 7
      %v3504 = vsub.s32 0, %v3503
      %v3505 = vrot.slane %v3407, %v3504
      %v3507 = vadd.f32 %v3494, %v3505
      %v3508 = vadd.f32 %v3496, %v3505
      %v3509 = vadd.f32 %v3498, %v3505
      %v3510 = vadd.f32 %v3500, %v3505
      %v3511 = vld [vmem:[%s606] sm:$0xff]
      %v3512 = vld [vmem:[%s606 + $0x8] sm:$0xff]
      %v3513 = vld [vmem:[%s606 + $0x10] sm:$0xff]
      %v3514 = vld [vmem:[%s606 + $0x18] sm:$0xff]
      %v3515 = vld [vmem:[%s606 + $0x20] sm:$0xff]
      %v3516 = vld [vmem:[%s606 + $0x28] sm:$0xff]
      %v3517 = vld [vmem:[%s606 + $0x30] sm:$0xff]
      %v3518 = vld [vmem:[%s606 + $0x38] sm:$0xff]
      %v3519 = vld [vmem:[%s606 + $0x40] sm:$0xff]
      %v3520 = vld [vmem:[%s606 + $0x48] sm:$0xff]
      %v3521 = vld [vmem:[%s606 + $0x50] sm:$0xff]
      %v3522 = vld [vmem:[%s606 + $0x58] sm:$0xff]
      %v3523 = vld [vmem:[%s606 + $0x60] sm:$0xf]
      %v3524 = vld [vmem:[%s609] sm:$0x1]
      %v3526 = vlaneseq
      %v3527 = vshrl.u32 %v3526, 7
      %v3528 = vsub.s32 0, %v3527
      %v3529 = vrot.slane %v3524, %v3528
      %v3532 = vsel %vm3301, %v3507, 0
      %v3535 = vsel %vm3301, %v3508, 0
      %v3538 = vsel %vm3301, %v3509, 0
      %v3541 = vsel %vm3301, %v3510, 0
      %v3544 = vsel %vm2282, %v3523, 0
      %3546 = vmatprep.subr.mxu0 0.0
      %3547 = vmatpush1.msra.mxu0 %v3511
      %3548 = vmatprep.subr.mxu0 0.0
      %3549 = vmatpush1.msra.mxu0 %v3512
      %3550 = vmatprep.subr.mxu0 0.0
      %3551 = vmatpush1.msra.mxu0 %v3513
      %3552 = vmatprep.subr.mxu0 0.0
      %3553 = vmatpush1.msra.mxu0 %v3514
      %3554 = vmatprep.subr.mxu0 0.0
      %3555 = vmatpush1.msra.mxu0 %v3515
      %3556 = vmatprep.subr.mxu0 0.0
      %3557 = vmatpush1.msra.mxu0 %v3516
      %3558 = vmatprep.subr.mxu0 0.0
      %3559 = vmatpush1.msra.mxu0 %v3517
      %3560 = vmatprep.subr.mxu0 0.0
      %3561 = vmatpush1.msra.mxu0 %v3518
      %3562 = vmatprep.subr.mxu0 0.0
      %3563 = vmatpush1.msra.mxu0 %v3519
      %3564 = vmatprep.subr.mxu0 0.0
      %3565 = vmatpush1.msra.mxu0 %v3520
      %3566 = vmatprep.subr.mxu0 0.0
      %3567 = vmatpush1.msra.mxu0 %v3521
      %3568 = vmatprep.subr.mxu0 0.0
      %3569 = vmatpush1.msra.mxu0 %v3522
      %3570 = vmatprep.subr.mxu0 0.0
      %3571 = vmatpush1.msra.mxu0 %v3544
      %3572 = vmatprep.subr.mxu0 0.0
      %3573 = vmatpush1.msra.mxu0 0.0
      %3574 = vmatprep.subr.mxu0 0.0
      %3575 = vmatpush1.msra.mxu0 0.0
      %3576 = vmatprep.subr.mxu0 0.0
      %3577 = vmatpush1.msra.mxu0 0.0
      %3578 = vmatprep.subr.mxu0 0.0
      %3579 = vmatpush1.msra.mxu0 0.0
      %3580 = vmatprep.subr.mxu0 0.0
      %3581 = vmatpush1.msra.mxu0 0.0
      %3582 = vmatprep.subr.mxu0 0.0
      %3583 = vmatpush1.msra.mxu0 0.0
      %3584 = vmatprep.subr.mxu0 0.0
      %3585 = vmatpush1.msra.mxu0 0.0
      %3586 = vmatprep.subr.mxu0 0.0
      %3587 = vmatpush1.msra.mxu0 0.0
      %3588 = vmatprep.subr.mxu0 0.0
      %3589 = vmatpush1.msra.mxu0 0.0
      %3590 = vmatprep.subr.mxu0 0.0
      %3591 = vmatpush1.msra.mxu0 0.0
      %3592 = vmatprep.subr.mxu0 0.0
      %3593 = vmatpush1.msra.mxu0 0.0
      %3594 = vmatprep.subr.mxu0 0.0
      %3595 = vmatpush1.msra.mxu0 0.0
      %3596 = vmatprep.subr.mxu0 0.0
      %3597 = vmatpush1.msra.mxu0 0.0
      %3598 = vmatprep.subr.mxu0 0.0
      %3599 = vmatpush1.msra.mxu0 0.0
      %3600 = vmatprep.subr.mxu0 0.0
      %3601 = vmatpush1.msra.mxu0 0.0
      %3602 = vmatprep.subr.mxu0 0.0
      %3603 = vmatpush1.msra.mxu0 0.0
      %3604 = vmatprep.subr.mxu0 0.0
      %3605 = vmatpush1.msra.mxu0 0.0
      %3606 = vmatprep.subr.mxu0 0.0
      %3607 = vmatpush1.msra.mxu0 0.0
      %3608 = vmatprep.subr.mxu0 0.0
      %3609 = vmatpush1.msra.mxu0 0.0
      %3610 = vmatprep.mubr.f32.mxu0 0.0
      %3611 = vmatmul.mubr.f32.gmra.mrb[0].mxu0 %v3532
      %v3612 = vpop.f32.mrb[0].mxu0
      %v3613 = vadd.f32 %v3529, %v3612
      %v3614 = vpop.f32.mrb[0].mxu0
      %3615 = vmatprep.mubr.f32.mxu0 0.0
      %3616 = vmatmul.mubr.f32.gmra.mrb[0].mxu0 %v3535
      %v3617 = vpop.f32.mrb[0].mxu0
      %v3618 = vadd.f32 %v3529, %v3617
      %v3619 = vpop.f32.mrb[0].mxu0
      %3620 = vmatprep.mubr.f32.mxu0 0.0
      %3621 = vmatmul.mubr.f32.gmra.mrb[0].mxu0 %v3538
      %v3622 = vpop.f32.mrb[0].mxu0
      %v3623 = vadd.f32 %v3529, %v3622
      %v3624 = vpop.f32.mrb[0].mxu0
      %3625 = vmatprep.mubr.f32.mxu0 0.0
      %3626 = vmatmul.mubr.f32.gmra.mrb[0].mxu0 %v3541
      %v3627 = vpop.f32.mrb[0].mxu0
      %v3628 = vadd.f32 %v3529, %v3627
      %v3629 = vpop.f32.mrb[0].mxu0
      %3630 = vdwg.mxu0
      %v3631 = vmax.f32 %v3613, 0.0
      %v3632 = vmax.f32 %v3618, 0.0
      %v3633 = vmax.f32 %v3623, 0.0
      %v3634 = vmax.f32 %v3628, 0.0
      %v3635 = vld [vmem:[%s614] sm:$0xff]
      %v3636 = vld [vmem:[%s614 + $0x8] sm:$0xff]
      %v3637 = vld [vmem:[%s614 + $0x10] sm:$0xff]
      %v3638 = vld [vmem:[%s614 + $0x18] sm:$0xff]
      %v3639 = vld [vmem:[%s614 + $0x20] sm:$0xff]
      %v3640 = vld [vmem:[%s614 + $0x28] sm:$0xff]
      %v3641 = vld [vmem:[%s614 + $0x30] sm:$0xff]
      %v3642 = vld [vmem:[%s614 + $0x38] sm:$0xff]
      %v3643 = vld [vmem:[%s614 + $0x40] sm:$0xff]
      %v3644 = vld [vmem:[%s614 + $0x48] sm:$0xff]
      %v3645 = vld [vmem:[%s614 + $0x50] sm:$0xff]
      %v3646 = vld [vmem:[%s614 + $0x58] sm:$0xff]
      %v3647 = vld [vmem:[%s614 + $0x60] sm:$0xff]
      %v3648 = vld [vmem:[%s614 + $0x68] sm:$0xff]
      %v3649 = vld [vmem:[%s614 + $0x70] sm:$0xff]
      %v3650 = vld [vmem:[%s617] sm:$0x1]
      %v3652 = vlaneseq
      %v3653 = vshrl.u32 %v3652, 7
      %v3654 = vsub.s32 0, %v3653
      %v3655 = vrot.slane %v3650, %v3654
      %vm3657 = vcmask 982016
      %v3659 = vsel %vm3657, %v3631, 0
      %v3662 = vsel %vm3657, %v3632, 0
      %v3665 = vsel %vm3657, %v3633, 0
      %v3668 = vsel %vm3657, %v3634, 0
      %3670 = vmatprep.subr.mxu0 0.0
      %3671 = vmatpush1.msra.mxu0 %v3635
      %3672 = vmatprep.subr.mxu0 0.0
      %3673 = vmatpush1.msra.mxu0 %v3636
      %3674 = vmatprep.subr.mxu0 0.0
      %3675 = vmatpush1.msra.mxu0 %v3637
      %3676 = vmatprep.subr.mxu0 0.0
      %3677 = vmatpush1.msra.mxu0 %v3638
      %3678 = vmatprep.subr.mxu0 0.0
      %3679 = vmatpush1.msra.mxu0 %v3639
      %3680 = vmatprep.subr.mxu0 0.0
      %3681 = vmatpush1.msra.mxu0 %v3640
      %3682 = vmatprep.subr.mxu0 0.0
      %3683 = vmatpush1.msra.mxu0 %v3641
      %3684 = vmatprep.subr.mxu0 0.0
      %3685 = vmatpush1.msra.mxu0 %v3642
      %3686 = vmatprep.subr.mxu0 0.0
      %3687 = vmatpush1.msra.mxu0 %v3643
      %3688 = vmatprep.subr.mxu0 0.0
      %3689 = vmatpush1.msra.mxu0 %v3644
      %3690 = vmatprep.subr.mxu0 0.0
      %3691 = vmatpush1.msra.mxu0 %v3645
      %3692 = vmatprep.subr.mxu0 0.0
      %3693 = vmatpush1.msra.mxu0 %v3646
      %3694 = vmatprep.subr.mxu0 0.0
      %3695 = vmatpush1.msra.mxu0 %v3647
      %3696 = vmatprep.subr.mxu0 0.0
      %3697 = vmatpush1.msra.mxu0 %v3648
      %3698 = vmatprep.subr.mxu0 0.0
      %3699 = vmatpush1.msra.mxu0 %v3649
      %3700 = vmatprep.subr.mxu0 0.0
      %3701 = vmatpush1.msra.mxu0 0.0
      %3702 = vmatprep.subr.mxu0 0.0
      %3703 = vmatpush1.msra.mxu0 0.0
      %3704 = vmatprep.subr.mxu0 0.0
      %3705 = vmatpush1.msra.mxu0 0.0
      %3706 = vmatprep.subr.mxu0 0.0
      %3707 = vmatpush1.msra.mxu0 0.0
      %3708 = vmatprep.subr.mxu0 0.0
      %3709 = vmatpush1.msra.mxu0 0.0
      %3710 = vmatprep.subr.mxu0 0.0
      %3711 = vmatpush1.msra.mxu0 0.0
      %3712 = vmatprep.subr.mxu0 0.0
      %3713 = vmatpush1.msra.mxu0 0.0
      %3714 = vmatprep.subr.mxu0 0.0
      %3715 = vmatpush1.msra.mxu0 0.0
      %3716 = vmatprep.subr.mxu0 0.0
      %3717 = vmatpush1.msra.mxu0 0.0
      %3718 = vmatprep.subr.mxu0 0.0
      %3719 = vmatpush1.msra.mxu0 0.0
      %3720 = vmatprep.subr.mxu0 0.0
      %3721 = vmatpush1.msra.mxu0 0.0
      %3722 = vmatprep.subr.mxu0 0.0
      %3723 = vmatpush1.msra.mxu0 0.0
      %3724 = vmatprep.subr.mxu0 0.0
      %3725 = vmatpush1.msra.mxu0 0.0
      %3726 = vmatprep.subr.mxu0 0.0
      %3727 = vmatpush1.msra.mxu0 0.0
      %3728 = vmatprep.subr.mxu0 0.0
      %3729 = vmatpush1.msra.mxu0 0.0
      %3730 = vmatprep.subr.mxu0 0.0
      %3731 = vmatpush1.msra.mxu0 0.0
      %3732 = vmatprep.subr.mxu0 0.0
      %3733 = vmatpush1.msra.mxu0 0.0
      %3734 = vmatprep.mubr.f32.mxu0 0.0
      %3735 = vmatmul.mubr.f32.gmra.mrb[0].mxu0 %v3659
      %v3736 = vpop.f32.mrb[0].mxu0
      %v3737 = vadd.f32 %v3655, %v3736
      %v3738 = vpop.f32.mrb[0].mxu0
      %3739 = vmatprep.mubr.f32.mxu0 0.0
      %3740 = vmatmul.mubr.f32.gmra.mrb[0].mxu0 %v3662
      %v3741 = vpop.f32.mrb[0].mxu0
      %v3742 = vadd.f32 %v3655, %v3741
      %v3743 = vpop.f32.mrb[0].mxu0
      %3744 = vmatprep.mubr.f32.mxu0 0.0
      %3745 = vmatmul.mubr.f32.gmra.mrb[0].mxu0 %v3665
      %v3746 = vpop.f32.mrb[0].mxu0
      %v3747 = vadd.f32 %v3655, %v3746
      %v3748 = vpop.f32.mrb[0].mxu0
      %3749 = vmatprep.mubr.f32.mxu0 0.0
      %3750 = vmatmul.mubr.f32.gmra.mrb[0].mxu0 %v3668
      %v3751 = vpop.f32.mrb[0].mxu0
      %v3752 = vadd.f32 %v3655, %v3751
      %v3753 = vpop.f32.mrb[0].mxu0
      %3754 = vdwg.mxu0
      %v3755 = vadd.f32 %v3402, %v3737
      %v3756 = vadd.f32 %v3403, %v3742
      %v3757 = vadd.f32 %v3404, %v3747
      %v3758 = vadd.f32 %v3405, %v3752
      %3759 = vst.msk [vmem:[#allocation2] sm:$0xff] %vm3301, %v3755
      %3760 = vst.msk [vmem:[#allocation2 + $0x8] sm:$0xff] %vm3301, %v3756
      %3761 = vst.msk [vmem:[#allocation2 + $0x10] sm:$0xff] %vm3301, %v3757
      %3762 = vst.msk [vmem:[#allocation2 + $0x18] sm:$0x3f] %vm3417, %v3758
      %p3763 = scmp.eq.s32.totalorder %s29, 1
      // Predicated region
      $region77: #{tce_forward.1} parent=71 // pred_check
        %p3764 = pneg %p3763
      $region78: #{tce_forward.1} parent=71 // pred_check_branch
        %3766 = sbr.rel (%p3764) target = $region80
      $region79: #{tce_forward.1} parent=71 // pred_region
        %v3767 = vld [vmem:[%s11] sm:$0x1]
        %v3768 = vld [vmem:[%s12] sm:$0x1]
        %v3769 = vsel %vm3301, %v3755, 0.0
        %3770 = vadd.xlane.f32.xlu0 %v3769
        %v3771 = vpop.xlane.xlu0 %3770
        %v3772 = vsel %vm3301, %v3756, 0.0
        %3773 = vadd.xlane.f32.xlu0 %v3772
        %v3774 = vpop.xlane.xlu0 %3773
        %v3775 = vsel %vm3301, %v3757, 0.0
        %3776 = vadd.xlane.f32.xlu0 %v3775
        %v3777 = vpop.xlane.xlu0 %3776
        %v3778 = vsel %vm3417, %v3758, 0.0
        %3779 = vadd.xlane.f32.xlu0 %v3778
        %v3780 = vpop.xlane.xlu0 %3779
        %v3781 = vmul.f32 %v3771, %v3421
        %v3782 = vmul.f32 %v3774, %v3421
        %v3783 = vmul.f32 %v3777, %v3421
        %v3784 = vmul.f32 %v3780, %v3421
        %v3785 = vsub.f32 %v3755, %v3781
        %v3786 = vsub.f32 %v3756, %v3782
        %v3787 = vsub.f32 %v3757, %v3783
        %v3788 = vsub.f32 %v3758, %v3784
        %v3789 = vmul.f32 %v3785, %v3785
        %v3790 = vmul.f32 %v3786, %v3786
        %v3791 = vmul.f32 %v3787, %v3787
        %v3792 = vmul.f32 %v3788, %v3788
        %v3793 = vsel %vm3301, %v3789, 0.0
        %3794 = vadd.xlane.f32.xlu0 %v3793
        %v3795 = vpop.xlane.xlu0 %3794
        %v3796 = vsel %vm3301, %v3790, 0.0
        %3797 = vadd.xlane.f32.xlu0 %v3796
        %v3798 = vpop.xlane.xlu0 %3797
        %v3799 = vsel %vm3301, %v3791, 0.0
        %3800 = vadd.xlane.f32.xlu0 %v3799
        %v3801 = vpop.xlane.xlu0 %3800
        %v3802 = vsel %vm3417, %v3792, 0.0
        %3803 = vadd.xlane.f32.xlu0 %v3802
        %v3804 = vpop.xlane.xlu0 %3803
        %v3805 = vmul.f32 %v3795, %v3446
        %v3806 = vmul.f32 %v3798, %v3446
        %v3807 = vmul.f32 %v3801, %v3446
        %v3808 = vmul.f32 %v3804, %v3446
        %v3810 = vlaneseq
        %v3811 = vshrl.u32 %v3810, 7
        %v3812 = vsub.s32 0, %v3811
        %v3813 = vrot.slane %v3767, %v3812
        %v3815 = vmul.f32 %v3813, %v3785
        %v3816 = vmul.f32 %v3813, %v3786
        %v3817 = vmul.f32 %v3813, %v3787
        %v3818 = vmul.f32 %v3813, %v3788
        %v3819 = vrsqrt.pop %v3805
        %v3820 = vmul.f32 %v3805, %v3819
        %vm3821 = vcmp.eq.f32.partialorder %v3805, inf
        %v3822 = vsel %vm3821, %v3805, %v3820
        %vm3823 = vcmp.eq.f32.partialorder %v3805, 0.0
        %v3824 = vand.u32 %v3805, 2147483648
        %v3825 = vsel %vm3823, %v3824, %v3822
        %v3826 = vrsqrt.pop %v3806
        %v3827 = vmul.f32 %v3806, %v3826
        %vm3828 = vcmp.eq.f32.partialorder %v3806, inf
        %v3829 = vsel %vm3828, %v3806, %v3827
        %vm3830 = vcmp.eq.f32.partialorder %v3806, 0.0
        %v3831 = vand.u32 %v3806, 2147483648
        %v3832 = vsel %vm3830, %v3831, %v3829
        %v3833 = vrsqrt.pop %v3807
        %v3834 = vmul.f32 %v3807, %v3833
        %vm3835 = vcmp.eq.f32.partialorder %v3807, inf
        %v3836 = vsel %vm3835, %v3807, %v3834
        %vm3837 = vcmp.eq.f32.partialorder %v3807, 0.0
        %v3838 = vand.u32 %v3807, 2147483648
        %v3839 = vsel %vm3837, %v3838, %v3836
        %v3840 = vrsqrt.pop %v3808
        %v3841 = vmul.f32 %v3808, %v3840
        %vm3842 = vcmp.eq.f32.partialorder %v3808, inf
        %v3843 = vsel %vm3842, %v3808, %v3841
        %vm3844 = vcmp.eq.f32.partialorder %v3808, 0.0
        %v3845 = vand.u32 %v3808, 2147483648
        %v3846 = vsel %vm3844, %v3845, %v3843
        %v3847 = vadd.f32 %v3825, 1e-06
        %v3848 = vadd.f32 %v3832, 1e-06
        %v3849 = vadd.f32 %v3839, 1e-06
        %v3850 = vadd.f32 %v3846, 1e-06
        %v3851 = vrcp.pop %v3847
        %v3852 = vmul.f32 %v3815, %v3851
        %v3853 = vrcp.pop %v3848
        %v3854 = vmul.f32 %v3816, %v3853
        %v3855 = vrcp.pop %v3849
        %v3856 = vmul.f32 %v3817, %v3855
        %v3857 = vrcp.pop %v3850
        %v3858 = vmul.f32 %v3818, %v3857
        %v3860 = vlaneseq
        %v3861 = vshrl.u32 %v3860, 7
        %v3862 = vsub.s32 0, %v3861
        %v3863 = vrot.slane %v3768, %v3862
        %v3865 = vadd.f32 %v3852, %v3863
        %v3866 = vadd.f32 %v3854, %v3863
        %v3867 = vadd.f32 %v3856, %v3863
        %v3868 = vadd.f32 %v3858, %v3863
        %3869 = vst.msk [vmem:[%s622] sm:$0xff] %vm3301, %v3865
        %3870 = vst.msk [vmem:[%s622 + $0x8] sm:$0xff] %vm3301, %v3866
        %3871 = vst.msk [vmem:[%s622 + $0x10] sm:$0xff] %vm3301, %v3867
        %3872 = vst.msk [vmem:[%s622 + $0x18] sm:$0x3f] %vm3417, %v3868
      $region80: #{tce_forward.1} parent=71 // pred_fallthru
        _
      %p3873 = scmp.lt.s32.totalorder %s28, 1
      %s3874 = scalar_select %p3873, %s28, 1
      %s3875 = smul.addr %s3874, 4
      %s3876 = smul.addr %s3875, 8
      %s3877 = scalar_lea.vmem %s13, %s3876
      // Predicated region
      $region81: #{tce_forward.1} parent=71 // pred_check
        %p3878 = pneg %p382
      $region82: #{tce_forward.1} parent=71 // pred_check_branch
        %3880 = sbr.rel (%p3878) target = $region84
      $region83: #{tce_forward.1} parent=71 // pred_region
        _
      $region84: #{tce_forward.1} parent=71 // pred_fallthru
        _
    $region72: #{tce_forward.1} parent=5 // pred_fallthru
      _
    %p3881 = scmp.le.s32.totalorder 2, %s19
    // Predicated region
    $region85: #{tce_forward.1} parent=5 // pred_check
      %p3882 = pneg %p3881
    $region86: #{tce_forward.1} parent=5 // pred_check_branch
      %3884 = sbr.rel (%p3882) target = $region88
    $region87: #{tce_forward.1} parent=5 // pred_region
      %s3885 = ssub.s32 %s19, 2
      // Predicated region
      $region89: #{tce_forward.1} parent=87 // pred_check
        %p3886 = pneg %p388
      $region90: #{tce_forward.1} parent=87 // pred_check_branch
        %3888 = sbr.rel (%p3886) target = $region92
      $region91: #{tce_forward.1} parent=87 // pred_region
        %p3889 = scmp.lt.s32.totalorder %s30, 1
        %s3890 = scalar_select %p3889, %s30, 1
        %s3891 = smul.addr %s3890, 4
        %s3892 = smul.addr %s3891, 8
        %s3893 = scalar_lea.vmem %s13, %s3892
      $region92: #{tce_forward.1} parent=87 // pred_fallthru
        _
    $region88: #{tce_forward.1} parent=5 // pred_fallthru
      _
  $region6: #{tce_forward.1} parent=0 // loop_footer
    %s23 = sadd.s32 1, %s19
  $region7: #{tce_forward.1} parent=0 // loop_footer_branch
    %18 = sbr.rel target = $region3
  $region8: #{tce_forward.1} parent=0 // loop_exit
    _

</llo_original>
